<compile_context>
chip_gen: v7x
topology: tpu7x:2x2x1
jax: 0.10.0
libtpu: 0.0.40
codegen_flags: <defaults>
</compile_context>

<pallas_src>
import functools

import jax
import jax.numpy as jnp
from jax.experimental import pallas as pl
from jax.experimental.pallas import tpu as pltpu

LANES = 128      # lane-dense channel padding
EPS = 1e-5


# ---------------------------------------------------------------------------
# in-kernel helpers
# ---------------------------------------------------------------------------
def _gn_relu(xf, ones_row, g_ref, b_ref, gmat_ref, inv_count, eps):
    """GroupNorm + ReLU on (HW, Cp) f32.  Channel->group reductions run on the MXU
    (ones-row matmul + group-indicator matmul).  Variance is the centred two-pass
    form, so it is >= 0 by construction (no cancellation, no clamp)."""
    gmat = gmat_ref[...]
    s = jnp.dot(ones_row, xf, preferred_element_type=jnp.float32)              # (1,Cp) sums
    mean = jnp.dot(s, gmat, preferred_element_type=jnp.float32) * inv_count    # per-group mean
    d = xf - mean
    s2 = jnp.dot(ones_row, d * d, preferred_element_type=jnp.float32)          # centred sumsq
    var = jnp.dot(s2, gmat, preferred_element_type=jnp.float32) * inv_count
    inv = jax.lax.rsqrt(var + eps)
    return jnp.maximum(d * (inv * g_ref[...]) + b_ref[...], 0.0)


def _conv3x3_kpacked(h, stage_ref, pack_ref, w_ref, mask_l, mask_r, H, W):
    """3x3 / stride-1 / pad-1 conv of h:(HW, Cp) f32 against K-packed weights
    w_ref:(3, 3*Cp, Cp) bf16 (the three kw taps stacked along K).

    The kw taps are lane-concatenated, column-shifted bf16 copies of h written into
    pack_ref at rows [W, W+HW) (aligned stores).  The +-1 flat-row shift needed for
    kw=0/2 is obtained by staging h in f32 and re-reading it at sublane offsets
    7/9 (aligned store, small-offset loads).  The conv is then 3 MXU matmuls with
    K = 3*Cp = 384, accumulated in an uninterrupted chain."""
    HW = H * W
    Cp = h.shape[1]
    hb = h.astype(jnp.bfloat16)

    # centre (kw=1) tap -> lane block 1
    pack_ref[pl.ds(W, HW), pl.ds(Cp, Cp)] = hb
    # stage h once so the +-1 column shifts are f32 sublane-offset LOADS
    stage_ref[pl.ds(8, HW), :] = h
    left = stage_ref[pl.ds(7, HW), :]     # h[q-1]; stale row at q=0 is masked below
    right = stage_ref[pl.ds(9, HW), :]    # h[q+1]; stale row at q=HW-1 is masked below
    # kw=0 tap (input column c-1): invalid where c == 0
    pack_ref[pl.ds(W, HW), pl.ds(0, Cp)] = (
        jnp.where(mask_l, left, 0.0).astype(jnp.bfloat16))
    # kw=2 tap (input column c+1): invalid where c == W-1
    pack_ref[pl.ds(W, HW), pl.ds(2 * Cp, Cp)] = (
        jnp.where(mask_r, right, 0.0).astype(jnp.bfloat16))

    # 3 matmuls, K = 384, bf16 MXU with f32 accumulation; acc starts from dot #1.
    acc = jnp.dot(pack_ref[pl.ds(0, HW), :], w_ref[0],
                  preferred_element_type=jnp.float32)
    acc = acc + jnp.dot(pack_ref[pl.ds(W, HW), :], w_ref[1],
                        preferred_element_type=jnp.float32)
    acc = acc + jnp.dot(pack_ref[pl.ds(2 * W, HW), :], w_ref[2],
                        preferred_element_type=jnp.float32)
    return acc


def _resblock_kernel(*refs, H, W, cg1, cg2, eps, has_ds):
    if has_ds:
        (x_ref, g1_ref, b1_ref, gm1_ref, w1_ref,
         g2_ref, b2_ref, gm2_ref, w2_ref, dsw_ref,
         o_ref, stage_ref, pack_ref) = refs
    else:
        (x_ref, g1_ref, b1_ref, gm1_ref, w1_ref,
         g2_ref, b2_ref, gm2_ref, w2_ref,
         o_ref, stage_ref, pack_ref) = refs
        dsw_ref = None

    B = x_ref.shape[0]
    HW = H * W

    # Zero ONLY the top/bottom border rows of the packed-tap scratch (the image
    # rows that fall outside the input).  The data region [W, W+HW) is fully
    # overwritten by every conv, so this is O(W) stores instead of O(HW*Cp).
    pack_ref[pl.ds(0, W), :] = jnp.zeros((W, pack_ref.shape[1]), jnp.bfloat16)
    pack_ref[pl.ds(HW + W, W), :] = jnp.zeros((W, pack_ref.shape[1]), jnp.bfloat16)

    # column-wrap masks, built once per grid step ((HW, 1) bool)
    col = jax.lax.broadcasted_iota(jnp.int32, (HW, 1), 0)
    col = (col & (W - 1)) if (W & (W - 1)) == 0 else (col % W)
    mask_l = col != 0            # left neighbour (c-1) exists
    mask_r = col != (W - 1)      # right neighbour (c+1) exists

    ones_row = jnp.ones((1, HW), jnp.float32)
    inv1 = 1.0 / (HW * cg1)
    inv2 = 1.0 / (HW * cg2)

    for b in range(B):           # B is small & static (<= 4): unrolled
        xf = x_ref[b]                                            # (HW, Cp) f32

        # out = relu(norm1(x))
        h1 = _gn_relu(xf, ones_row, g1_ref, b1_ref, gm1_ref, inv1, eps)

        # shortcut: identity, or 1x1 downsample of relu(norm1(x)) in f32 (matches
        # PyTorch's f32 shortcut; avoids bf16 error on the residual path)
        if has_ds:
            shortcut = jnp.dot(h1, dsw_ref[...], preferred_element_type=jnp.float32)
        else:
            shortcut = xf

        # conv1 (3x3, pad 1); dropout is identity at inference
        c1 = _conv3x3_kpacked(h1, stage_ref, pack_ref, w1_ref, mask_l, mask_r, H, W)

        # out = relu(norm2(out))
        h2 = _gn_relu(c1, ones_row, g2_ref, b2_ref, gm2_ref, inv2, eps)

        # conv2 + fused residual add, single lane-dense store
        c2 = _conv3x3_kpacked(h2, stage_ref, pack_ref, w2_ref, mask_l, mask_r, H, W)
        o_ref[b] = c2 + shortcut


# ---------------------------------------------------------------------------
# one-time parameter packing (outside jit)
# ---------------------------------------------------------------------------
def pack_resblock_params(raw, cp=LANES):
    """Repack ResBlock params into TPU-friendly, pre-padded arrays: per-kh
    (3, 3*Cp, Cp) bf16 conv weights with the kw taps stacked along K, padded f32
    GN affine rows, f32 group-indicator matrices, and (if present) a padded f32
    1x1 downsample matrix."""
    conv1_w, conv2_w = raw["conv1_w"], raw["conv2_w"]
    kh, kw, cin, cmid = conv1_w.shape
    _, _, _, cout = conv2_w.shape
    assert (kh, kw) == (3, 3) and max(cin, cmid, cout) <= cp

    def pack_conv(w):
        ci, co = w.shape[2], w.shape[3]
        full = jnp.zeros((3, 3, cp, cp), jnp.float32).at[:, :, :ci, :co].set(w)
        # (kh, kw, ci, co) -> (kh, kw*cp + ci, co): kw taps stacked along K
        return full.reshape(3, 3 * cp, cp).astype(jnp.bfloat16)

    def pad_row(v):
        return jnp.zeros((1, cp), jnp.float32).at[0, :v.shape[0]].set(v)

    def group_mat(c):
        groups = min(32, c)
        cg = c // groups
        gid = jnp.arange(cp) // cg
        real = jnp.arange(cp) < c
        same = (gid[:, None] == gid[None, :]) & real[:, None] & real[None, :]
        return same.astype(jnp.float32)

    packed = {
        "w1": pack_conv(conv1_w), "w2": pack_conv(conv2_w),
        "gn1_g": pad_row(raw["gn1_g"]), "gn1_b": pad_row(raw["gn1_b"]),
        "gn2_g": pad_row(raw["gn2_g"]), "gn2_b": pad_row(raw["gn2_b"]),
        "gm1": group_mat(cin), "gm2": group_mat(cmid),
    }
    if raw.get("ds_w") is not None:
        ds = raw["ds_w"]                                  # (1, 1, cin, cout) HWIO
        packed["dsw"] = (jnp.zeros((cp, cp), jnp.float32)
                         .at[:ds.shape[2], :ds.shape[3]].set(ds[0, 0]))
    return packed


# ---------------------------------------------------------------------------
# pallas_call wrappers
# ---------------------------------------------------------------------------
def _pick_batch_block(n):
    """Samples per grid step: amortise per-step overhead, but keep >= 2 grid
    steps so both v7x TensorCores get work under dimension_semantics=('parallel',)."""
    for b in (4, 2):
        if n % b == 0 and n // b >= 2:
            return b
    return 1


def resblock_lane_dense(packed, x_lane, *, inplanes, planes, H, W, eps=EPS):
    """ResBlock forward on activations already in lane-dense (N, H*W, 128) f32
    layout (channels zero-padded to 128).  Chain blocks in this layout to avoid
    per-block NCHW<->lane-dense HBM round trips."""
    n, hw, cp = x_lane.shape
    assert hw == H * W and cp == LANES
    has_ds = "dsw" in packed
    cg1 = inplanes // min(32, inplanes)
    cg2 = planes // min(32, planes)
    B = _pick_batch_block(n)

    in_specs = [
        pl.BlockSpec((B, hw, cp), lambda i: (i, 0, 0)),
        pl.BlockSpec((1, cp), lambda i: (0, 0)),
        pl.BlockSpec((1, cp), lambda i: (0, 0)),
        pl.BlockSpec((cp, cp), lambda i: (0, 0)),
        pl.BlockSpec((3, 3 * cp, cp), lambda i: (0, 0, 0)),
        pl.BlockSpec((1, cp), lambda i: (0, 0)),
        pl.BlockSpec((1, cp), lambda i: (0, 0)),
        pl.BlockSpec((cp, cp), lambda i: (0, 0)),
        pl.BlockSpec((3, 3 * cp, cp), lambda i: (0, 0, 0)),
    ]
    args = [x_lane,
            packed["gn1_g"], packed["gn1_b"], packed["gm1"], packed["w1"],
            packed["gn2_g"], packed["gn2_b"], packed["gm2"], packed["w2"]]
    if has_ds:
        in_specs.append(pl.BlockSpec((cp, cp), lambda i: (0, 0)))
        args.append(packed["dsw"])

    return pl.pallas_call(
        functools.partial(_resblock_kernel, H=H, W=W, cg1=cg1, cg2=cg2,
                          eps=eps, has_ds=has_ds),
        out_shape=jax.ShapeDtypeStruct((n, hw, cp), jnp.float32),
        grid=(n // B,),
        in_specs=in_specs,
        out_specs=pl.BlockSpec((B, hw, cp), lambda i: (i, 0, 0)),
        scratch_shapes=[
            pltpu.VMEM((hw + 16, cp), jnp.float32),           # f32 staging (+-1 column shift)
            pltpu.VMEM((hw + 2 * W, 3 * cp), jnp.bfloat16),   # K-packed bf16 tap scratch
        ],
        compiler_params=pltpu.CompilerParams(
            dimension_semantics=("parallel",),                # batch across v7x's 2 TCs
            vmem_limit_bytes=32 * 1024 * 1024,
        ),
    )(*args)


@functools.partial(jax.jit, static_argnames=("inplanes", "planes", "eps"))
def resblock_apply(packed, x_nchw, *, inplanes, planes, eps=EPS):
    n, c, h, w = x_nchw.shape
    assert c == inplanes and inplanes <= LANES and planes <= LANES
    assert w % 8 == 0, "W must be a multiple of 8 (sublane-aligned tap slices)"
    if "dsw" not in packed:
        assert inplanes == planes, "identity shortcut needs inplanes == planes"
    cp = LANES
    hw = h * w

    # TODO(synk): when stacking ResBlocks, keep activations in the lane-dense
    # (N, HW, 128) layout between blocks (use resblock_lane_dense) so these
    # NCHW<->NHWC transposes + channel pads happen once per network, not per block.
    x = jnp.transpose(x_nchw, (0, 2, 3, 1))
    x = jnp.pad(x, ((0, 0), (0, 0), (0, 0), (0, cp - c)))
    x = x.reshape(n, hw, cp)

    out = resblock_lane_dense(packed, x, inplanes=inplanes, planes=planes,
                              H=h, W=w, eps=eps)

    out = out[:, :, :planes].reshape(n, h, w, planes)
    return jnp.transpose(out, (0, 3, 1, 2))                  # back to PyTorch NCHW


# ---------------------------------------------------------------------------
# pure-JAX f32 reference (mirrors the PyTorch ResBlock.forward, eval mode)
# ---------------------------------------------------------------------------
def _ref_groupnorm(x_nhwc, gamma, beta, eps=EPS):
    n, h, w, c = x_nhwc.shape
    groups = min(32, c)
    xg = x_nhwc.reshape(n, h, w, groups, c // groups)
    mean = xg.mean(axis=(1, 2, 4), keepdims=True)
    var = ((xg - mean) ** 2).mean(axis=(1, 2, 4), keepdims=True)
    y = ((xg - mean) * jax.lax.rsqrt(var + eps)).reshape(n, h, w, c)
    return y * gamma + beta


def ref_resblock(raw, x_nchw, eps=EPS):
    x = jnp.transpose(x_nchw, (0, 2, 3, 1))
    dn = ("NHWC", "HWIO", "NHWC")
    out = jnp.maximum(_ref_groupnorm(x, raw["gn1_g"], raw["gn1_b"], eps), 0.0)
    shortcut = x
    if raw.get("ds_w") is not None:
        shortcut = jax.lax.conv_general_dilated(out, raw["ds_w"], (1, 1), "VALID",
                                                dimension_numbers=dn)
    out = jax.lax.conv_general_dilated(out, raw["conv1_w"], (1, 1), ((1, 1), (1, 1)),
                                       dimension_numbers=dn)
    out = jnp.maximum(_ref_groupnorm(out, raw["gn2_g"], raw["gn2_b"], eps), 0.0)
    out = jax.lax.conv_general_dilated(out, raw["conv2_w"], (1, 1), ((1, 1), (1, 1)),
                                       dimension_numbers=dn)
    return jnp.transpose(out + shortcut, (0, 3, 1, 2))


if __name__ == "__main__":
    key = jax.random.PRNGKey(0)
    kx, k1, k2, k3, k4, k5, k6, k7, kx8 = jax.random.split(key, 9)
    N, C, H, W = 2, 64, 16, 16          # inplanes = planes = 64 -> norm() = GroupNorm(32, 64)
    x = jax.random.normal(kx, (N, C, H, W), jnp.float32)

    def he(k, cin, cout, ks):
        return jax.random.normal(k, (ks, ks, cin, cout), jnp.float32) * (2.0 / (ks * ks * cin)) ** 0.5

    raw = {
        "gn1_g": 1.0 + 0.1 * jax.random.normal(k1, (C,), jnp.float32),
        "gn1_b": 0.1 * jax.random.normal(k2, (C,), jnp.float32),
        "conv1_w": he(k3, C, C, 3),
        "gn2_g": 1.0 + 0.1 * jax.random.normal(k4, (C,), jnp.float32),
        "gn2_b": 0.1 * jax.random.normal(k5, (C,), jnp.float32),
        "conv2_w": he(k6, C, C, 3),
    }
    ds_w = he(k7, C, C, 1)

    # (a) identity shortcut (stride=1, downsample=None: module defaults)
    # (b) 1x1 downsample shortcut (f32 MXU matmul inside the kernel)
    for use_ds in (False, True):
        cfg = dict(raw)
        if use_ds:
            cfg["ds_w"] = ds_w
        packed = pack_resblock_params(cfg)                       # once, outside jit
        out = jax.block_until_ready(resblock_apply(packed, x, inplanes=C, planes=C))
        assert out.shape == (N, C, H, W), out.shape
        ref = ref_resblock(cfg, x)
        assert bool(jnp.allclose(out, ref, rtol=5e-2, atol=1.5e-1)), (
            float(jnp.max(jnp.abs(out - ref))))

    # (c) larger batch exercising the batch-blocked grid (B=4, grid=(2,))
    x8 = jax.random.normal(kx8, (8, C, H, W), jnp.float32)
    packed = pack_resblock_params(raw)
    out8 = jax.block_until_ready(resblock_apply(packed, x8, inplanes=C, planes=C))
    ref8 = ref_resblock(raw, x8)
    assert out8.shape == (8, C, H, W)
    assert bool(jnp.allclose(out8, ref8, rtol=5e-2, atol=1.5e-1)), (
        float(jnp.max(jnp.abs(out8 - ref8))))

    print("KERNEL_OK")
</pallas_src>

<mosaic_0001>
module attributes {stable_mosaic.version = 11 : i64} {
  func.func @_resblock_kernel(%arg0: i32, %arg1: memref<1x256x128xf32, #tpu.memory_space<vmem>>, %arg2: memref<1x128xf32, #tpu.memory_space<vmem>>, %arg3: memref<1x128xf32, #tpu.memory_space<vmem>>, %arg4: memref<128x128xf32, #tpu.memory_space<vmem>>, %arg5: memref<3x384x128xbf16, #tpu.memory_space<vmem>>, %arg6: memref<1x128xf32, #tpu.memory_space<vmem>>, %arg7: memref<1x128xf32, #tpu.memory_space<vmem>>, %arg8: memref<128x128xf32, #tpu.memory_space<vmem>>, %arg9: memref<3x384x128xbf16, #tpu.memory_space<vmem>>, %arg10: memref<1x256x128xf32, #tpu.memory_space<vmem>>, %arg11: memref<272x128xf32, #tpu.memory_space<vmem>>, %arg12: memref<288x384xbf16, #tpu.memory_space<vmem>>) attributes {dimension_semantics = [#tpu.dimension_semantics<parallel>], iteration_bounds = array<i64: 2>, scalar_prefetch = 0 : i64, scratch_operands = 2 : i64, tpu.core_type = #tpu.core_type<tc>, window_params = [{transform_indices = @transform_0, window_bounds = array<i64: 1, 256, 128>}, {pipeline_mode = #tpu.pipeline_mode<synchronous>, transform_indices = @transform_1, window_bounds = array<i64: 1, 128>}, {pipeline_mode = #tpu.pipeline_mode<synchronous>, transform_indices = @transform_2, window_bounds = array<i64: 1, 128>}, {pipeline_mode = #tpu.pipeline_mode<synchronous>, transform_indices = @transform_3, window_bounds = array<i64: 128, 128>}, {pipeline_mode = #tpu.pipeline_mode<synchronous>, transform_indices = @transform_4, window_bounds = array<i64: 3, 384, 128>}, {pipeline_mode = #tpu.pipeline_mode<synchronous>, transform_indices = @transform_5, window_bounds = array<i64: 1, 128>}, {pipeline_mode = #tpu.pipeline_mode<synchronous>, transform_indices = @transform_6, window_bounds = array<i64: 1, 128>}, {pipeline_mode = #tpu.pipeline_mode<synchronous>, transform_indices = @transform_7, window_bounds = array<i64: 128, 128>}, {pipeline_mode = #tpu.pipeline_mode<synchronous>, transform_indices = @transform_8, window_bounds = array<i64: 3, 384, 128>}, {transform_indices = @transform_9, window_bounds = array<i64: 1, 256, 128>}]} {
    %cst = arith.constant 0.000000e+00 : bf16
    %0 = vector.broadcast %cst : bf16 to vector<16x384xbf16>
    %c0 = arith.constant 0 : index
    %c0_0 = arith.constant 0 : index
    %1 = vector.load %arg12[%c0, %c0_0] : memref<288x384xbf16, #tpu.memory_space<vmem>>, vector<16x384xbf16>
    tpu.vector_store %arg12[%c0, %c0_0], %0 {strides = array<i32>} : memref<288x384xbf16, #tpu.memory_space<vmem>>, vector<16x384xbf16>,
    %cst_1 = arith.constant 0.000000e+00 : bf16
    %2 = vector.broadcast %cst_1 : bf16 to vector<16x384xbf16>
    %c272 = arith.constant 272 : index
    %c0_2 = arith.constant 0 : index
    %3 = vector.load %arg12[%c272, %c0_2] : memref<288x384xbf16, #tpu.memory_space<vmem>>, vector<16x384xbf16>
    tpu.vector_store %arg12[%c272, %c0_2], %2 {strides = array<i32>} : memref<288x384xbf16, #tpu.memory_space<vmem>>, vector<16x384xbf16>,
    %4 = tpu.iota {dimensions = array<i32: 0>} : vector<256x1xi32>
    %c15_i32 = arith.constant 15 : i32
    %5 = vector.broadcast %c15_i32 : i32 to vector<256x1xi32>
    %6 = arith.andi %4, %5 : vector<256x1xi32>
    %c0_i32 = arith.constant 0 : i32
    %7 = vector.broadcast %c0_i32 : i32 to vector<256x1xi32>
    %8 = arith.cmpi ne, %6, %7 : vector<256x1xi32>
    %c15_i32_3 = arith.constant 15 : i32
    %9 = vector.broadcast %c15_i32_3 : i32 to vector<256x1xi32>
    %10 = arith.cmpi ne, %6, %9 : vector<256x1xi32>
    %cst_4 = arith.constant 1.000000e+00 : f32
    %11 = vector.broadcast %cst_4 : f32 to vector<1x256xf32>
    %c0_5 = arith.constant 0 : index
    %c0_6 = arith.constant 0 : index
    %c0_7 = arith.constant 0 : index
    %12 = vector.load %arg1[%c0_5, %c0_6, %c0_7] : memref<1x256x128xf32, #tpu.memory_space<vmem>>, vector<1x256x128xf32>
    %13 = vector.shape_cast %12 : vector<1x256x128xf32> to vector<256x128xf32>
    %c0_8 = arith.constant 0 : index
    %c0_9 = arith.constant 0 : index
    %14 = vector.load %arg4[%c0_8, %c0_9] : memref<128x128xf32, #tpu.memory_space<vmem>>, vector<128x128xf32>
    %cst_10 = arith.constant dense<0.000000e+00> : vector<1x128xf32>
    %15 = tpu.matmul %11, %13, %cst_10 {dimension_numbers = #tpu.dot_dimension_numbers<[1], [0], [0], [1], [0, 0, 1, 1], [], []>} : vector<1x256xf32>, vector<256x128xf32>, vector<1x128xf32> -> vector<1x128xf32>
    %cst_11 = arith.constant dense<0.000000e+00> : vector<1x128xf32>
    %16 = tpu.matmul %15, %14, %cst_11 {dimension_numbers = #tpu.dot_dimension_numbers<[1], [0], [0], [1], [0, 0, 1, 1], [], []>} : vector<1x128xf32>, vector<128x128xf32>, vector<1x128xf32> -> vector<1x128xf32>
    %cst_12 = arith.constant 0.001953125 : f32
    %17 = vector.broadcast %cst_12 : f32 to vector<1x128xf32>
    %18 = arith.mulf %16, %17 : vector<1x128xf32>
    %19 = vector.broadcast %18 : vector<1x128xf32> to vector<256x128xf32>
    %20 = arith.subf %13, %19 : vector<256x128xf32>
    %21 = arith.mulf %20, %20 : vector<256x128xf32>
    %cst_13 = arith.constant dense<0.000000e+00> : vector<1x128xf32>
    %22 = tpu.matmul %11, %21, %cst_13 {dimension_numbers = #tpu.dot_dimension_numbers<[1], [0], [0], [1], [0, 0, 1, 1], [], []>} : vector<1x256xf32>, vector<256x128xf32>, vector<1x128xf32> -> vector<1x128xf32>
    %cst_14 = arith.constant dense<0.000000e+00> : vector<1x128xf32>
    %23 = tpu.matmul %22, %14, %cst_14 {dimension_numbers = #tpu.dot_dimension_numbers<[1], [0], [0], [1], [0, 0, 1, 1], [], []>} : vector<1x128xf32>, vector<128x128xf32>, vector<1x128xf32> -> vector<1x128xf32>
    %cst_15 = arith.constant 0.001953125 : f32
    %24 = vector.broadcast %cst_15 : f32 to vector<1x128xf32>
    %25 = arith.mulf %23, %24 : vector<1x128xf32>
    %cst_16 = arith.constant 9.99999974E-6 : f32
    %26 = vector.broadcast %cst_16 : f32 to vector<1x128xf32>
    %27 = arith.addf %25, %26 : vector<1x128xf32>
    %28 = math.rsqrt %27 : vector<1x128xf32>
    %c0_17 = arith.constant 0 : index
    %c0_18 = arith.constant 0 : index
    %29 = vector.load %arg2[%c0_17, %c0_18] : memref<1x128xf32, #tpu.memory_space<vmem>>, vector<1x128xf32>
    %30 = arith.mulf %28, %29 : vector<1x128xf32>
    %31 = vector.broadcast %30 : vector<1x128xf32> to vector<256x128xf32>
    %32 = arith.mulf %20, %31 : vector<256x128xf32>
    %c0_19 = arith.constant 0 : index
    %c0_20 = arith.constant 0 : index
    %33 = vector.load %arg3[%c0_19, %c0_20] : memref<1x128xf32, #tpu.memory_space<vmem>>, vector<1x128xf32>
    %34 = vector.broadcast %33 : vector<1x128xf32> to vector<256x128xf32>
    %35 = arith.addf %32, %34 : vector<256x128xf32>
    %cst_21 = arith.constant 0.000000e+00 : f32
    %36 = vector.broadcast %cst_21 : f32 to vector<256x128xf32>
    %37 = arith.maximumf %35, %36 : vector<256x128xf32>
    %38 = arith.truncf %37 : vector<256x128xf32> to vector<256x128xbf16>
    %c16 = arith.constant 16 : index
    %c128 = arith.constant 128 : index
    %39 = vector.load %arg12[%c16, %c128] : memref<288x384xbf16, #tpu.memory_space<vmem>>, vector<256x128xbf16>
    tpu.vector_store %arg12[%c16, %c128], %38 {strides = array<i32>} : memref<288x384xbf16, #tpu.memory_space<vmem>>, vector<256x128xbf16>,
    %c8 = arith.constant 8 : index
    %c0_22 = arith.constant 0 : index
    %40 = vector.load %arg11[%c8, %c0_22] : memref<272x128xf32, #tpu.memory_space<vmem>>, vector<256x128xf32>
    tpu.vector_store %arg11[%c8, %c0_22], %37 {strides = array<i32>} : memref<272x128xf32, #tpu.memory_space<vmem>>, vector<256x128xf32>,
    %c7 = arith.constant 7 : index
    %c0_23 = arith.constant 0 : index
    %41 = vector.load %arg11[%c7, %c0_23] : memref<272x128xf32, #tpu.memory_space<vmem>>, vector<256x128xf32>
    %c9 = arith.constant 9 : index
    %c0_24 = arith.constant 0 : index
    %42 = vector.load %arg11[%c9, %c0_24] : memref<272x128xf32, #tpu.memory_space<vmem>>, vector<256x128xf32>
    %cst_25 = arith.constant 0.000000e+00 : f32
    %43 = vector.shape_cast %8 : vector<256x1xi1> to vector<256x1xi1>
    %44 = vector.broadcast %43 : vector<256x1xi1> to vector<256x128xi1>
    %45 = vector.broadcast %cst_25 : f32 to vector<256x128xf32>
    %46 = arith.select %44, %41, %45 : vector<256x128xi1>, vector<256x128xf32>
    %47 = arith.truncf %46 : vector<256x128xf32> to vector<256x128xbf16>
    %c16_26 = arith.constant 16 : index
    %c0_27 = arith.constant 0 : index
    %48 = vector.load %arg12[%c16_26, %c0_27] : memref<288x384xbf16, #tpu.memory_space<vmem>>, vector<256x128xbf16>
    tpu.vector_store %arg12[%c16_26, %c0_27], %47 {strides = array<i32>} : memref<288x384xbf16, #tpu.memory_space<vmem>>, vector<256x128xbf16>,
    %cst_28 = arith.constant 0.000000e+00 : f32
    %49 = vector.shape_cast %10 : vector<256x1xi1> to vector<256x1xi1>
    %50 = vector.broadcast %49 : vector<256x1xi1> to vector<256x128xi1>
    %51 = vector.broadcast %cst_28 : f32 to vector<256x128xf32>
    %52 = arith.select %50, %42, %51 : vector<256x128xi1>, vector<256x128xf32>
    %53 = arith.truncf %52 : vector<256x128xf32> to vector<256x128xbf16>
    %c16_29 = arith.constant 16 : index
    %c256 = arith.constant 256 : index
    %54 = vector.load %arg12[%c16_29, %c256] : memref<288x384xbf16, #tpu.memory_space<vmem>>, vector<256x128xbf16>
    tpu.vector_store %arg12[%c16_29, %c256], %53 {strides = array<i32>} : memref<288x384xbf16, #tpu.memory_space<vmem>>, vector<256x128xbf16>,
    %c0_30 = arith.constant 0 : index
    %c0_31 = arith.constant 0 : index
    %55 = vector.load %arg12[%c0_30, %c0_31] : memref<288x384xbf16, #tpu.memory_space<vmem>>, vector<256x384xbf16>
    %c0_32 = arith.constant 0 : index
    %c0_33 = arith.constant 0 : index
    %c0_34 = arith.constant 0 : index
    %56 = vector.load %arg5[%c0_32, %c0_33, %c0_34] : memref<3x384x128xbf16, #tpu.memory_space<vmem>>, vector<1x384x128xbf16>
    %57 = vector.shape_cast %56 : vector<1x384x128xbf16> to vector<384x128xbf16>
    %cst_35 = arith.constant dense<0.000000e+00> : vector<256x128xf32>
    %58 = tpu.matmul %55, %57, %cst_35 {dimension_numbers = #tpu.dot_dimension_numbers<[1], [0], [0], [1], [0, 0, 1, 1], [], []>} : vector<256x384xbf16>, vector<384x128xbf16>, vector<256x128xf32> -> vector<256x128xf32>
    %c16_36 = arith.constant 16 : index
    %c0_37 = arith.constant 0 : index
    %59 = vector.load %arg12[%c16_36, %c0_37] : memref<288x384xbf16, #tpu.memory_space<vmem>>, vector<256x384xbf16>
    %c1 = arith.constant 1 : index
    %c0_38 = arith.constant 0 : index
    %c0_39 = arith.constant 0 : index
    %60 = vector.load %arg5[%c1, %c0_38, %c0_39] : memref<3x384x128xbf16, #tpu.memory_space<vmem>>, vector<1x384x128xbf16>
    %61 = vector.shape_cast %60 : vector<1x384x128xbf16> to vector<384x128xbf16>
    %cst_40 = arith.constant dense<0.000000e+00> : vector<256x128xf32>
    %62 = tpu.matmul %59, %61, %cst_40 {dimension_numbers = #tpu.dot_dimension_numbers<[1], [0], [0], [1], [0, 0, 1, 1], [], []>} : vector<256x384xbf16>, vector<384x128xbf16>, vector<256x128xf32> -> vector<256x128xf32>
    %63 = arith.addf %58, %62 : vector<256x128xf32>
    %c32 = arith.constant 32 : index
    %c0_41 = arith.constant 0 : index
    %64 = vector.load %arg12[%c32, %c0_41] : memref<288x384xbf16, #tpu.memory_space<vmem>>, vector<256x384xbf16>
    %c2 = arith.constant 2 : index
    %c0_42 = arith.constant 0 : index
    %c0_43 = arith.constant 0 : index
    %65 = vector.load %arg5[%c2, %c0_42, %c0_43] : memref<3x384x128xbf16, #tpu.memory_space<vmem>>, vector<1x384x128xbf16>
    %66 = vector.shape_cast %65 : vector<1x384x128xbf16> to vector<384x128xbf16>
    %cst_44 = arith.constant dense<0.000000e+00> : vector<256x128xf32>
    %67 = tpu.matmul %64, %66, %cst_44 {dimension_numbers = #tpu.dot_dimension_numbers<[1], [0], [0], [1], [0, 0, 1, 1], [], []>} : vector<256x384xbf16>, vector<384x128xbf16>, vector<256x128xf32> -> vector<256x128xf32>
    %68 = arith.addf %63, %67 : vector<256x128xf32>
    %c0_45 = arith.constant 0 : index
    %c0_46 = arith.constant 0 : index
    %69 = vector.load %arg8[%c0_45, %c0_46] : memref<128x128xf32, #tpu.memory_space<vmem>>, vector<128x128xf32>
    %cst_47 = arith.constant dense<0.000000e+00> : vector<1x128xf32>
    %70 = tpu.matmul %11, %68, %cst_47 {dimension_numbers = #tpu.dot_dimension_numbers<[1], [0], [0], [1], [0, 0, 1, 1], [], []>} : vector<1x256xf32>, vector<256x128xf32>, vector<1x128xf32> -> vector<1x128xf32>
    %cst_48 = arith.constant dense<0.000000e+00> : vector<1x128xf32>
    %71 = tpu.matmul %70, %69, %cst_48 {dimension_numbers = #tpu.dot_dimension_numbers<[1], [0], [0], [1], [0, 0, 1, 1], [], []>} : vector<1x128xf32>, vector<128x128xf32>, vector<1x128xf32> -> vector<1x128xf32>
    %cst_49 = arith.constant 0.001953125 : f32
    %72 = vector.broadcast %cst_49 : f32 to vector<1x128xf32>
    %73 = arith.mulf %71, %72 : vector<1x128xf32>
    %74 = vector.broadcast %73 : vector<1x128xf32> to vector<256x128xf32>
    %75 = arith.subf %68, %74 : vector<256x128xf32>
    %76 = arith.mulf %75, %75 : vector<256x128xf32>
    %cst_50 = arith.constant dense<0.000000e+00> : vector<1x128xf32>
    %77 = tpu.matmul %11, %76, %cst_50 {dimension_numbers = #tpu.dot_dimension_numbers<[1], [0], [0], [1], [0, 0, 1, 1], [], []>} : vector<1x256xf32>, vector<256x128xf32>, vector<1x128xf32> -> vector<1x128xf32>
    %cst_51 = arith.constant dense<0.000000e+00> : vector<1x128xf32>
    %78 = tpu.matmul %77, %69, %cst_51 {dimension_numbers = #tpu.dot_dimension_numbers<[1], [0], [0], [1], [0, 0, 1, 1], [], []>} : vector<1x128xf32>, vector<128x128xf32>, vector<1x128xf32> -> vector<1x128xf32>
    %cst_52 = arith.constant 0.001953125 : f32
    %79 = vector.broadcast %cst_52 : f32 to vector<1x128xf32>
    %80 = arith.mulf %78, %79 : vector<1x128xf32>
    %cst_53 = arith.constant 9.99999974E-6 : f32
    %81 = vector.broadcast %cst_53 : f32 to vector<1x128xf32>
    %82 = arith.addf %80, %81 : vector<1x128xf32>
    %83 = math.rsqrt %82 : vector<1x128xf32>
    %c0_54 = arith.constant 0 : index
    %c0_55 = arith.constant 0 : index
    %84 = vector.load %arg6[%c0_54, %c0_55] : memref<1x128xf32, #tpu.memory_space<vmem>>, vector<1x128xf32>
    %85 = arith.mulf %83, %84 : vector<1x128xf32>
    %86 = vector.broadcast %85 : vector<1x128xf32> to vector<256x128xf32>
    %87 = arith.mulf %75, %86 : vector<256x128xf32>
    %c0_56 = arith.constant 0 : index
    %c0_57 = arith.constant 0 : index
    %88 = vector.load %arg7[%c0_56, %c0_57] : memref<1x128xf32, #tpu.memory_space<vmem>>, vector<1x128xf32>
    %89 = vector.broadcast %88 : vector<1x128xf32> to vector<256x128xf32>
    %90 = arith.addf %87, %89 : vector<256x128xf32>
    %cst_58 = arith.constant 0.000000e+00 : f32
    %91 = vector.broadcast %cst_58 : f32 to vector<256x128xf32>
    %92 = arith.maximumf %90, %91 : vector<256x128xf32>
    %93 = arith.truncf %92 : vector<256x128xf32> to vector<256x128xbf16>
    %c16_59 = arith.constant 16 : index
    %c128_60 = arith.constant 128 : index
    %94 = vector.load %arg12[%c16_59, %c128_60] : memref<288x384xbf16, #tpu.memory_space<vmem>>, vector<256x128xbf16>
    tpu.vector_store %arg12[%c16_59, %c128_60], %93 {strides = array<i32>} : memref<288x384xbf16, #tpu.memory_space<vmem>>, vector<256x128xbf16>,
    %c8_61 = arith.constant 8 : index
    %c0_62 = arith.constant 0 : index
    %95 = vector.load %arg11[%c8_61, %c0_62] : memref<272x128xf32, #tpu.memory_space<vmem>>, vector<256x128xf32>
    tpu.vector_store %arg11[%c8_61, %c0_62], %92 {strides = array<i32>} : memref<272x128xf32, #tpu.memory_space<vmem>>, vector<256x128xf32>,
    %c7_63 = arith.constant 7 : index
    %c0_64 = arith.constant 0 : index
    %96 = vector.load %arg11[%c7_63, %c0_64] : memref<272x128xf32, #tpu.memory_space<vmem>>, vector<256x128xf32>
    %c9_65 = arith.constant 9 : index
    %c0_66 = arith.constant 0 : index
    %97 = vector.load %arg11[%c9_65, %c0_66] : memref<272x128xf32, #tpu.memory_space<vmem>>, vector<256x128xf32>
    %cst_67 = arith.constant 0.000000e+00 : f32
    %98 = vector.shape_cast %8 : vector<256x1xi1> to vector<256x1xi1>
    %99 = vector.broadcast %98 : vector<256x1xi1> to vector<256x128xi1>
    %100 = vector.broadcast %cst_67 : f32 to vector<256x128xf32>
    %101 = arith.select %99, %96, %100 : vector<256x128xi1>, vector<256x128xf32>
    %102 = arith.truncf %101 : vector<256x128xf32> to vector<256x128xbf16>
    %c16_68 = arith.constant 16 : index
    %c0_69 = arith.constant 0 : index
    %103 = vector.load %arg12[%c16_68, %c0_69] : memref<288x384xbf16, #tpu.memory_space<vmem>>, vector<256x128xbf16>
    tpu.vector_store %arg12[%c16_68, %c0_69], %102 {strides = array<i32>} : memref<288x384xbf16, #tpu.memory_space<vmem>>, vector<256x128xbf16>,
    %cst_70 = arith.constant 0.000000e+00 : f32
    %104 = vector.shape_cast %10 : vector<256x1xi1> to vector<256x1xi1>
    %105 = vector.broadcast %104 : vector<256x1xi1> to vector<256x128xi1>
    %106 = vector.broadcast %cst_70 : f32 to vector<256x128xf32>
    %107 = arith.select %105, %97, %106 : vector<256x128xi1>, vector<256x128xf32>
    %108 = arith.truncf %107 : vector<256x128xf32> to vector<256x128xbf16>
    %c16_71 = arith.constant 16 : index
    %c256_72 = arith.constant 256 : index
    %109 = vector.load %arg12[%c16_71, %c256_72] : memref<288x384xbf16, #tpu.memory_space<vmem>>, vector<256x128xbf16>
    tpu.vector_store %arg12[%c16_71, %c256_72], %108 {strides = array<i32>} : memref<288x384xbf16, #tpu.memory_space<vmem>>, vector<256x128xbf16>,
    %c0_73 = arith.constant 0 : index
    %c0_74 = arith.constant 0 : index
    %110 = vector.load %arg12[%c0_73, %c0_74] : memref<288x384xbf16, #tpu.memory_space<vmem>>, vector<256x384xbf16>
    %c0_75 = arith.constant 0 : index
    %c0_76 = arith.constant 0 : index
    %c0_77 = arith.constant 0 : index
    %111 = vector.load %arg9[%c0_75, %c0_76, %c0_77] : memref<3x384x128xbf16, #tpu.memory_space<vmem>>, vector<1x384x128xbf16>
    %112 = vector.shape_cast %111 : vector<1x384x128xbf16> to vector<384x128xbf16>
    %cst_78 = arith.constant dense<0.000000e+00> : vector<256x128xf32>
    %113 = tpu.matmul %110, %112, %cst_78 {dimension_numbers = #tpu.dot_dimension_numbers<[1], [0], [0], [1], [0, 0, 1, 1], [], []>} : vector<256x384xbf16>, vector<384x128xbf16>, vector<256x128xf32> -> vector<256x128xf32>
    %c16_79 = arith.constant 16 : index
    %c0_80 = arith.constant 0 : index
    %114 = vector.load %arg12[%c16_79, %c0_80] : memref<288x384xbf16, #tpu.memory_space<vmem>>, vector<256x384xbf16>
    %c1_81 = arith.constant 1 : index
    %c0_82 = arith.constant 0 : index
    %c0_83 = arith.constant 0 : index
    %115 = vector.load %arg9[%c1_81, %c0_82, %c0_83] : memref<3x384x128xbf16, #tpu.memory_space<vmem>>, vector<1x384x128xbf16>
    %116 = vector.shape_cast %115 : vector<1x384x128xbf16> to vector<384x128xbf16>
    %cst_84 = arith.constant dense<0.000000e+00> : vector<256x128xf32>
    %117 = tpu.matmul %114, %116, %cst_84 {dimension_numbers = #tpu.dot_dimension_numbers<[1], [0], [0], [1], [0, 0, 1, 1], [], []>} : vector<256x384xbf16>, vector<384x128xbf16>, vector<256x128xf32> -> vector<256x128xf32>
    %118 = arith.addf %113, %117 : vector<256x128xf32>
    %c32_85 = arith.constant 32 : index
    %c0_86 = arith.constant 0 : index
    %119 = vector.load %arg12[%c32_85, %c0_86] : memref<288x384xbf16, #tpu.memory_space<vmem>>, vector<256x384xbf16>
    %c2_87 = arith.constant 2 : index
    %c0_88 = arith.constant 0 : index
    %c0_89 = arith.constant 0 : index
    %120 = vector.load %arg9[%c2_87, %c0_88, %c0_89] : memref<3x384x128xbf16, #tpu.memory_space<vmem>>, vector<1x384x128xbf16>
    %121 = vector.shape_cast %120 : vector<1x384x128xbf16> to vector<384x128xbf16>
    %cst_90 = arith.constant dense<0.000000e+00> : vector<256x128xf32>
    %122 = tpu.matmul %119, %121, %cst_90 {dimension_numbers = #tpu.dot_dimension_numbers<[1], [0], [0], [1], [0, 0, 1, 1], [], []>} : vector<256x384xbf16>, vector<384x128xbf16>, vector<256x128xf32> -> vector<256x128xf32>
    %123 = arith.addf %118, %122 : vector<256x128xf32>
    %124 = arith.addf %123, %13 : vector<256x128xf32>
    %c0_91 = arith.constant 0 : index
    %c0_92 = arith.constant 0 : index
    %c0_93 = arith.constant 0 : index
    %125 = vector.load %arg10[%c0_91, %c0_92, %c0_93] : memref<1x256x128xf32, #tpu.memory_space<vmem>>, vector<1x256x128xf32>
    %126 = vector.shape_cast %125 : vector<1x256x128xf32> to vector<256x128xf32>
    %127 = vector.shape_cast %124 : vector<256x128xf32> to vector<1x256x128xf32>
    tpu.vector_store %arg10[%c0_91, %c0_92, %c0_93], %127 {strides = array<i32>} : memref<1x256x128xf32, #tpu.memory_space<vmem>>, vector<1x256x128xf32>,
    return
  }
  func.func @transform_0(%arg0: i32) -> (i32, i32, i32) {
    %c0_i32 = arith.constant 0 : i32
    %c0_i32_0 = arith.constant 0 : i32
    %c0_i32_1 = arith.constant 0 : i32
    return %arg0, %c0_i32, %c0_i32_0 : i32, i32, i32
  }
  func.func @transform_1(%arg0: i32) -> (i32, i32) {
    %c0_i32 = arith.constant 0 : i32
    %c0_i32_0 = arith.constant 0 : i32
    %c0_i32_1 = arith.constant 0 : i32
    return %c0_i32, %c0_i32_0 : i32, i32
  }
  func.func @transform_2(%arg0: i32) -> (i32, i32) {
    %c0_i32 = arith.constant 0 : i32
    %c0_i32_0 = arith.constant 0 : i32
    %c0_i32_1 = arith.constant 0 : i32
    return %c0_i32, %c0_i32_0 : i32, i32
  }
  func.func @transform_3(%arg0: i32) -> (i32, i32) {
    %c0_i32 = arith.constant 0 : i32
    %c0_i32_0 = arith.constant 0 : i32
    %c0_i32_1 = arith.constant 0 : i32
    return %c0_i32, %c0_i32_0 : i32, i32
  }
  func.func @transform_4(%arg0: i32) -> (i32, i32, i32) {
    %c0_i32 = arith.constant 0 : i32
    %c0_i32_0 = arith.constant 0 : i32
    %c0_i32_1 = arith.constant 0 : i32
    %c0_i32_2 = arith.constant 0 : i32
    return %c0_i32, %c0_i32_0, %c0_i32_1 : i32, i32, i32
  }
  func.func @transform_5(%arg0: i32) -> (i32, i32) {
    %c0_i32 = arith.constant 0 : i32
    %c0_i32_0 = arith.constant 0 : i32
    %c0_i32_1 = arith.constant 0 : i32
    return %c0_i32, %c0_i32_0 : i32, i32
  }
  func.func @transform_6(%arg0: i32) -> (i32, i32) {
    %c0_i32 = arith.constant 0 : i32
    %c0_i32_0 = arith.constant 0 : i32
    %c0_i32_1 = arith.constant 0 : i32
    return %c0_i32, %c0_i32_0 : i32, i32
  }
  func.func @transform_7(%arg0: i32) -> (i32, i32) {
    %c0_i32 = arith.constant 0 : i32
    %c0_i32_0 = arith.constant 0 : i32
    %c0_i32_1 = arith.constant 0 : i32
    return %c0_i32, %c0_i32_0 : i32, i32
  }
  func.func @transform_8(%arg0: i32) -> (i32, i32, i32) {
    %c0_i32 = arith.constant 0 : i32
    %c0_i32_0 = arith.constant 0 : i32
    %c0_i32_1 = arith.constant 0 : i32
    %c0_i32_2 = arith.constant 0 : i32
    return %c0_i32, %c0_i32_0, %c0_i32_1 : i32, i32, i32
  }
  func.func @transform_9(%arg0: i32) -> (i32, i32, i32) {
    %c0_i32 = arith.constant 0 : i32
    %c0_i32_0 = arith.constant 0 : i32
    %c0_i32_1 = arith.constant 0 : i32
    return %arg0, %c0_i32, %c0_i32_0 : i32, i32, i32
  }
}

</mosaic_0001>

<llo_original>
// kernel: resblock_apply.1
$region0: #{resblock_apply.1}
  #allocation0 [shape = 'u32[]', space=smem, size = 0x4, offset = 0x4, fixed_abs, tag = 'smem constant byte address 0x4 - core index']
  #allocation1 [shape = 'u32[144,128]{1,0:T(1,128)}', space=vmem, size = 0x12000, scoped, tag = 'internal scratch']
  #allocation2 [shape = 'f32[272,128]{1,0:T(8,128)}', space=vmem, size = 0x22000, scoped, tag = 'scratch operand']
  #allocation3 [shape = 'bf16[288,384]{1,0:T(16,128)(2,1)}', space=vmem, size = 0x36000, scoped, tag = 'scratch operand']
  %s0 = inlined_call_operand.vmem [shape: f32[2,256,128], index: 0, kind: input, shape index: {}]
  %s1 = inlined_call_operand.vmem [shape: f32[1,128], index: 1, kind: input, shape index: {}]
  %s2 = inlined_call_operand.vmem [shape: f32[1,128], index: 2, kind: input, shape index: {}]
  %s3 = inlined_call_operand.vmem [shape: f32[128,128], index: 3, kind: input, shape index: {}]
  %s4 = inlined_call_operand.vmem [shape: bf16[3,384,128], index: 4, kind: input, shape index: {}]
  %s5 = inlined_call_operand.vmem [shape: f32[1,128], index: 5, kind: input, shape index: {}]
  %s6 = inlined_call_operand.vmem [shape: f32[1,128], index: 6, kind: input, shape index: {}]
  %s7 = inlined_call_operand.vmem [shape: f32[128,128], index: 7, kind: input, shape index: {}]
  %s8 = inlined_call_operand.hbm [shape: bf16[3,384,128], index: 8, kind: input, shape index: {}]
  %s9 = inlined_call_operand.hbm [shape: f32[2,256,128], index: 9, kind: output, shape index: {}]
  %s10 = sld [smem:[#allocation0]]
  $region73: #{resblock_apply.1} parent=0
    _
  %s12 = ssub.s32 1, %s10
  %s13 = scalar_select 0, %s12, %s10
  $region1: #{resblock_apply.1} parent=0
    #allocation4 [shape = 'u8[294912]{0}', space=vmem, size = 0x48000, scoped, tag = 'input window, operand 8, single buffered']
    #allocation5 [shape = 's32[2]{0}', space=sflag, size = 0x8, scoped, tag = 'scoped memory for resblock_apply.1']
    #allocation6 [shape = 's32[2]{0}', space=sflag, size = 0x8, scoped, tag = 'scoped memory for resblock_apply.1']
    #allocation7 [shape = 'u8[262144]{0}', space=vmem, size = 0x40000, scoped, tag = 'output window, operand 0']
    %14 = vsyncpa [#allocation5], 0
    %15 = vsyncpa [#allocation6], 0
    %s16 = scalar_lea.sflag [#allocation6], 1
    %17 = vsyncpa %s16, 0
    loop: start=0, step=1, limit=4
    $region2: #{resblock_apply.1} parent=1 // loop_pre_header
      _
    $region3: #{resblock_apply.1} parent=1 // loop_header
      %s19 = sphi 0, %s23
      %p20 = scmp.ge.s32.totalorder %s19, 4
      %s29 = sphi 0, %s31
      %s32 = sphi 0, %s29
      %s33 = sphi 0, %s32
      %s49 = sphi 0, %s33
      %s53 = sphi 0, %s53
      %s55 = sphi 0, %s53
      %s56 = sphi 0, %s55
      %s70 = sphi 0, %s56
      %s74 = sphi 0, %s74
      %s76 = sphi 0, %s74
      %s77 = sphi 0, %s76
      %s91 = sphi 0, %s77
      %s95 = sphi 0, %s95
      %s97 = sphi 0, %s95
      %s98 = sphi 0, %s97
      %s112 = sphi 0, %s98
      %s116 = sphi 0, %s116
      %s118 = sphi 0, %s116
      %s119 = sphi 0, %s118
      %s133 = sphi 0, %s119
      %s137 = sphi 0, %s137
      %s139 = sphi 0, %s137
      %s140 = sphi 0, %s139
      %s154 = sphi 0, %s140
      %s158 = sphi 0, %s158
      %s160 = sphi 0, %s158
      %s161 = sphi 0, %s160
      %s175 = sphi 0, %s161
      %s179 = sphi 0, %s179
      %s181 = sphi 0, %s179
      %s182 = sphi 0, %s181
      %s196 = sphi 0, %s182
      %s200 = sphi 0, %s200
      %s202 = sphi 0, %s200
      %s203 = sphi 0, %s202
      %s217 = sphi 0, %s203
      %s223 = sphi 0, %s225
      %s226 = sphi 0, %s223
      %s227 = sphi 0, %s226
      %s243 = sphi 0, %s227
    $region4: #{resblock_apply.1} parent=1 // loop_header_branch
      %22 = sbr.rel (%p20) target = $region8
    $region5: #{resblock_apply.1} parent=1 // loop_body
      %s24 = ssub.s32 %s19, 1
      %s25 = ssub.s32 %s19, 2
      %s26 = sadd.s32 %s19, 1
      %s27 = ssub.s32 %s19, %s26
      %p28 = scmp.eq.s32.totalorder %s27, 0
      %s30 = sadd.s32 %s29, 1
      %s31 = scalar_select %p28, %s29, %s30
      %p34 = pneg %p28
      %p35 = scmp.eq.s32.totalorder %s19, 1
      %p36 = por %p34, %p35
      %p37 = scmp.ne.s32.totalorder %s29, %s32
      %p38 = scmp.eq.s32.totalorder %s19, 0
      %p39 = por %p37, %p38
      %p40 = scmp.ne.s32.totalorder %s29, %s32
      %p41 = scmp.eq.s32.totalorder %s24, 1
      %p42 = por %p40, %p41
      %p43 = scmp.ne.s32.totalorder %s32, %s33
      %p44 = scmp.eq.s32.totalorder %s24, 0
      %p45 = por %p43, %p44
      %p46 = scmp.ne.s32.totalorder %s32, %s33
      %p47 = scmp.eq.s32.totalorder %s25, 1
      %p48 = por %p46, %p47
      %p50 = scmp.ne.s32.totalorder %s33, %s49
      %p51 = scmp.eq.s32.totalorder %s25, 0
      %p52 = por %p50, %p51
      %s54 = sadd.s32 %s53, 1
      %p57 = scmp.eq.s32.totalorder %s19, 1
      %p58 = scmp.ne.s32.totalorder %s53, %s55
      %p59 = scmp.eq.s32.totalorder %s19, 0
      %p60 = por %p58, %p59
      %p61 = scmp.ne.s32.totalorder %s53, %s55
      %p62 = scmp.eq.s32.totalorder %s24, 1
      %p63 = por %p61, %p62
      %p64 = scmp.ne.s32.totalorder %s55, %s56
      %p65 = scmp.eq.s32.totalorder %s24, 0
      %p66 = por %p64, %p65
      %p67 = scmp.ne.s32.totalorder %s55, %s56
      %p68 = scmp.eq.s32.totalorder %s25, 1
      %p69 = por %p67, %p68
      %p71 = scmp.ne.s32.totalorder %s56, %s70
      %p72 = scmp.eq.s32.totalorder %s25, 0
      %p73 = por %p71, %p72
      %s75 = sadd.s32 %s74, 1
      %p78 = scmp.eq.s32.totalorder %s19, 1
      %p79 = scmp.ne.s32.totalorder %s74, %s76
      %p80 = scmp.eq.s32.totalorder %s19, 0
      %p81 = por %p79, %p80
      %p82 = scmp.ne.s32.totalorder %s74, %s76
      %p83 = scmp.eq.s32.totalorder %s24, 1
      %p84 = por %p82, %p83
      %p85 = scmp.ne.s32.totalorder %s76, %s77
      %p86 = scmp.eq.s32.totalorder %s24, 0
      %p87 = por %p85, %p86
      %p88 = scmp.ne.s32.totalorder %s76, %s77
      %p89 = scmp.eq.s32.totalorder %s25, 1
      %p90 = por %p88, %p89
      %p92 = scmp.ne.s32.totalorder %s77, %s91
      %p93 = scmp.eq.s32.totalorder %s25, 0
      %p94 = por %p92, %p93
      %s96 = sadd.s32 %s95, 1
      %p99 = scmp.eq.s32.totalorder %s19, 1
      %p100 = scmp.ne.s32.totalorder %s95, %s97
      %p101 = scmp.eq.s32.totalorder %s19, 0
      %p102 = por %p100, %p101
      %p103 = scmp.ne.s32.totalorder %s95, %s97
      %p104 = scmp.eq.s32.totalorder %s24, 1
      %p105 = por %p103, %p104
      %p106 = scmp.ne.s32.totalorder %s97, %s98
      %p107 = scmp.eq.s32.totalorder %s24, 0
      %p108 = por %p106, %p107
      %p109 = scmp.ne.s32.totalorder %s97, %s98
      %p110 = scmp.eq.s32.totalorder %s25, 1
      %p111 = por %p109, %p110
      %p113 = scmp.ne.s32.totalorder %s98, %s112
      %p114 = scmp.eq.s32.totalorder %s25, 0
      %p115 = por %p113, %p114
      %s117 = sadd.s32 %s116, 1
      %p120 = scmp.eq.s32.totalorder %s19, 1
      %p121 = scmp.ne.s32.totalorder %s116, %s118
      %p122 = scmp.eq.s32.totalorder %s19, 0
      %p123 = por %p121, %p122
      %p124 = scmp.ne.s32.totalorder %s116, %s118
      %p125 = scmp.eq.s32.totalorder %s24, 1
      %p126 = por %p124, %p125
      %p127 = scmp.ne.s32.totalorder %s118, %s119
      %p128 = scmp.eq.s32.totalorder %s24, 0
      %p129 = por %p127, %p128
      %p130 = scmp.ne.s32.totalorder %s118, %s119
      %p131 = scmp.eq.s32.totalorder %s25, 1
      %p132 = por %p130, %p131
      %p134 = scmp.ne.s32.totalorder %s119, %s133
      %p135 = scmp.eq.s32.totalorder %s25, 0
      %p136 = por %p134, %p135
      %s138 = sadd.s32 %s137, 1
      %p141 = scmp.eq.s32.totalorder %s19, 1
      %p142 = scmp.ne.s32.totalorder %s137, %s139
      %p143 = scmp.eq.s32.totalorder %s19, 0
      %p144 = por %p142, %p143
      %p145 = scmp.ne.s32.totalorder %s137, %s139
      %p146 = scmp.eq.s32.totalorder %s24, 1
      %p147 = por %p145, %p146
      %p148 = scmp.ne.s32.totalorder %s139, %s140
      %p149 = scmp.eq.s32.totalorder %s24, 0
      %p150 = por %p148, %p149
      %p151 = scmp.ne.s32.totalorder %s139, %s140
      %p152 = scmp.eq.s32.totalorder %s25, 1
      %p153 = por %p151, %p152
      %p155 = scmp.ne.s32.totalorder %s140, %s154
      %p156 = scmp.eq.s32.totalorder %s25, 0
      %p157 = por %p155, %p156
      %s159 = sadd.s32 %s158, 1
      %p162 = scmp.eq.s32.totalorder %s19, 1
      %p163 = scmp.ne.s32.totalorder %s158, %s160
      %p164 = scmp.eq.s32.totalorder %s19, 0
      %p165 = por %p163, %p164
      %p166 = scmp.ne.s32.totalorder %s158, %s160
      %p167 = scmp.eq.s32.totalorder %s24, 1
      %p168 = por %p166, %p167
      %p169 = scmp.ne.s32.totalorder %s160, %s161
      %p170 = scmp.eq.s32.totalorder %s24, 0
      %p171 = por %p169, %p170
      %p172 = scmp.ne.s32.totalorder %s160, %s161
      %p173 = scmp.eq.s32.totalorder %s25, 1
      %p174 = por %p172, %p173
      %p176 = scmp.ne.s32.totalorder %s161, %s175
      %p177 = scmp.eq.s32.totalorder %s25, 0
      %p178 = por %p176, %p177
      %s180 = sadd.s32 %s179, 1
      %p183 = scmp.eq.s32.totalorder %s19, 1
      %p184 = scmp.ne.s32.totalorder %s179, %s181
      %p185 = scmp.eq.s32.totalorder %s19, 0
      %p186 = por %p184, %p185
      %p187 = scmp.ne.s32.totalorder %s179, %s181
      %p188 = scmp.eq.s32.totalorder %s24, 1
      %p189 = por %p187, %p188
      %p190 = scmp.ne.s32.totalorder %s181, %s182
      %p191 = scmp.eq.s32.totalorder %s24, 0
      %p192 = por %p190, %p191
      %p193 = scmp.ne.s32.totalorder %s181, %s182
      %p194 = scmp.eq.s32.totalorder %s25, 1
      %p195 = por %p193, %p194
      %p197 = scmp.ne.s32.totalorder %s182, %s196
      %p198 = scmp.eq.s32.totalorder %s25, 0
      %p199 = por %p197, %p198
      %s201 = sadd.s32 %s200, 1
      %p204 = scmp.eq.s32.totalorder %s19, 1
      %p205 = scmp.ne.s32.totalorder %s200, %s202
      %p206 = scmp.eq.s32.totalorder %s19, 0
      %p207 = por %p205, %p206
      %p208 = scmp.ne.s32.totalorder %s200, %s202
      %p209 = scmp.eq.s32.totalorder %s24, 1
      %p210 = por %p208, %p209
      %p211 = scmp.ne.s32.totalorder %s202, %s203
      %p212 = scmp.eq.s32.totalorder %s24, 0
      %p213 = por %p211, %p212
      %p214 = scmp.ne.s32.totalorder %s202, %s203
      %p215 = scmp.eq.s32.totalorder %s25, 1
      %p216 = por %p214, %p215
      %p218 = scmp.ne.s32.totalorder %s203, %s217
      %p219 = scmp.eq.s32.totalorder %s25, 0
      %p220 = por %p218, %p219
      %s221 = ssub.s32 %s19, %s26
      %p222 = scmp.eq.s32.totalorder %s221, 0
      %s224 = sadd.s32 %s223, 1
      %s225 = scalar_select %p222, %s223, %s224
      %p228 = pneg %p222
      %p229 = scmp.eq.s32.totalorder %s19, 1
      %p230 = por %p228, %p229
      %p231 = scmp.ne.s32.totalorder %s223, %s226
      %p232 = scmp.eq.s32.totalorder %s19, 0
      %p233 = por %p231, %p232
      %p234 = scmp.ne.s32.totalorder %s223, %s226
      %p235 = scmp.eq.s32.totalorder %s24, 1
      %p236 = por %p234, %p235
      %p237 = scmp.ne.s32.totalorder %s226, %s227
      %p238 = scmp.eq.s32.totalorder %s24, 0
      %p239 = por %p237, %p238
      %p240 = scmp.ne.s32.totalorder %s226, %s227
      %p241 = scmp.eq.s32.totalorder %s25, 1
      %p242 = por %p240, %p241
      %p244 = scmp.ne.s32.totalorder %s227, %s243
      %p245 = scmp.eq.s32.totalorder %s25, 0
      %p246 = por %p244, %p245
      %p247 = scmp.le.s32.totalorder 1, %s19
      %p248 = scmp.lt.s32.totalorder %s19, 3
      %p249 = pnand %p247, %p248
      %p250 = pneg %p249
      // Predicated region
      $region9: #{resblock_apply.1} parent=5 // pred_check
        _
      $region10: #{resblock_apply.1} parent=5 // pred_check_branch
        %252 = sbr.rel (%p249) target = $region12
      $region11: #{resblock_apply.1} parent=5 // pred_region
        %s253 = ssub.s32 %s19, 1
        // Predicated region
        $region13: #{resblock_apply.1} parent=11 // pred_check
          %p254 = pneg %p66
        $region14: #{resblock_apply.1} parent=11 // pred_check_branch
          %256 = sbr.rel (%p254) target = $region16
        $region15: #{resblock_apply.1} parent=11 // pred_region
          _
        $region16: #{resblock_apply.1} parent=11 // pred_fallthru
          _
        // Predicated region
        $region17: #{resblock_apply.1} parent=11 // pred_check
          %p257 = pneg %p87
        $region18: #{resblock_apply.1} parent=11 // pred_check_branch
          %259 = sbr.rel (%p257) target = $region20
        $region19: #{resblock_apply.1} parent=11 // pred_region
          _
        $region20: #{resblock_apply.1} parent=11 // pred_fallthru
          _
        // Predicated region
        $region21: #{resblock_apply.1} parent=11 // pred_check
          %p260 = pneg %p108
        $region22: #{resblock_apply.1} parent=11 // pred_check_branch
          %262 = sbr.rel (%p260) target = $region24
        $region23: #{resblock_apply.1} parent=11 // pred_region
          _
        $region24: #{resblock_apply.1} parent=11 // pred_fallthru
          _
        // Predicated region
        $region25: #{resblock_apply.1} parent=11 // pred_check
          %p263 = pneg %p129
        $region26: #{resblock_apply.1} parent=11 // pred_check_branch
          %265 = sbr.rel (%p263) target = $region28
        $region27: #{resblock_apply.1} parent=11 // pred_region
          _
        $region28: #{resblock_apply.1} parent=11 // pred_fallthru
          _
        // Predicated region
        $region29: #{resblock_apply.1} parent=11 // pred_check
          %p266 = pneg %p150
        $region30: #{resblock_apply.1} parent=11 // pred_check_branch
          %268 = sbr.rel (%p266) target = $region32
        $region31: #{resblock_apply.1} parent=11 // pred_region
          _
        $region32: #{resblock_apply.1} parent=11 // pred_fallthru
          _
        // Predicated region
        $region33: #{resblock_apply.1} parent=11 // pred_check
          %p269 = pneg %p171
        $region34: #{resblock_apply.1} parent=11 // pred_check_branch
          %271 = sbr.rel (%p269) target = $region36
        $region35: #{resblock_apply.1} parent=11 // pred_region
          _
        $region36: #{resblock_apply.1} parent=11 // pred_fallthru
          _
        // Predicated region
        $region37: #{resblock_apply.1} parent=11 // pred_check
          %p272 = pneg %p192
        $region38: #{resblock_apply.1} parent=11 // pred_check_branch
          %274 = sbr.rel (%p272) target = $region40
        $region39: #{resblock_apply.1} parent=11 // pred_region
          _
        $region40: #{resblock_apply.1} parent=11 // pred_fallthru
          _
        // Predicated region
        $region41: #{resblock_apply.1} parent=11 // pred_check
          %p275 = pneg %p213
        $region42: #{resblock_apply.1} parent=11 // pred_check_branch
          %277 = sbr.rel (%p275) target = $region44
        $region43: #{resblock_apply.1} parent=11 // pred_region
          %s279 = ssub.s32 9216, 9216
          %280 = vsyncadd [#allocation5], %s279
          %s281 = sshll.u32 [#allocation4], 4
          %s282 = int_to_ptr.vmem [resolvable:$true] %s281
          %287 = dma.hbm_to_vmem [thread:$0]  %s8, 9216, %s282, [#allocation5], 64, 64, 4
        $region44: #{resblock_apply.1} parent=11 // pred_fallthru
          _
      $region12: #{resblock_apply.1} parent=5 // pred_fallthru
        _
      %p288 = scmp.lt.s32.totalorder %s19, 2
      // Predicated region
      $region45: #{resblock_apply.1} parent=5 // pred_check
        %p289 = pneg %p288
      $region46: #{resblock_apply.1} parent=5 // pred_check_branch
        %291 = sbr.rel (%p289) target = $region48
      $region47: #{resblock_apply.1} parent=5 // pred_region
        // Predicated region
        $region49: #{resblock_apply.1} parent=47 // pred_check
          %p292 = pneg %p39
        $region50: #{resblock_apply.1} parent=47 // pred_check_branch
          %294 = sbr.rel (%p292) target = $region52
        $region51: #{resblock_apply.1} parent=47 // pred_region
          %p295 = scmp.lt.s32.totalorder %s19, 1
          %s296 = scalar_select %p295, %s19, 1
          %s297 = smul.addr %s296, 32
          %s298 = smul.addr %s297, 8
          %s299 = scalar_lea.vmem %s0, %s298
        $region52: #{resblock_apply.1} parent=47 // pred_fallthru
          _
      $region48: #{resblock_apply.1} parent=5 // pred_fallthru
        _
      %p300 = scmp.le.s32.totalorder 1, %s19
      %p301 = scmp.lt.s32.totalorder %s19, 3
      %p302 = pnand %p300, %p301
      %p303 = pneg %p302
      // Predicated region
      $region53: #{resblock_apply.1} parent=5 // pred_check
        _
      $region54: #{resblock_apply.1} parent=5 // pred_check_branch
        %305 = sbr.rel (%p302) target = $region56
      $region55: #{resblock_apply.1} parent=5 // pred_region
        %s306 = ssub.s32 %s19, 1
        // Predicated region
        $region57: #{resblock_apply.1} parent=55 // pred_check
          %p307 = pneg %p213
        $region58: #{resblock_apply.1} parent=55 // pred_check_branch
          %309 = sbr.rel (%p307) target = $region60
        $region59: #{resblock_apply.1} parent=55 // pred_region
          %310 = dma.done [#allocation5], 9216
        $region60: #{resblock_apply.1} parent=55 // pred_fallthru
          _
        %p311 = scmp.lt.s32.totalorder %s24, 1
        %s312 = scalar_select %p311, %s24, 1
        %s313 = smul.addr %s312, 32
        %s314 = smul.addr %s313, 8
        %s315 = scalar_lea.vmem %s0, %s314
        %p316 = pneg %p45
        %p317 = pneg %p42
        %p318 = pneg %p66
        %p319 = pneg %p63
        %p320 = pneg %p87
        %p321 = pneg %p84
        %p322 = pneg %p108
        %p323 = pneg %p105
        %p324 = pneg %p129
        %p325 = pneg %p126
        %p326 = pneg %p150
        %p327 = pneg %p147
        %p328 = pneg %p171
        %p329 = pneg %p168
        %p330 = pneg %p192
        %p331 = pneg %p189
        %p332 = pneg %p213
        %p333 = pneg %p210
        %p334 = pneg %p239
        %p335 = pneg %p236
        %s336 = sand.u32 %s226, 1
        %s337 = scalar_lea.sflag [#allocation6], %s336
        %s338 = sand.u32 %s226, 1
        %s339 = smul.addr %s338, 256
        %s340 = scalar_lea.vmem [#allocation7], %s339
        %p341 = scmp.lt.s32.totalorder %s24, 1
        %s342 = scalar_select %p341, %s24, 1
        %s343 = smul.addr %s342, 32
        %s344 = smul.addr %s343, 8
        %s345 = scalar_lea.vmem %s0, %s344
        %347 = vst [vmem:[#allocation3] sm:$0xff] 0
        %348 = vst [vmem:[#allocation3 + $0x8] sm:$0xff] 0
        %349 = vst [vmem:[#allocation3 + $0x10] sm:$0xff] 0
        %350 = vst [vmem:[#allocation3 + $0x198] sm:$0xff] 0
        %351 = vst [vmem:[#allocation3 + $0x1a0] sm:$0xff] 0
        %352 = vst [vmem:[#allocation3 + $0x1a8] sm:$0xff] 0
        %v353 = vlaneseq
        %v354 = vshrl.u32 %v353, 7
        %v355 = vadd.s32 %v354, 8
        %v356 = vadd.s32 %v354, 16
        %v357 = vadd.s32 %v354, 24
        %v358 = vadd.s32 %v354, 32
        %v359 = vadd.s32 %v354, 40
        %v360 = vadd.s32 %v354, 48
        %v361 = vadd.s32 %v354, 56
        %v362 = vadd.s32 %v354, 64
        %v363 = vadd.s32 %v354, 72
        %v364 = vadd.s32 %v354, 80
        %v365 = vadd.s32 %v354, 88
        %v366 = vadd.s32 %v354, 96
        %v367 = vadd.s32 %v354, 104
        %v368 = vadd.s32 %v354, 112
        %v369 = vadd.s32 %v354, 120
        %v370 = vadd.s32 %v354, 128
        %v371 = vadd.s32 %v354, 136
        %v372 = vadd.s32 %v354, 144
        %v373 = vadd.s32 %v354, 152
        %v374 = vadd.s32 %v354, 160
        %v375 = vadd.s32 %v354, 168
        %v376 = vadd.s32 %v354, 176
        %v377 = vadd.s32 %v354, 184
        %v378 = vadd.s32 %v354, 192
        %v379 = vadd.s32 %v354, 200
        %v380 = vadd.s32 %v354, 208
        %v381 = vadd.s32 %v354, 216
        %v382 = vadd.s32 %v354, 224
        %v383 = vadd.s32 %v354, 232
        %v384 = vadd.s32 %v354, 240
        %v385 = vadd.s32 %v354, 248
        %v386 = vand.u32 %v354, 15
        %v387 = vand.u32 %v355, 15
        %v388 = vand.u32 %v356, 15
        %v389 = vand.u32 %v357, 15
        %v390 = vand.u32 %v358, 15
        %v391 = vand.u32 %v359, 15
        %v392 = vand.u32 %v360, 15
        %v393 = vand.u32 %v361, 15
        %v394 = vand.u32 %v362, 15
        %v395 = vand.u32 %v363, 15
        %v396 = vand.u32 %v364, 15
        %v397 = vand.u32 %v365, 15
        %v398 = vand.u32 %v366, 15
        %v399 = vand.u32 %v367, 15
        %v400 = vand.u32 %v368, 15
        %v401 = vand.u32 %v369, 15
        %v402 = vand.u32 %v370, 15
        %v403 = vand.u32 %v371, 15
        %v404 = vand.u32 %v372, 15
        %v405 = vand.u32 %v373, 15
        %v406 = vand.u32 %v374, 15
        %v407 = vand.u32 %v375, 15
        %v408 = vand.u32 %v376, 15
        %v409 = vand.u32 %v377, 15
        %v410 = vand.u32 %v378, 15
        %v411 = vand.u32 %v379, 15
        %v412 = vand.u32 %v380, 15
        %v413 = vand.u32 %v381, 15
        %v414 = vand.u32 %v382, 15
        %v415 = vand.u32 %v383, 15
        %v416 = vand.u32 %v384, 15
        %v417 = vand.u32 %v385, 15
        %vm418 = vcmp.ne.s32.totalorder %v386, 0
        %vm419 = vcmp.ne.s32.totalorder %v387, 0
        %vm420 = vcmp.ne.s32.totalorder %v388, 0
        %vm421 = vcmp.ne.s32.totalorder %v389, 0
        %vm422 = vcmp.ne.s32.totalorder %v390, 0
        %vm423 = vcmp.ne.s32.totalorder %v391, 0
        %vm424 = vcmp.ne.s32.totalorder %v392, 0
        %vm425 = vcmp.ne.s32.totalorder %v393, 0
        %vm426 = vcmp.ne.s32.totalorder %v394, 0
        %vm427 = vcmp.ne.s32.totalorder %v395, 0
        %vm428 = vcmp.ne.s32.totalorder %v396, 0
        %vm429 = vcmp.ne.s32.totalorder %v397, 0
        %vm430 = vcmp.ne.s32.totalorder %v398, 0
        %vm431 = vcmp.ne.s32.totalorder %v399, 0
        %vm432 = vcmp.ne.s32.totalorder %v400, 0
        %vm433 = vcmp.ne.s32.totalorder %v401, 0
        %vm434 = vcmp.ne.s32.totalorder %v402, 0
        %vm435 = vcmp.ne.s32.totalorder %v403, 0
        %vm436 = vcmp.ne.s32.totalorder %v404, 0
        %vm437 = vcmp.ne.s32.totalorder %v405, 0
        %vm438 = vcmp.ne.s32.totalorder %v406, 0
        %vm439 = vcmp.ne.s32.totalorder %v407, 0
        %vm440 = vcmp.ne.s32.totalorder %v408, 0
        %vm441 = vcmp.ne.s32.totalorder %v409, 0
        %vm442 = vcmp.ne.s32.totalorder %v410, 0
        %vm443 = vcmp.ne.s32.totalorder %v411, 0
        %vm444 = vcmp.ne.s32.totalorder %v412, 0
        %vm445 = vcmp.ne.s32.totalorder %v413, 0
        %vm446 = vcmp.ne.s32.totalorder %v414, 0
        %vm447 = vcmp.ne.s32.totalorder %v415, 0
        %vm448 = vcmp.ne.s32.totalorder %v416, 0
        %vm449 = vcmp.ne.s32.totalorder %v417, 0
        %vm450 = vcmp.ne.s32.totalorder %v386, 15
        %vm451 = vcmp.ne.s32.totalorder %v387, 15
        %vm452 = vcmp.ne.s32.totalorder %v388, 15
        %vm453 = vcmp.ne.s32.totalorder %v389, 15
        %vm454 = vcmp.ne.s32.totalorder %v390, 15
        %vm455 = vcmp.ne.s32.totalorder %v391, 15
        %vm456 = vcmp.ne.s32.totalorder %v392, 15
        %vm457 = vcmp.ne.s32.totalorder %v393, 15
        %vm458 = vcmp.ne.s32.totalorder %v394, 15
        %vm459 = vcmp.ne.s32.totalorder %v395, 15
        %vm460 = vcmp.ne.s32.totalorder %v396, 15
        %vm461 = vcmp.ne.s32.totalorder %v397, 15
        %vm462 = vcmp.ne.s32.totalorder %v398, 15
        %vm463 = vcmp.ne.s32.totalorder %v399, 15
        %vm464 = vcmp.ne.s32.totalorder %v400, 15
        %vm465 = vcmp.ne.s32.totalorder %v401, 15
        %vm466 = vcmp.ne.s32.totalorder %v402, 15
        %vm467 = vcmp.ne.s32.totalorder %v403, 15
        %vm468 = vcmp.ne.s32.totalorder %v404, 15
        %vm469 = vcmp.ne.s32.totalorder %v405, 15
        %vm470 = vcmp.ne.s32.totalorder %v406, 15
        %vm471 = vcmp.ne.s32.totalorder %v407, 15
        %vm472 = vcmp.ne.s32.totalorder %v408, 15
        %vm473 = vcmp.ne.s32.totalorder %v409, 15
        %vm474 = vcmp.ne.s32.totalorder %v410, 15
        %vm475 = vcmp.ne.s32.totalorder %v411, 15
        %vm476 = vcmp.ne.s32.totalorder %v412, 15
        %vm477 = vcmp.ne.s32.totalorder %v413, 15
        %vm478 = vcmp.ne.s32.totalorder %v414, 15
        %vm479 = vcmp.ne.s32.totalorder %v415, 15
        %vm480 = vcmp.ne.s32.totalorder %v416, 15
        %vm481 = vcmp.ne.s32.totalorder %v417, 15
        %v482 = vld [vmem:[%s345] sm:$0xff]
        %v483 = vld [vmem:[%s345 + $0x8] sm:$0xff]
        %v484 = vld [vmem:[%s345 + $0x10] sm:$0xff]
        %v485 = vld [vmem:[%s345 + $0x18] sm:$0xff]
        %v486 = vld [vmem:[%s345 + $0x20] sm:$0xff]
        %v487 = vld [vmem:[%s345 + $0x28] sm:$0xff]
        %v488 = vld [vmem:[%s345 + $0x30] sm:$0xff]
        %v489 = vld [vmem:[%s345 + $0x38] sm:$0xff]
        %v490 = vld [vmem:[%s345 + $0x40] sm:$0xff]
        %v491 = vld [vmem:[%s345 + $0x48] sm:$0xff]
        %v492 = vld [vmem:[%s345 + $0x50] sm:$0xff]
        %v493 = vld [vmem:[%s345 + $0x58] sm:$0xff]
        %v494 = vld [vmem:[%s345 + $0x60] sm:$0xff]
        %v495 = vld [vmem:[%s345 + $0x68] sm:$0xff]
        %v496 = vld [vmem:[%s345 + $0x70] sm:$0xff]
        %v497 = vld [vmem:[%s345 + $0x78] sm:$0xff]
        %v498 = vld [vmem:[%s345 + $0x80] sm:$0xff]
        %v499 = vld [vmem:[%s345 + $0x88] sm:$0xff]
        %v500 = vld [vmem:[%s345 + $0x90] sm:$0xff]
        %v501 = vld [vmem:[%s345 + $0x98] sm:$0xff]
        %v502 = vld [vmem:[%s345 + $0xa0] sm:$0xff]
        %v503 = vld [vmem:[%s345 + $0xa8] sm:$0xff]
        %v504 = vld [vmem:[%s345 + $0xb0] sm:$0xff]
        %v505 = vld [vmem:[%s345 + $0xb8] sm:$0xff]
        %v506 = vld [vmem:[%s345 + $0xc0] sm:$0xff]
        %v507 = vld [vmem:[%s345 + $0xc8] sm:$0xff]
        %v508 = vld [vmem:[%s345 + $0xd0] sm:$0xff]
        %v509 = vld [vmem:[%s345 + $0xd8] sm:$0xff]
        %v510 = vld [vmem:[%s345 + $0xe0] sm:$0xff]
        %v511 = vld [vmem:[%s345 + $0xe8] sm:$0xff]
        %v512 = vld [vmem:[%s345 + $0xf0] sm:$0xff]
        %v513 = vld [vmem:[%s345 + $0xf8] sm:$0xff]
        %v514 = vld [vmem:[%s3] sm:$0xff]
        %v515 = vld [vmem:[%s3 + $0x8] sm:$0xff]
        %v516 = vld [vmem:[%s3 + $0x10] sm:$0xff]
        %v517 = vld [vmem:[%s3 + $0x18] sm:$0xff]
        %v518 = vld [vmem:[%s3 + $0x20] sm:$0xff]
        %v519 = vld [vmem:[%s3 + $0x28] sm:$0xff]
        %v520 = vld [vmem:[%s3 + $0x30] sm:$0xff]
        %v521 = vld [vmem:[%s3 + $0x38] sm:$0xff]
        %v522 = vld [vmem:[%s3 + $0x40] sm:$0xff]
        %v523 = vld [vmem:[%s3 + $0x48] sm:$0xff]
        %v524 = vld [vmem:[%s3 + $0x50] sm:$0xff]
        %v525 = vld [vmem:[%s3 + $0x58] sm:$0xff]
        %v526 = vld [vmem:[%s3 + $0x60] sm:$0xff]
        %v527 = vld [vmem:[%s3 + $0x68] sm:$0xff]
        %v528 = vld [vmem:[%s3 + $0x70] sm:$0xff]
        %v529 = vld [vmem:[%s3 + $0x78] sm:$0xff]
        %530 = vmatprep.subr.mxu0 0.0
        %531 = vmatpush1.msra.mxu0 %v482
        %532 = vmatprep.subr.mxu0 0.0
        %533 = vmatpush1.msra.mxu0 %v483
        %534 = vmatprep.subr.mxu0 0.0
        %535 = vmatpush1.msra.mxu0 %v484
        %536 = vmatprep.subr.mxu0 0.0
        %537 = vmatpush1.msra.mxu0 %v485
        %538 = vmatprep.subr.mxu0 0.0
        %539 = vmatpush1.msra.mxu0 %v486
        %540 = vmatprep.subr.mxu0 0.0
        %541 = vmatpush1.msra.mxu0 %v487
        %542 = vmatprep.subr.mxu0 0.0
        %543 = vmatpush1.msra.mxu0 %v488
        %544 = vmatprep.subr.mxu0 0.0
        %545 = vmatpush1.msra.mxu0 %v489
        %546 = vmatprep.subr.mxu0 0.0
        %547 = vmatpush1.msra.mxu0 %v490
        %548 = vmatprep.subr.mxu0 0.0
        %549 = vmatpush1.msra.mxu0 %v491
        %550 = vmatprep.subr.mxu0 0.0
        %551 = vmatpush1.msra.mxu0 %v492
        %552 = vmatprep.subr.mxu0 0.0
        %553 = vmatpush1.msra.mxu0 %v493
        %554 = vmatprep.subr.mxu0 0.0
        %555 = vmatpush1.msra.mxu0 %v494
        %556 = vmatprep.subr.mxu0 0.0
        %557 = vmatpush1.msra.mxu0 %v495
        %558 = vmatprep.subr.mxu0 0.0
        %559 = vmatpush1.msra.mxu0 %v496
        %560 = vmatprep.subr.mxu0 0.0
        %561 = vmatpush1.msra.mxu0 %v497
        %562 = vmatprep.subr.mxu0 0.0
        %563 = vmatpush1.msra.mxu0 %v498
        %564 = vmatprep.subr.mxu0 0.0
        %565 = vmatpush1.msra.mxu0 %v499
        %566 = vmatprep.subr.mxu0 0.0
        %567 = vmatpush1.msra.mxu0 %v500
        %568 = vmatprep.subr.mxu0 0.0
        %569 = vmatpush1.msra.mxu0 %v501
        %570 = vmatprep.subr.mxu0 0.0
        %571 = vmatpush1.msra.mxu0 %v502
        %572 = vmatprep.subr.mxu0 0.0
        %573 = vmatpush1.msra.mxu0 %v503
        %574 = vmatprep.subr.mxu0 0.0
        %575 = vmatpush1.msra.mxu0 %v504
        %576 = vmatprep.subr.mxu0 0.0
        %577 = vmatpush1.msra.mxu0 %v505
        %578 = vmatprep.subr.mxu0 0.0
        %579 = vmatpush1.msra.mxu0 %v506
        %580 = vmatprep.subr.mxu0 0.0
        %581 = vmatpush1.msra.mxu0 %v507
        %582 = vmatprep.subr.mxu0 0.0
        %583 = vmatpush1.msra.mxu0 %v508
        %584 = vmatprep.subr.mxu0 0.0
        %585 = vmatpush1.msra.mxu0 %v509
        %586 = vmatprep.subr.mxu0 0.0
        %587 = vmatpush1.msra.mxu0 %v510
        %588 = vmatprep.subr.mxu0 0.0
        %589 = vmatpush1.msra.mxu0 %v511
        %590 = vmatprep.subr.mxu0 0.0
        %591 = vmatpush1.msra.mxu0 %v512
        %592 = vmatprep.subr.mxu0 0.0
        %593 = vmatpush1.msra.mxu0 %v513
        %594 = vmatprep.mubr.f32.mxu0 1.0
        %595 = vmatmul.mubr.f32.gmra.mrb[0].mxu0 1.0
        %v596 = vpop.f32.mrb[0].mxu0
        %v597 = vadd.f32 0.0, %v596
        %v598 = vpop.f32.mrb[0].mxu0
        %599 = vdwg.mxu0
        %600 = vmatprep.subr.mxu0 0.0
        %601 = vmatpush1.msra.mxu0 %v514
        %602 = vmatprep.subr.mxu0 0.0
        %603 = vmatpush1.msra.mxu0 %v515
        %604 = vmatprep.subr.mxu0 0.0
        %605 = vmatpush1.msra.mxu0 %v516
        %606 = vmatprep.subr.mxu0 0.0
        %607 = vmatpush1.msra.mxu0 %v517
        %608 = vmatprep.subr.mxu0 0.0
        %609 = vmatpush1.msra.mxu0 %v518
        %610 = vmatprep.subr.mxu0 0.0
        %611 = vmatpush1.msra.mxu0 %v519
        %612 = vmatprep.subr.mxu0 0.0
        %613 = vmatpush1.msra.mxu0 %v520
        %614 = vmatprep.subr.mxu0 0.0
        %615 = vmatpush1.msra.mxu0 %v521
        %616 = vmatprep.subr.mxu0 0.0
        %617 = vmatpush1.msra.mxu0 %v522
        %618 = vmatprep.subr.mxu0 0.0
        %619 = vmatpush1.msra.mxu0 %v523
        %620 = vmatprep.subr.mxu0 0.0
        %621 = vmatpush1.msra.mxu0 %v524
        %622 = vmatprep.subr.mxu0 0.0
        %623 = vmatpush1.msra.mxu0 %v525
        %624 = vmatprep.subr.mxu0 0.0
        %625 = vmatpush1.msra.mxu0 %v526
        %626 = vmatprep.subr.mxu0 0.0
        %627 = vmatpush1.msra.mxu0 %v527
        %628 = vmatprep.subr.mxu0 0.0
        %629 = vmatpush1.msra.mxu0 %v528
        %630 = vmatprep.subr.mxu0 0.0
        %631 = vmatpush1.msra.mxu0 %v529
        %632 = vmatprep.subr.mxu0 0.0
        %633 = vmatpush1.msra.mxu0 0.0
        %634 = vmatprep.subr.mxu0 0.0
        %635 = vmatpush1.msra.mxu0 0.0
        %636 = vmatprep.subr.mxu0 0.0
        %637 = vmatpush1.msra.mxu0 0.0
        %638 = vmatprep.subr.mxu0 0.0
        %639 = vmatpush1.msra.mxu0 0.0
        %640 = vmatprep.subr.mxu0 0.0
        %641 = vmatpush1.msra.mxu0 0.0
        %642 = vmatprep.subr.mxu0 0.0
        %643 = vmatpush1.msra.mxu0 0.0
        %644 = vmatprep.subr.mxu0 0.0
        %645 = vmatpush1.msra.mxu0 0.0
        %646 = vmatprep.subr.mxu0 0.0
        %647 = vmatpush1.msra.mxu0 0.0
        %648 = vmatprep.subr.mxu0 0.0
        %649 = vmatpush1.msra.mxu0 0.0
        %650 = vmatprep.subr.mxu0 0.0
        %651 = vmatpush1.msra.mxu0 0.0
        %652 = vmatprep.subr.mxu0 0.0
        %653 = vmatpush1.msra.mxu0 0.0
        %654 = vmatprep.subr.mxu0 0.0
        %655 = vmatpush1.msra.mxu0 0.0
        %656 = vmatprep.subr.mxu0 0.0
        %657 = vmatpush1.msra.mxu0 0.0
        %658 = vmatprep.subr.mxu0 0.0
        %659 = vmatpush1.msra.mxu0 0.0
        %660 = vmatprep.subr.mxu0 0.0
        %661 = vmatpush1.msra.mxu0 0.0
        %662 = vmatprep.subr.mxu0 0.0
        %663 = vmatpush1.msra.mxu0 0.0
        %664 = vmatprep.mubr.f32.mxu0 0.0
        %665 = vmatmul.mubr.f32.gmra.mrb[0].mxu0 %v597
        %v666 = vpop.f32.mrb[0].mxu0
        %v667 = vadd.f32 0.0, %v666
        %v668 = vpop.f32.mrb[0].mxu0
        %669 = vdwg.mxu0
        %v670 = vmul.f32 %v667, 0.001953125
        %v671 = vlaneseq
        %v672 = vshrl.u32 %v671, 7
        %v673 = vsub.s32 0, %v672
        %v674 = vrot.slane %v670, %v673
        %v675 = vsub.f32 %v482, %v674
        %v676 = vsub.f32 %v483, %v674
        %v677 = vsub.f32 %v484, %v674
        %v678 = vsub.f32 %v485, %v674
        %v679 = vsub.f32 %v486, %v674
        %v680 = vsub.f32 %v487, %v674
        %v681 = vsub.f32 %v488, %v674
        %v682 = vsub.f32 %v489, %v674
        %v683 = vsub.f32 %v490, %v674
        %v684 = vsub.f32 %v491, %v674
        %v685 = vsub.f32 %v492, %v674
        %v686 = vsub.f32 %v493, %v674
        %v687 = vsub.f32 %v494, %v674
        %v688 = vsub.f32 %v495, %v674
        %v689 = vsub.f32 %v496, %v674
        %v690 = vsub.f32 %v497, %v674
        %v691 = vsub.f32 %v498, %v674
        %v692 = vsub.f32 %v499, %v674
        %v693 = vsub.f32 %v500, %v674
        %v694 = vsub.f32 %v501, %v674
        %v695 = vsub.f32 %v502, %v674
        %v696 = vsub.f32 %v503, %v674
        %v697 = vsub.f32 %v504, %v674
        %v698 = vsub.f32 %v505, %v674
        %v699 = vsub.f32 %v506, %v674
        %v700 = vsub.f32 %v507, %v674
        %v701 = vsub.f32 %v508, %v674
        %v702 = vsub.f32 %v509, %v674
        %v703 = vsub.f32 %v510, %v674
        %v704 = vsub.f32 %v511, %v674
        %v705 = vsub.f32 %v512, %v674
        %v706 = vsub.f32 %v513, %v674
        %v707 = vmul.f32 %v675, %v675
        %v708 = vmul.f32 %v676, %v676
        %v709 = vmul.f32 %v677, %v677
        %v710 = vmul.f32 %v678, %v678
        %v711 = vmul.f32 %v679, %v679
        %v712 = vmul.f32 %v680, %v680
        %v713 = vmul.f32 %v681, %v681
        %v714 = vmul.f32 %v682, %v682
        %v715 = vmul.f32 %v683, %v683
        %v716 = vmul.f32 %v684, %v684
        %v717 = vmul.f32 %v685, %v685
        %v718 = vmul.f32 %v686, %v686
        %v719 = vmul.f32 %v687, %v687
        %v720 = vmul.f32 %v688, %v688
        %v721 = vmul.f32 %v689, %v689
        %v722 = vmul.f32 %v690, %v690
        %v723 = vmul.f32 %v691, %v691
        %v724 = vmul.f32 %v692, %v692
        %v725 = vmul.f32 %v693, %v693
        %v726 = vmul.f32 %v694, %v694
        %v727 = vmul.f32 %v695, %v695
        %v728 = vmul.f32 %v696, %v696
        %v729 = vmul.f32 %v697, %v697
        %v730 = vmul.f32 %v698, %v698
        %v731 = vmul.f32 %v699, %v699
        %v732 = vmul.f32 %v700, %v700
        %v733 = vmul.f32 %v701, %v701
        %v734 = vmul.f32 %v702, %v702
        %v735 = vmul.f32 %v703, %v703
        %v736 = vmul.f32 %v704, %v704
        %v737 = vmul.f32 %v705, %v705
        %v738 = vmul.f32 %v706, %v706
        %739 = vmatprep.subr.mxu0 0.0
        %740 = vmatpush1.msra.mxu0 %v707
        %741 = vmatprep.subr.mxu0 0.0
        %742 = vmatpush1.msra.mxu0 %v708
        %743 = vmatprep.subr.mxu0 0.0
        %744 = vmatpush1.msra.mxu0 %v709
        %745 = vmatprep.subr.mxu0 0.0
        %746 = vmatpush1.msra.mxu0 %v710
        %747 = vmatprep.subr.mxu0 0.0
        %748 = vmatpush1.msra.mxu0 %v711
        %749 = vmatprep.subr.mxu0 0.0
        %750 = vmatpush1.msra.mxu0 %v712
        %751 = vmatprep.subr.mxu0 0.0
        %752 = vmatpush1.msra.mxu0 %v713
        %753 = vmatprep.subr.mxu0 0.0
        %754 = vmatpush1.msra.mxu0 %v714
        %755 = vmatprep.subr.mxu0 0.0
        %756 = vmatpush1.msra.mxu0 %v715
        %757 = vmatprep.subr.mxu0 0.0
        %758 = vmatpush1.msra.mxu0 %v716
        %759 = vmatprep.subr.mxu0 0.0
        %760 = vmatpush1.msra.mxu0 %v717
        %761 = vmatprep.subr.mxu0 0.0
        %762 = vmatpush1.msra.mxu0 %v718
        %763 = vmatprep.subr.mxu0 0.0
        %764 = vmatpush1.msra.mxu0 %v719
        %765 = vmatprep.subr.mxu0 0.0
        %766 = vmatpush1.msra.mxu0 %v720
        %767 = vmatprep.subr.mxu0 0.0
        %768 = vmatpush1.msra.mxu0 %v721
        %769 = vmatprep.subr.mxu0 0.0
        %770 = vmatpush1.msra.mxu0 %v722
        %771 = vmatprep.subr.mxu0 0.0
        %772 = vmatpush1.msra.mxu0 %v723
        %773 = vmatprep.subr.mxu0 0.0
        %774 = vmatpush1.msra.mxu0 %v724
        %775 = vmatprep.subr.mxu0 0.0
        %776 = vmatpush1.msra.mxu0 %v725
        %777 = vmatprep.subr.mxu0 0.0
        %778 = vmatpush1.msra.mxu0 %v726
        %779 = vmatprep.subr.mxu0 0.0
        %780 = vmatpush1.msra.mxu0 %v727
        %781 = vmatprep.subr.mxu0 0.0
        %782 = vmatpush1.msra.mxu0 %v728
        %783 = vmatprep.subr.mxu0 0.0
        %784 = vmatpush1.msra.mxu0 %v729
        %785 = vmatprep.subr.mxu0 0.0
        %786 = vmatpush1.msra.mxu0 %v730
        %787 = vmatprep.subr.mxu0 0.0
        %788 = vmatpush1.msra.mxu0 %v731
        %789 = vmatprep.subr.mxu0 0.0
        %790 = vmatpush1.msra.mxu0 %v732
        %791 = vmatprep.subr.mxu0 0.0
        %792 = vmatpush1.msra.mxu0 %v733
        %793 = vmatprep.subr.mxu0 0.0
        %794 = vmatpush1.msra.mxu0 %v734
        %795 = vmatprep.subr.mxu0 0.0
        %796 = vmatpush1.msra.mxu0 %v735
        %797 = vmatprep.subr.mxu0 0.0
        %798 = vmatpush1.msra.mxu0 %v736
        %799 = vmatprep.subr.mxu0 0.0
        %800 = vmatpush1.msra.mxu0 %v737
        %801 = vmatprep.subr.mxu0 0.0
        %802 = vmatpush1.msra.mxu0 %v738
        %803 = vmatprep.mubr.f32.mxu0 1.0
        %804 = vmatmul.mubr.f32.gmra.mrb[0].mxu0 1.0
        %v805 = vpop.f32.mrb[0].mxu0
        %v806 = vadd.f32 0.0, %v805
        %v807 = vpop.f32.mrb[0].mxu0
        %808 = vdwg.mxu0
        %809 = vmatprep.subr.mxu0 0.0
        %810 = vmatpush1.msra.mxu0 %v514
        %811 = vmatprep.subr.mxu0 0.0
        %812 = vmatpush1.msra.mxu0 %v515
        %813 = vmatprep.subr.mxu0 0.0
        %814 = vmatpush1.msra.mxu0 %v516
        %815 = vmatprep.subr.mxu0 0.0
        %816 = vmatpush1.msra.mxu0 %v517
        %817 = vmatprep.subr.mxu0 0.0
        %818 = vmatpush1.msra.mxu0 %v518
        %819 = vmatprep.subr.mxu0 0.0
        %820 = vmatpush1.msra.mxu0 %v519
        %821 = vmatprep.subr.mxu0 0.0
        %822 = vmatpush1.msra.mxu0 %v520
        %823 = vmatprep.subr.mxu0 0.0
        %824 = vmatpush1.msra.mxu0 %v521
        %825 = vmatprep.subr.mxu0 0.0
        %826 = vmatpush1.msra.mxu0 %v522
        %827 = vmatprep.subr.mxu0 0.0
        %828 = vmatpush1.msra.mxu0 %v523
        %829 = vmatprep.subr.mxu0 0.0
        %830 = vmatpush1.msra.mxu0 %v524
        %831 = vmatprep.subr.mxu0 0.0
        %832 = vmatpush1.msra.mxu0 %v525
        %833 = vmatprep.subr.mxu0 0.0
        %834 = vmatpush1.msra.mxu0 %v526
        %835 = vmatprep.subr.mxu0 0.0
        %836 = vmatpush1.msra.mxu0 %v527
        %837 = vmatprep.subr.mxu0 0.0
        %838 = vmatpush1.msra.mxu0 %v528
        %839 = vmatprep.subr.mxu0 0.0
        %840 = vmatpush1.msra.mxu0 %v529
        %841 = vmatprep.subr.mxu0 0.0
        %842 = vmatpush1.msra.mxu0 0.0
        %843 = vmatprep.subr.mxu0 0.0
        %844 = vmatpush1.msra.mxu0 0.0
        %845 = vmatprep.subr.mxu0 0.0
        %846 = vmatpush1.msra.mxu0 0.0
        %847 = vmatprep.subr.mxu0 0.0
        %848 = vmatpush1.msra.mxu0 0.0
        %849 = vmatprep.subr.mxu0 0.0
        %850 = vmatpush1.msra.mxu0 0.0
        %851 = vmatprep.subr.mxu0 0.0
        %852 = vmatpush1.msra.mxu0 0.0
        %853 = vmatprep.subr.mxu0 0.0
        %854 = vmatpush1.msra.mxu0 0.0
        %855 = vmatprep.subr.mxu0 0.0
        %856 = vmatpush1.msra.mxu0 0.0
        %857 = vmatprep.subr.mxu0 0.0
        %858 = vmatpush1.msra.mxu0 0.0
        %859 = vmatprep.subr.mxu0 0.0
        %860 = vmatpush1.msra.mxu0 0.0
        %861 = vmatprep.subr.mxu0 0.0
        %862 = vmatpush1.msra.mxu0 0.0
        %863 = vmatprep.subr.mxu0 0.0
        %864 = vmatpush1.msra.mxu0 0.0
        %865 = vmatprep.subr.mxu0 0.0
        %866 = vmatpush1.msra.mxu0 0.0
        %867 = vmatprep.subr.mxu0 0.0
        %868 = vmatpush1.msra.mxu0 0.0
        %869 = vmatprep.subr.mxu0 0.0
        %870 = vmatpush1.msra.mxu0 0.0
        %871 = vmatprep.subr.mxu0 0.0
        %872 = vmatpush1.msra.mxu0 0.0
        %873 = vmatprep.mubr.f32.mxu0 0.0
        %874 = vmatmul.mubr.f32.gmra.mrb[0].mxu0 %v806
        %v875 = vpop.f32.mrb[0].mxu0
        %v876 = vadd.f32 0.0, %v875
        %v877 = vpop.f32.mrb[0].mxu0
        %878 = vdwg.mxu0
        %v879 = vmul.f32 %v876, 0.001953125
        %v880 = vadd.f32 %v879, 1e-05
        %v881 = vrsqrt.pop %v880
        %v882 = vld [vmem:[%s1] sm:$0x1]
        %v883 = vmul.f32 %v881, %v882
        %v884 = vlaneseq
        %v885 = vshrl.u32 %v884, 7
        %v886 = vsub.s32 0, %v885
        %v887 = vrot.slane %v883, %v886
        %v888 = vmul.f32 %v675, %v887
        %v889 = vmul.f32 %v676, %v887
        %v890 = vmul.f32 %v677, %v887
        %v891 = vmul.f32 %v678, %v887
        %v892 = vmul.f32 %v679, %v887
        %v893 = vmul.f32 %v680, %v887
        %v894 = vmul.f32 %v681, %v887
        %v895 = vmul.f32 %v682, %v887
        %v896 = vmul.f32 %v683, %v887
        %v897 = vmul.f32 %v684, %v887
        %v898 = vmul.f32 %v685, %v887
        %v899 = vmul.f32 %v686, %v887
        %v900 = vmul.f32 %v687, %v887
        %v901 = vmul.f32 %v688, %v887
        %v902 = vmul.f32 %v689, %v887
        %v903 = vmul.f32 %v690, %v887
        %v904 = vmul.f32 %v691, %v887
        %v905 = vmul.f32 %v692, %v887
        %v906 = vmul.f32 %v693, %v887
        %v907 = vmul.f32 %v694, %v887
        %v908 = vmul.f32 %v695, %v887
        %v909 = vmul.f32 %v696, %v887
        %v910 = vmul.f32 %v697, %v887
        %v911 = vmul.f32 %v698, %v887
        %v912 = vmul.f32 %v699, %v887
        %v913 = vmul.f32 %v700, %v887
        %v914 = vmul.f32 %v701, %v887
        %v915 = vmul.f32 %v702, %v887
        %v916 = vmul.f32 %v703, %v887
        %v917 = vmul.f32 %v704, %v887
        %v918 = vmul.f32 %v705, %v887
        %v919 = vmul.f32 %v706, %v887
        %v920 = vld [vmem:[%s2] sm:$0x1]
        %v922 = vlaneseq
        %v923 = vshrl.u32 %v922, 7
        %v924 = vsub.s32 0, %v923
        %v925 = vrot.slane %v920, %v924
        %v927 = vadd.f32 %v888, %v925
        %v928 = vadd.f32 %v889, %v925
        %v929 = vadd.f32 %v890, %v925
        %v930 = vadd.f32 %v891, %v925
        %v931 = vadd.f32 %v892, %v925
        %v932 = vadd.f32 %v893, %v925
        %v933 = vadd.f32 %v894, %v925
        %v934 = vadd.f32 %v895, %v925
        %v935 = vadd.f32 %v896, %v925
        %v936 = vadd.f32 %v897, %v925
        %v937 = vadd.f32 %v898, %v925
        %v938 = vadd.f32 %v899, %v925
        %v939 = vadd.f32 %v900, %v925
        %v940 = vadd.f32 %v901, %v925
        %v941 = vadd.f32 %v902, %v925
        %v942 = vadd.f32 %v903, %v925
        %v943 = vadd.f32 %v904, %v925
        %v944 = vadd.f32 %v905, %v925
        %v945 = vadd.f32 %v906, %v925
        %v946 = vadd.f32 %v907, %v925
        %v947 = vadd.f32 %v908, %v925
        %v948 = vadd.f32 %v909, %v925
        %v949 = vadd.f32 %v910, %v925
        %v950 = vadd.f32 %v911, %v925
        %v951 = vadd.f32 %v912, %v925
        %v952 = vadd.f32 %v913, %v925
        %v953 = vadd.f32 %v914, %v925
        %v954 = vadd.f32 %v915, %v925
        %v955 = vadd.f32 %v916, %v925
        %v956 = vadd.f32 %v917, %v925
        %v957 = vadd.f32 %v918, %v925
        %v958 = vadd.f32 %v919, %v925
        %v959 = vmax.f32 %v927, 0.0
        %v960 = vmax.f32 %v928, 0.0
        %v961 = vmax.f32 %v929, 0.0
        %v962 = vmax.f32 %v930, 0.0
        %v963 = vmax.f32 %v931, 0.0
        %v964 = vmax.f32 %v932, 0.0
        %v965 = vmax.f32 %v933, 0.0
        %v966 = vmax.f32 %v934, 0.0
        %v967 = vmax.f32 %v935, 0.0
        %v968 = vmax.f32 %v936, 0.0
        %v969 = vmax.f32 %v937, 0.0
        %v970 = vmax.f32 %v938, 0.0
        %v971 = vmax.f32 %v939, 0.0
        %v972 = vmax.f32 %v940, 0.0
        %v973 = vmax.f32 %v941, 0.0
        %v974 = vmax.f32 %v942, 0.0
        %v975 = vmax.f32 %v943, 0.0
        %v976 = vmax.f32 %v944, 0.0
        %v977 = vmax.f32 %v945, 0.0
        %v978 = vmax.f32 %v946, 0.0
        %v979 = vmax.f32 %v947, 0.0
        %v980 = vmax.f32 %v948, 0.0
        %v981 = vmax.f32 %v949, 0.0
        %v982 = vmax.f32 %v950, 0.0
        %v983 = vmax.f32 %v951, 0.0
        %v984 = vmax.f32 %v952, 0.0
        %v985 = vmax.f32 %v953, 0.0
        %v986 = vmax.f32 %v954, 0.0
        %v987 = vmax.f32 %v955, 0.0
        %v988 = vmax.f32 %v956, 0.0
        %v989 = vmax.f32 %v957, 0.0
        %v990 = vmax.f32 %v958, 0.0
        %v991 = vpack.c.bf16 %v960, %v959
        %v992 = vpack.c.bf16 %v962, %v961
        %v993 = vpack.c.bf16 %v964, %v963
        %v994 = vpack.c.bf16 %v966, %v965
        %v995 = vpack.c.bf16 %v968, %v967
        %v996 = vpack.c.bf16 %v970, %v969
        %v997 = vpack.c.bf16 %v972, %v971
        %v998 = vpack.c.bf16 %v974, %v973
        %v999 = vpack.c.bf16 %v976, %v975
        %v1000 = vpack.c.bf16 %v978, %v977
        %v1001 = vpack.c.bf16 %v980, %v979
        %v1002 = vpack.c.bf16 %v982, %v981
        %v1003 = vpack.c.bf16 %v984, %v983
        %v1004 = vpack.c.bf16 %v986, %v985
        %v1005 = vpack.c.bf16 %v988, %v987
        %v1006 = vpack.c.bf16 %v990, %v989
        %1007 = vst [vmem:[#allocation3 + $0x20] sm:$0xff] %v991
        %1008 = vst [vmem:[#allocation3 + $0x38] sm:$0xff] %v992
        %1009 = vst [vmem:[#allocation3 + $0x50] sm:$0xff] %v993
        %1010 = vst [vmem:[#allocation3 + $0x68] sm:$0xff] %v994
        %1011 = vst [vmem:[#allocation3 + $0x80] sm:$0xff] %v995
        %1012 = vst [vmem:[#allocation3 + $0x98] sm:$0xff] %v996
        %1013 = vst [vmem:[#allocation3 + $0xb0] sm:$0xff] %v997
        %1014 = vst [vmem:[#allocation3 + $0xc8] sm:$0xff] %v998
        %1015 = vst [vmem:[#allocation3 + $0xe0] sm:$0xff] %v999
        %1016 = vst [vmem:[#allocation3 + $0xf8] sm:$0xff] %v1000
        %1017 = vst [vmem:[#allocation3 + $0x110] sm:$0xff] %v1001
        %1018 = vst [vmem:[#allocation3 + $0x128] sm:$0xff] %v1002
        %1019 = vst [vmem:[#allocation3 + $0x140] sm:$0xff] %v1003
        %1020 = vst [vmem:[#allocation3 + $0x158] sm:$0xff] %v1004
        %1021 = vst [vmem:[#allocation3 + $0x170] sm:$0xff] %v1005
        %1022 = vst [vmem:[#allocation3 + $0x188] sm:$0xff] %v1006
        %1023 = vst [vmem:[#allocation2 + $0x8] sm:$0xff] %v959
        %1024 = vst [vmem:[#allocation2 + $0x10] sm:$0xff] %v960
        %1025 = vst [vmem:[#allocation2 + $0x18] sm:$0xff] %v961
        %1026 = vst [vmem:[#allocation2 + $0x20] sm:$0xff] %v962
        %1027 = vst [vmem:[#allocation2 + $0x28] sm:$0xff] %v963
        %1028 = vst [vmem:[#allocation2 + $0x30] sm:$0xff] %v964
        %1029 = vst [vmem:[#allocation2 + $0x38] sm:$0xff] %v965
        %1030 = vst [vmem:[#allocation2 + $0x40] sm:$0xff] %v966
        %1031 = vst [vmem:[#allocation2 + $0x48] sm:$0xff] %v967
        %1032 = vst [vmem:[#allocation2 + $0x50] sm:$0xff] %v968
        %1033 = vst [vmem:[#allocation2 + $0x58] sm:$0xff] %v969
        %1034 = vst [vmem:[#allocation2 + $0x60] sm:$0xff] %v970
        %1035 = vst [vmem:[#allocation2 + $0x68] sm:$0xff] %v971
        %1036 = vst [vmem:[#allocation2 + $0x70] sm:$0xff] %v972
        %1037 = vst [vmem:[#allocation2 + $0x78] sm:$0xff] %v973
        %1038 = vst [vmem:[#allocation2 + $0x80] sm:$0xff] %v974
        %1039 = vst [vmem:[#allocation2 + $0x88] sm:$0xff] %v975
        %1040 = vst [vmem:[#allocation2 + $0x90] sm:$0xff] %v976
        %1041 = vst [vmem:[#allocation2 + $0x98] sm:$0xff] %v977
        %1042 = vst [vmem:[#allocation2 + $0xa0] sm:$0xff] %v978
        %1043 = vst [vmem:[#allocation2 + $0xa8] sm:$0xff] %v979
        %1044 = vst [vmem:[#allocation2 + $0xb0] sm:$0xff] %v980
        %1045 = vst [vmem:[#allocation2 + $0xb8] sm:$0xff] %v981
        %1046 = vst [vmem:[#allocation2 + $0xc0] sm:$0xff] %v982
        %1047 = vst [vmem:[#allocation2 + $0xc8] sm:$0xff] %v983
        %1048 = vst [vmem:[#allocation2 + $0xd0] sm:$0xff] %v984
        %1049 = vst [vmem:[#allocation2 + $0xd8] sm:$0xff] %v985
        %1050 = vst [vmem:[#allocation2 + $0xe0] sm:$0xff] %v986
        %1051 = vst [vmem:[#allocation2 + $0xe8] sm:$0xff] %v987
        %1052 = vst [vmem:[#allocation2 + $0xf0] sm:$0xff] %v988
        %1053 = vst [vmem:[#allocation2 + $0xf8] sm:$0xff] %v989
        %1054 = vst [vmem:[#allocation2 + $0x100] sm:$0xff] %v990
        %v1055 = vld [vmem:[#allocation2 + $0x7] sm:$0xff]
        %v1056 = vld [vmem:[#allocation2 + $0xf] sm:$0xff]
        %v1057 = vld [vmem:[#allocation2 + $0x17] sm:$0xff]
        %v1058 = vld [vmem:[#allocation2 + $0x1f] sm:$0xff]
        %v1059 = vld [vmem:[#allocation2 + $0x27] sm:$0xff]
        %v1060 = vld [vmem:[#allocation2 + $0x2f] sm:$0xff]
        %v1061 = vld [vmem:[#allocation2 + $0x37] sm:$0xff]
        %v1062 = vld [vmem:[#allocation2 + $0x3f] sm:$0xff]
        %v1063 = vld [vmem:[#allocation2 + $0x47] sm:$0xff]
        %v1064 = vld [vmem:[#allocation2 + $0x4f] sm:$0xff]
        %v1065 = vld [vmem:[#allocation2 + $0x57] sm:$0xff]
        %v1066 = vld [vmem:[#allocation2 + $0x5f] sm:$0xff]
        %v1067 = vld [vmem:[#allocation2 + $0x67] sm:$0xff]
        %v1068 = vld [vmem:[#allocation2 + $0x6f] sm:$0xff]
        %v1069 = vld [vmem:[#allocation2 + $0x77] sm:$0xff]
        %v1070 = vld [vmem:[#allocation2 + $0x7f] sm:$0xff]
        %v1071 = vld [vmem:[#allocation2 + $0x87] sm:$0xff]
        %v1072 = vld [vmem:[#allocation2 + $0x8f] sm:$0xff]
        %v1073 = vld [vmem:[#allocation2 + $0x97] sm:$0xff]
        %v1074 = vld [vmem:[#allocation2 + $0x9f] sm:$0xff]
        %v1075 = vld [vmem:[#allocation2 + $0xa7] sm:$0xff]
        %v1076 = vld [vmem:[#allocation2 + $0xaf] sm:$0xff]
        %v1077 = vld [vmem:[#allocation2 + $0xb7] sm:$0xff]
        %v1078 = vld [vmem:[#allocation2 + $0xbf] sm:$0xff]
        %v1079 = vld [vmem:[#allocation2 + $0xc7] sm:$0xff]
        %v1080 = vld [vmem:[#allocation2 + $0xcf] sm:$0xff]
        %v1081 = vld [vmem:[#allocation2 + $0xd7] sm:$0xff]
        %v1082 = vld [vmem:[#allocation2 + $0xdf] sm:$0xff]
        %v1083 = vld [vmem:[#allocation2 + $0xe7] sm:$0xff]
        %v1084 = vld [vmem:[#allocation2 + $0xef] sm:$0xff]
        %v1085 = vld [vmem:[#allocation2 + $0xf7] sm:$0xff]
        %v1086 = vld [vmem:[#allocation2 + $0xff] sm:$0xff]
        %v1087 = vld [vmem:[#allocation2 + $0x9] sm:$0xff]
        %v1088 = vld [vmem:[#allocation2 + $0x11] sm:$0xff]
        %v1089 = vld [vmem:[#allocation2 + $0x19] sm:$0xff]
        %v1090 = vld [vmem:[#allocation2 + $0x21] sm:$0xff]
        %v1091 = vld [vmem:[#allocation2 + $0x29] sm:$0xff]
        %v1092 = vld [vmem:[#allocation2 + $0x31] sm:$0xff]
        %v1093 = vld [vmem:[#allocation2 + $0x39] sm:$0xff]
        %v1094 = vld [vmem:[#allocation2 + $0x41] sm:$0xff]
        %v1095 = vld [vmem:[#allocation2 + $0x49] sm:$0xff]
        %v1096 = vld [vmem:[#allocation2 + $0x51] sm:$0xff]
        %v1097 = vld [vmem:[#allocation2 + $0x59] sm:$0xff]
        %v1098 = vld [vmem:[#allocation2 + $0x61] sm:$0xff]
        %v1099 = vld [vmem:[#allocation2 + $0x69] sm:$0xff]
        %v1100 = vld [vmem:[#allocation2 + $0x71] sm:$0xff]
        %v1101 = vld [vmem:[#allocation2 + $0x79] sm:$0xff]
        %v1102 = vld [vmem:[#allocation2 + $0x81] sm:$0xff]
        %v1103 = vld [vmem:[#allocation2 + $0x89] sm:$0xff]
        %v1104 = vld [vmem:[#allocation2 + $0x91] sm:$0xff]
        %v1105 = vld [vmem:[#allocation2 + $0x99] sm:$0xff]
        %v1106 = vld [vmem:[#allocation2 + $0xa1] sm:$0xff]
        %v1107 = vld [vmem:[#allocation2 + $0xa9] sm:$0xff]
        %v1108 = vld [vmem:[#allocation2 + $0xb1] sm:$0xff]
        %v1109 = vld [vmem:[#allocation2 + $0xb9] sm:$0xff]
        %v1110 = vld [vmem:[#allocation2 + $0xc1] sm:$0xff]
        %v1111 = vld [vmem:[#allocation2 + $0xc9] sm:$0xff]
        %v1112 = vld [vmem:[#allocation2 + $0xd1] sm:$0xff]
        %v1113 = vld [vmem:[#allocation2 + $0xd9] sm:$0xff]
        %v1114 = vld [vmem:[#allocation2 + $0xe1] sm:$0xff]
        %v1115 = vld [vmem:[#allocation2 + $0xe9] sm:$0xff]
        %v1116 = vld [vmem:[#allocation2 + $0xf1] sm:$0xff]
        %v1117 = vld [vmem:[#allocation2 + $0xf9] sm:$0xff]
        %v1118 = vld [vmem:[#allocation2 + $0x101] sm:$0xff]
        %v1119 = vsel %vm418, 1, 0
        %v1120 = vsel %vm419, 1, 0
        %v1121 = vsel %vm420, 1, 0
        %v1122 = vsel %vm421, 1, 0
        %v1123 = vsel %vm422, 1, 0
        %v1124 = vsel %vm423, 1, 0
        %v1125 = vsel %vm424, 1, 0
        %v1126 = vsel %vm425, 1, 0
        %v1127 = vsel %vm426, 1, 0
        %v1128 = vsel %vm427, 1, 0
        %v1129 = vsel %vm428, 1, 0
        %v1130 = vsel %vm429, 1, 0
        %v1131 = vsel %vm430, 1, 0
        %v1132 = vsel %vm431, 1, 0
        %v1133 = vsel %vm432, 1, 0
        %v1134 = vsel %vm433, 1, 0
        %v1135 = vsel %vm434, 1, 0
        %v1136 = vsel %vm435, 1, 0
        %v1137 = vsel %vm436, 1, 0
        %v1138 = vsel %vm437, 1, 0
        %v1139 = vsel %vm438, 1, 0
        %v1140 = vsel %vm439, 1, 0
        %v1141 = vsel %vm440, 1, 0
        %v1142 = vsel %vm441, 1, 0
        %v1143 = vsel %vm442, 1, 0
        %v1144 = vsel %vm443, 1, 0
        %v1145 = vsel %vm444, 1, 0
        %v1146 = vsel %vm445, 1, 0
        %v1147 = vsel %vm446, 1, 0
        %v1148 = vsel %vm447, 1, 0
        %v1149 = vsel %vm448, 1, 0
        %v1150 = vsel %vm449, 1, 0
        %vm1151 = vcmp.eq.s32.totalorder %v1119, 1
        %vm1152 = vcmp.eq.s32.totalorder %v1120, 1
        %vm1153 = vcmp.eq.s32.totalorder %v1121, 1
        %vm1154 = vcmp.eq.s32.totalorder %v1122, 1
        %vm1155 = vcmp.eq.s32.totalorder %v1123, 1
        %vm1156 = vcmp.eq.s32.totalorder %v1124, 1
        %vm1157 = vcmp.eq.s32.totalorder %v1125, 1
        %vm1158 = vcmp.eq.s32.totalorder %v1126, 1
        %vm1159 = vcmp.eq.s32.totalorder %v1127, 1
        %vm1160 = vcmp.eq.s32.totalorder %v1128, 1
        %vm1161 = vcmp.eq.s32.totalorder %v1129, 1
        %vm1162 = vcmp.eq.s32.totalorder %v1130, 1
        %vm1163 = vcmp.eq.s32.totalorder %v1131, 1
        %vm1164 = vcmp.eq.s32.totalorder %v1132, 1
        %vm1165 = vcmp.eq.s32.totalorder %v1133, 1
        %vm1166 = vcmp.eq.s32.totalorder %v1134, 1
        %vm1167 = vcmp.eq.s32.totalorder %v1135, 1
        %vm1168 = vcmp.eq.s32.totalorder %v1136, 1
        %vm1169 = vcmp.eq.s32.totalorder %v1137, 1
        %vm1170 = vcmp.eq.s32.totalorder %v1138, 1
        %vm1171 = vcmp.eq.s32.totalorder %v1139, 1
        %vm1172 = vcmp.eq.s32.totalorder %v1140, 1
        %vm1173 = vcmp.eq.s32.totalorder %v1141, 1
        %vm1174 = vcmp.eq.s32.totalorder %v1142, 1
        %vm1175 = vcmp.eq.s32.totalorder %v1143, 1
        %vm1176 = vcmp.eq.s32.totalorder %v1144, 1
        %vm1177 = vcmp.eq.s32.totalorder %v1145, 1
        %vm1178 = vcmp.eq.s32.totalorder %v1146, 1
        %vm1179 = vcmp.eq.s32.totalorder %v1147, 1
        %vm1180 = vcmp.eq.s32.totalorder %v1148, 1
        %vm1181 = vcmp.eq.s32.totalorder %v1149, 1
        %vm1182 = vcmp.eq.s32.totalorder %v1150, 1
        %v1183 = vsel %vm1151, %v1055, 0.0
        %v1184 = vsel %vm1152, %v1056, 0.0
        %v1185 = vsel %vm1153, %v1057, 0.0
        %v1186 = vsel %vm1154, %v1058, 0.0
        %v1187 = vsel %vm1155, %v1059, 0.0
        %v1188 = vsel %vm1156, %v1060, 0.0
        %v1189 = vsel %vm1157, %v1061, 0.0
        %v1190 = vsel %vm1158, %v1062, 0.0
        %v1191 = vsel %vm1159, %v1063, 0.0
        %v1192 = vsel %vm1160, %v1064, 0.0
        %v1193 = vsel %vm1161, %v1065, 0.0
        %v1194 = vsel %vm1162, %v1066, 0.0
        %v1195 = vsel %vm1163, %v1067, 0.0
        %v1196 = vsel %vm1164, %v1068, 0.0
        %v1197 = vsel %vm1165, %v1069, 0.0
        %v1198 = vsel %vm1166, %v1070, 0.0
        %v1199 = vsel %vm1167, %v1071, 0.0
        %v1200 = vsel %vm1168, %v1072, 0.0
        %v1201 = vsel %vm1169, %v1073, 0.0
        %v1202 = vsel %vm1170, %v1074, 0.0
        %v1203 = vsel %vm1171, %v1075, 0.0
        %v1204 = vsel %vm1172, %v1076, 0.0
        %v1205 = vsel %vm1173, %v1077, 0.0
        %v1206 = vsel %vm1174, %v1078, 0.0
        %v1207 = vsel %vm1175, %v1079, 0.0
        %v1208 = vsel %vm1176, %v1080, 0.0
        %v1209 = vsel %vm1177, %v1081, 0.0
        %v1210 = vsel %vm1178, %v1082, 0.0
        %v1211 = vsel %vm1179, %v1083, 0.0
        %v1212 = vsel %vm1180, %v1084, 0.0
        %v1213 = vsel %vm1181, %v1085, 0.0
        %v1214 = vsel %vm1182, %v1086, 0.0
        %v1215 = vpack.c.bf16 %v1184, %v1183
        %v1216 = vpack.c.bf16 %v1186, %v1185
        %v1217 = vpack.c.bf16 %v1188, %v1187
        %v1218 = vpack.c.bf16 %v1190, %v1189
        %v1219 = vpack.c.bf16 %v1192, %v1191
        %v1220 = vpack.c.bf16 %v1194, %v1193
        %v1221 = vpack.c.bf16 %v1196, %v1195
        %v1222 = vpack.c.bf16 %v1198, %v1197
        %v1223 = vpack.c.bf16 %v1200, %v1199
        %v1224 = vpack.c.bf16 %v1202, %v1201
        %v1225 = vpack.c.bf16 %v1204, %v1203
        %v1226 = vpack.c.bf16 %v1206, %v1205
        %v1227 = vpack.c.bf16 %v1208, %v1207
        %v1228 = vpack.c.bf16 %v1210, %v1209
        %v1229 = vpack.c.bf16 %v1212, %v1211
        %v1230 = vpack.c.bf16 %v1214, %v1213
        %1231 = vst [vmem:[#allocation3 + $0x18] sm:$0xff] %v1215
        %1232 = vst [vmem:[#allocation3 + $0x30] sm:$0xff] %v1216
        %1233 = vst [vmem:[#allocation3 + $0x48] sm:$0xff] %v1217
        %1234 = vst [vmem:[#allocation3 + $0x60] sm:$0xff] %v1218
        %1235 = vst [vmem:[#allocation3 + $0x78] sm:$0xff] %v1219
        %1236 = vst [vmem:[#allocation3 + $0x90] sm:$0xff] %v1220
        %1237 = vst [vmem:[#allocation3 + $0xa8] sm:$0xff] %v1221
        %1238 = vst [vmem:[#allocation3 + $0xc0] sm:$0xff] %v1222
        %1239 = vst [vmem:[#allocation3 + $0xd8] sm:$0xff] %v1223
        %1240 = vst [vmem:[#allocation3 + $0xf0] sm:$0xff] %v1224
        %1241 = vst [vmem:[#allocation3 + $0x108] sm:$0xff] %v1225
        %1242 = vst [vmem:[#allocation3 + $0x120] sm:$0xff] %v1226
        %1243 = vst [vmem:[#allocation3 + $0x138] sm:$0xff] %v1227
        %1244 = vst [vmem:[#allocation3 + $0x150] sm:$0xff] %v1228
        %1245 = vst [vmem:[#allocation3 + $0x168] sm:$0xff] %v1229
        %1246 = vst [vmem:[#allocation3 + $0x180] sm:$0xff] %v1230
        %v1247 = vsel %vm450, 1, 0
        %v1248 = vsel %vm451, 1, 0
        %v1249 = vsel %vm452, 1, 0
        %v1250 = vsel %vm453, 1, 0
        %v1251 = vsel %vm454, 1, 0
        %v1252 = vsel %vm455, 1, 0
        %v1253 = vsel %vm456, 1, 0
        %v1254 = vsel %vm457, 1, 0
        %v1255 = vsel %vm458, 1, 0
        %v1256 = vsel %vm459, 1, 0
        %v1257 = vsel %vm460, 1, 0
        %v1258 = vsel %vm461, 1, 0
        %v1259 = vsel %vm462, 1, 0
        %v1260 = vsel %vm463, 1, 0
        %v1261 = vsel %vm464, 1, 0
        %v1262 = vsel %vm465, 1, 0
        %v1263 = vsel %vm466, 1, 0
        %v1264 = vsel %vm467, 1, 0
        %v1265 = vsel %vm468, 1, 0
        %v1266 = vsel %vm469, 1, 0
        %v1267 = vsel %vm470, 1, 0
        %v1268 = vsel %vm471, 1, 0
        %v1269 = vsel %vm472, 1, 0
        %v1270 = vsel %vm473, 1, 0
        %v1271 = vsel %vm474, 1, 0
        %v1272 = vsel %vm475, 1, 0
        %v1273 = vsel %vm476, 1, 0
        %v1274 = vsel %vm477, 1, 0
        %v1275 = vsel %vm478, 1, 0
        %v1276 = vsel %vm479, 1, 0
        %v1277 = vsel %vm480, 1, 0
        %v1278 = vsel %vm481, 1, 0
        %vm1279 = vcmp.eq.s32.totalorder %v1247, 1
        %vm1280 = vcmp.eq.s32.totalorder %v1248, 1
        %vm1281 = vcmp.eq.s32.totalorder %v1249, 1
        %vm1282 = vcmp.eq.s32.totalorder %v1250, 1
        %vm1283 = vcmp.eq.s32.totalorder %v1251, 1
        %vm1284 = vcmp.eq.s32.totalorder %v1252, 1
        %vm1285 = vcmp.eq.s32.totalorder %v1253, 1
        %vm1286 = vcmp.eq.s32.totalorder %v1254, 1
        %vm1287 = vcmp.eq.s32.totalorder %v1255, 1
        %vm1288 = vcmp.eq.s32.totalorder %v1256, 1
        %vm1289 = vcmp.eq.s32.totalorder %v1257, 1
        %vm1290 = vcmp.eq.s32.totalorder %v1258, 1
        %vm1291 = vcmp.eq.s32.totalorder %v1259, 1
        %vm1292 = vcmp.eq.s32.totalorder %v1260, 1
        %vm1293 = vcmp.eq.s32.totalorder %v1261, 1
        %vm1294 = vcmp.eq.s32.totalorder %v1262, 1
        %vm1295 = vcmp.eq.s32.totalorder %v1263, 1
        %vm1296 = vcmp.eq.s32.totalorder %v1264, 1
        %vm1297 = vcmp.eq.s32.totalorder %v1265, 1
        %vm1298 = vcmp.eq.s32.totalorder %v1266, 1
        %vm1299 = vcmp.eq.s32.totalorder %v1267, 1
        %vm1300 = vcmp.eq.s32.totalorder %v1268, 1
        %vm1301 = vcmp.eq.s32.totalorder %v1269, 1
        %vm1302 = vcmp.eq.s32.totalorder %v1270, 1
        %vm1303 = vcmp.eq.s32.totalorder %v1271, 1
        %vm1304 = vcmp.eq.s32.totalorder %v1272, 1
        %vm1305 = vcmp.eq.s32.totalorder %v1273, 1
        %vm1306 = vcmp.eq.s32.totalorder %v1274, 1
        %vm1307 = vcmp.eq.s32.totalorder %v1275, 1
        %vm1308 = vcmp.eq.s32.totalorder %v1276, 1
        %vm1309 = vcmp.eq.s32.totalorder %v1277, 1
        %vm1310 = vcmp.eq.s32.totalorder %v1278, 1
        %v1311 = vsel %vm1279, %v1087, 0.0
        %v1312 = vsel %vm1280, %v1088, 0.0
        %v1313 = vsel %vm1281, %v1089, 0.0
        %v1314 = vsel %vm1282, %v1090, 0.0
        %v1315 = vsel %vm1283, %v1091, 0.0
        %v1316 = vsel %vm1284, %v1092, 0.0
        %v1317 = vsel %vm1285, %v1093, 0.0
        %v1318 = vsel %vm1286, %v1094, 0.0
        %v1319 = vsel %vm1287, %v1095, 0.0
        %v1320 = vsel %vm1288, %v1096, 0.0
        %v1321 = vsel %vm1289, %v1097, 0.0
        %v1322 = vsel %vm1290, %v1098, 0.0
        %v1323 = vsel %vm1291, %v1099, 0.0
        %v1324 = vsel %vm1292, %v1100, 0.0
        %v1325 = vsel %vm1293, %v1101, 0.0
        %v1326 = vsel %vm1294, %v1102, 0.0
        %v1327 = vsel %vm1295, %v1103, 0.0
        %v1328 = vsel %vm1296, %v1104, 0.0
        %v1329 = vsel %vm1297, %v1105, 0.0
        %v1330 = vsel %vm1298, %v1106, 0.0
        %v1331 = vsel %vm1299, %v1107, 0.0
        %v1332 = vsel %vm1300, %v1108, 0.0
        %v1333 = vsel %vm1301, %v1109, 0.0
        %v1334 = vsel %vm1302, %v1110, 0.0
        %v1335 = vsel %vm1303, %v1111, 0.0
        %v1336 = vsel %vm1304, %v1112, 0.0
        %v1337 = vsel %vm1305, %v1113, 0.0
        %v1338 = vsel %vm1306, %v1114, 0.0
        %v1339 = vsel %vm1307, %v1115, 0.0
        %v1340 = vsel %vm1308, %v1116, 0.0
        %v1341 = vsel %vm1309, %v1117, 0.0
        %v1342 = vsel %vm1310, %v1118, 0.0
        %v1343 = vpack.c.bf16 %v1312, %v1311
        %v1344 = vpack.c.bf16 %v1314, %v1313
        %v1345 = vpack.c.bf16 %v1316, %v1315
        %v1346 = vpack.c.bf16 %v1318, %v1317
        %v1347 = vpack.c.bf16 %v1320, %v1319
        %v1348 = vpack.c.bf16 %v1322, %v1321
        %v1349 = vpack.c.bf16 %v1324, %v1323
        %v1350 = vpack.c.bf16 %v1326, %v1325
        %v1351 = vpack.c.bf16 %v1328, %v1327
        %v1352 = vpack.c.bf16 %v1330, %v1329
        %v1353 = vpack.c.bf16 %v1332, %v1331
        %v1354 = vpack.c.bf16 %v1334, %v1333
        %v1355 = vpack.c.bf16 %v1336, %v1335
        %v1356 = vpack.c.bf16 %v1338, %v1337
        %v1357 = vpack.c.bf16 %v1340, %v1339
        %v1358 = vpack.c.bf16 %v1342, %v1341
        %1359 = vst [vmem:[#allocation3 + $0x28] sm:$0xff] %v1343
        %1360 = vst [vmem:[#allocation3 + $0x40] sm:$0xff] %v1344
        %1361 = vst [vmem:[#allocation3 + $0x58] sm:$0xff] %v1345
        %1362 = vst [vmem:[#allocation3 + $0x70] sm:$0xff] %v1346
        %1363 = vst [vmem:[#allocation3 + $0x88] sm:$0xff] %v1347
        %1364 = vst [vmem:[#allocation3 + $0xa0] sm:$0xff] %v1348
        %1365 = vst [vmem:[#allocation3 + $0xb8] sm:$0xff] %v1349
        %1366 = vst [vmem:[#allocation3 + $0xd0] sm:$0xff] %v1350
        %1367 = vst [vmem:[#allocation3 + $0xe8] sm:$0xff] %v1351
        %1368 = vst [vmem:[#allocation3 + $0x100] sm:$0xff] %v1352
        %1369 = vst [vmem:[#allocation3 + $0x118] sm:$0xff] %v1353
        %1370 = vst [vmem:[#allocation3 + $0x130] sm:$0xff] %v1354
        %1371 = vst [vmem:[#allocation3 + $0x148] sm:$0xff] %v1355
        %1372 = vst [vmem:[#allocation3 + $0x160] sm:$0xff] %v1356
        %1373 = vst [vmem:[#allocation3 + $0x178] sm:$0xff] %v1357
        %1374 = vst [vmem:[#allocation3 + $0x190] sm:$0xff] %v1358
        %v1375 = vld [vmem:[#allocation3] sm:$0xff]
        %v1376 = vld [vmem:[#allocation3 + $0x8] sm:$0xff]
        %v1377 = vld [vmem:[#allocation3 + $0x10] sm:$0xff]
        %v1378 = vld [vmem:[#allocation3 + $0x18] sm:$0xff]
        %v1379 = vld [vmem:[#allocation3 + $0x20] sm:$0xff]
        %v1380 = vld [vmem:[#allocation3 + $0x28] sm:$0xff]
        %v1381 = vld [vmem:[#allocation3 + $0x30] sm:$0xff]
        %v1382 = vld [vmem:[#allocation3 + $0x38] sm:$0xff]
        %v1383 = vld [vmem:[#allocation3 + $0x40] sm:$0xff]
        %v1384 = vld [vmem:[#allocation3 + $0x48] sm:$0xff]
        %v1385 = vld [vmem:[#allocation3 + $0x50] sm:$0xff]
        %v1386 = vld [vmem:[#allocation3 + $0x58] sm:$0xff]
        %v1387 = vld [vmem:[#allocation3 + $0x60] sm:$0xff]
        %v1388 = vld [vmem:[#allocation3 + $0x68] sm:$0xff]
        %v1389 = vld [vmem:[#allocation3 + $0x70] sm:$0xff]
        %v1390 = vld [vmem:[#allocation3 + $0x78] sm:$0xff]
        %v1391 = vld [vmem:[#allocation3 + $0x80] sm:$0xff]
        %v1392 = vld [vmem:[#allocation3 + $0x88] sm:$0xff]
        %v1393 = vld [vmem:[#allocation3 + $0x90] sm:$0xff]
        %v1394 = vld [vmem:[#allocation3 + $0x98] sm:$0xff]
        %v1395 = vld [vmem:[#allocation3 + $0xa0] sm:$0xff]
        %v1396 = vld [vmem:[#allocation3 + $0xa8] sm:$0xff]
        %v1397 = vld [vmem:[#allocation3 + $0xb0] sm:$0xff]
        %v1398 = vld [vmem:[#allocation3 + $0xb8] sm:$0xff]
        %v1399 = vld [vmem:[#allocation3 + $0xc0] sm:$0xff]
        %v1400 = vld [vmem:[#allocation3 + $0xc8] sm:$0xff]
        %v1401 = vld [vmem:[#allocation3 + $0xd0] sm:$0xff]
        %v1402 = vld [vmem:[#allocation3 + $0xd8] sm:$0xff]
        %v1403 = vld [vmem:[#allocation3 + $0xe0] sm:$0xff]
        %v1404 = vld [vmem:[#allocation3 + $0xe8] sm:$0xff]
        %v1405 = vld [vmem:[#allocation3 + $0xf0] sm:$0xff]
        %v1406 = vld [vmem:[#allocation3 + $0xf8] sm:$0xff]
        %v1407 = vld [vmem:[#allocation3 + $0x100] sm:$0xff]
        %v1408 = vld [vmem:[#allocation3 + $0x108] sm:$0xff]
        %v1409 = vld [vmem:[#allocation3 + $0x110] sm:$0xff]
        %v1410 = vld [vmem:[#allocation3 + $0x118] sm:$0xff]
        %v1411 = vld [vmem:[#allocation3 + $0x120] sm:$0xff]
        %v1412 = vld [vmem:[#allocation3 + $0x128] sm:$0xff]
        %v1413 = vld [vmem:[#allocation3 + $0x130] sm:$0xff]
        %v1414 = vld [vmem:[#allocation3 + $0x138] sm:$0xff]
        %v1415 = vld [vmem:[#allocation3 + $0x140] sm:$0xff]
        %v1416 = vld [vmem:[#allocation3 + $0x148] sm:$0xff]
        %v1417 = vld [vmem:[#allocation3 + $0x150] sm:$0xff]
        %v1418 = vld [vmem:[#allocation3 + $0x158] sm:$0xff]
        %v1419 = vld [vmem:[#allocation3 + $0x160] sm:$0xff]
        %v1420 = vld [vmem:[#allocation3 + $0x168] sm:$0xff]
        %v1421 = vld [vmem:[#allocation3 + $0x170] sm:$0xff]
        %v1422 = vld [vmem:[#allocation3 + $0x178] sm:$0xff]
        %v1423 = vld [vmem:[%s4] sm:$0xf]
        %v1424 = vld [vmem:[%s4 + $0x4] sm:$0xf]
        %v1425 = vld [vmem:[%s4 + $0x8] sm:$0xf]
        %v1426 = vld [vmem:[%s4 + $0xc] sm:$0xf]
        %v1427 = vld [vmem:[%s4 + $0x10] sm:$0xf]
        %v1428 = vld [vmem:[%s4 + $0x14] sm:$0xf]
        %v1429 = vld [vmem:[%s4 + $0x18] sm:$0xf]
        %v1430 = vld [vmem:[%s4 + $0x1c] sm:$0xf]
        %v1431 = vld [vmem:[%s4 + $0x20] sm:$0xf]
        %v1432 = vld [vmem:[%s4 + $0x24] sm:$0xf]
        %v1433 = vld [vmem:[%s4 + $0x28] sm:$0xf]
        %v1434 = vld [vmem:[%s4 + $0x2c] sm:$0xf]
        %v1435 = vld [vmem:[%s4 + $0x30] sm:$0xf]
        %v1436 = vld [vmem:[%s4 + $0x34] sm:$0xf]
        %v1437 = vld [vmem:[%s4 + $0x38] sm:$0xf]
        %v1438 = vld [vmem:[%s4 + $0x3c] sm:$0xf]
        %v1439 = vld [vmem:[%s4 + $0x40] sm:$0xf]
        %v1440 = vld [vmem:[%s4 + $0x44] sm:$0xf]
        %v1441 = vld [vmem:[%s4 + $0x48] sm:$0xf]
        %v1442 = vld [vmem:[%s4 + $0x4c] sm:$0xf]
        %v1443 = vld [vmem:[%s4 + $0x50] sm:$0xf]
        %v1444 = vld [vmem:[%s4 + $0x54] sm:$0xf]
        %v1445 = vld [vmem:[%s4 + $0x58] sm:$0xf]
        %v1446 = vld [vmem:[%s4 + $0x5c] sm:$0xf]
        %v1447 = vld [vmem:[%s4 + $0x60] sm:$0xf]
        %v1448 = vld [vmem:[%s4 + $0x64] sm:$0xf]
        %v1449 = vld [vmem:[%s4 + $0x68] sm:$0xf]
        %v1450 = vld [vmem:[%s4 + $0x6c] sm:$0xf]
        %v1451 = vld [vmem:[%s4 + $0x70] sm:$0xf]
        %v1452 = vld [vmem:[%s4 + $0x74] sm:$0xf]
        %v1453 = vld [vmem:[%s4 + $0x78] sm:$0xf]
        %v1454 = vld [vmem:[%s4 + $0x7c] sm:$0xf]
        %v1455 = vld [vmem:[%s4 + $0x80] sm:$0xf]
        %v1456 = vld [vmem:[%s4 + $0x84] sm:$0xf]
        %v1457 = vld [vmem:[%s4 + $0x88] sm:$0xf]
        %v1458 = vld [vmem:[%s4 + $0x8c] sm:$0xf]
        %v1459 = vld [vmem:[%s4 + $0x90] sm:$0xf]
        %v1460 = vld [vmem:[%s4 + $0x94] sm:$0xf]
        %v1461 = vld [vmem:[%s4 + $0x98] sm:$0xf]
        %v1462 = vld [vmem:[%s4 + $0x9c] sm:$0xf]
        %v1463 = vld [vmem:[%s4 + $0xa0] sm:$0xf]
        %v1464 = vld [vmem:[%s4 + $0xa4] sm:$0xf]
        %v1465 = vld [vmem:[%s4 + $0xa8] sm:$0xf]
        %v1466 = vld [vmem:[%s4 + $0xac] sm:$0xf]
        %v1467 = vld [vmem:[%s4 + $0xb0] sm:$0xf]
        %v1468 = vld [vmem:[%s4 + $0xb4] sm:$0xf]
        %v1469 = vld [vmem:[%s4 + $0xb8] sm:$0xf]
        %v1470 = vld [vmem:[%s4 + $0xbc] sm:$0xf]
        %v1471 = vld [vmem:[#allocation3 + $0x180] sm:$0xff]
        %v1472 = vld [vmem:[#allocation3 + $0x188] sm:$0xff]
        %v1473 = vld [vmem:[#allocation3 + $0x190] sm:$0xff]
        %s1474 = scalar_lea.vmem %s4, 192
        %v1475 = vld [vmem:[%s1474] sm:$0xf]
        %v1476 = vld [vmem:[%s1474 + $0x4] sm:$0xf]
        %v1477 = vld [vmem:[%s1474 + $0x8] sm:$0xf]
        %v1478 = vld [vmem:[%s1474 + $0xc] sm:$0xf]
        %v1479 = vld [vmem:[%s1474 + $0x10] sm:$0xf]
        %v1480 = vld [vmem:[%s1474 + $0x14] sm:$0xf]
        %v1481 = vld [vmem:[%s1474 + $0x18] sm:$0xf]
        %v1482 = vld [vmem:[%s1474 + $0x1c] sm:$0xf]
        %v1483 = vld [vmem:[%s1474 + $0x20] sm:$0xf]
        %v1484 = vld [vmem:[%s1474 + $0x24] sm:$0xf]
        %v1485 = vld [vmem:[%s1474 + $0x28] sm:$0xf]
        %v1486 = vld [vmem:[%s1474 + $0x2c] sm:$0xf]
        %v1487 = vld [vmem:[%s1474 + $0x30] sm:$0xf]
        %v1488 = vld [vmem:[%s1474 + $0x34] sm:$0xf]
        %v1489 = vld [vmem:[%s1474 + $0x38] sm:$0xf]
        %v1490 = vld [vmem:[%s1474 + $0x3c] sm:$0xf]
        %v1491 = vld [vmem:[%s1474 + $0x40] sm:$0xf]
        %v1492 = vld [vmem:[%s1474 + $0x44] sm:$0xf]
        %v1493 = vld [vmem:[%s1474 + $0x48] sm:$0xf]
        %v1494 = vld [vmem:[%s1474 + $0x4c] sm:$0xf]
        %v1495 = vld [vmem:[%s1474 + $0x50] sm:$0xf]
        %v1496 = vld [vmem:[%s1474 + $0x54] sm:$0xf]
        %v1497 = vld [vmem:[%s1474 + $0x58] sm:$0xf]
        %v1498 = vld [vmem:[%s1474 + $0x5c] sm:$0xf]
        %v1499 = vld [vmem:[%s1474 + $0x60] sm:$0xf]
        %v1500 = vld [vmem:[%s1474 + $0x64] sm:$0xf]
        %v1501 = vld [vmem:[%s1474 + $0x68] sm:$0xf]
        %v1502 = vld [vmem:[%s1474 + $0x6c] sm:$0xf]
        %v1503 = vld [vmem:[%s1474 + $0x70] sm:$0xf]
        %v1504 = vld [vmem:[%s1474 + $0x74] sm:$0xf]
        %v1505 = vld [vmem:[%s1474 + $0x78] sm:$0xf]
        %v1506 = vld [vmem:[%s1474 + $0x7c] sm:$0xf]
        %v1507 = vld [vmem:[%s1474 + $0x80] sm:$0xf]
        %v1508 = vld [vmem:[%s1474 + $0x84] sm:$0xf]
        %v1509 = vld [vmem:[%s1474 + $0x88] sm:$0xf]
        %v1510 = vld [vmem:[%s1474 + $0x8c] sm:$0xf]
        %v1511 = vld [vmem:[%s1474 + $0x90] sm:$0xf]
        %v1512 = vld [vmem:[%s1474 + $0x94] sm:$0xf]
        %v1513 = vld [vmem:[%s1474 + $0x98] sm:$0xf]
        %v1514 = vld [vmem:[%s1474 + $0x9c] sm:$0xf]
        %v1515 = vld [vmem:[%s1474 + $0xa0] sm:$0xf]
        %v1516 = vld [vmem:[%s1474 + $0xa4] sm:$0xf]
        %v1517 = vld [vmem:[%s1474 + $0xa8] sm:$0xf]
        %v1518 = vld [vmem:[%s1474 + $0xac] sm:$0xf]
        %v1519 = vld [vmem:[%s1474 + $0xb0] sm:$0xf]
        %v1520 = vld [vmem:[%s1474 + $0xb4] sm:$0xf]
        %v1521 = vld [vmem:[%s1474 + $0xb8] sm:$0xf]
        %v1522 = vld [vmem:[%s1474 + $0xbc] sm:$0xf]
        %v1571 = vunpack.c.l.b16 %v1475
        %v1572 = vunpack.c.l.b16 %v1476
        %v1573 = vunpack.c.l.b16 %v1477
        %v1574 = vunpack.c.l.b16 %v1478
        %v1575 = vunpack.c.l.b16 %v1479
        %v1576 = vunpack.c.l.b16 %v1480
        %v1577 = vunpack.c.l.b16 %v1481
        %v1578 = vunpack.c.l.b16 %v1482
        %v1579 = vunpack.c.l.b16 %v1483
        %v1580 = vunpack.c.l.b16 %v1484
        %v1581 = vunpack.c.l.b16 %v1485
        %v1582 = vunpack.c.l.b16 %v1486
        %v1583 = vunpack.c.l.b16 %v1487
        %v1584 = vunpack.c.l.b16 %v1488
        %v1585 = vunpack.c.l.b16 %v1489
        %v1586 = vunpack.c.l.b16 %v1490
        %v1587 = vunpack.c.l.b16 %v1491
        %v1588 = vunpack.c.l.b16 %v1492
        %v1589 = vunpack.c.l.b16 %v1493
        %v1590 = vunpack.c.l.b16 %v1494
        %v1591 = vunpack.c.l.b16 %v1495
        %v1592 = vunpack.c.l.b16 %v1496
        %v1593 = vunpack.c.l.b16 %v1497
        %v1594 = vunpack.c.l.b16 %v1498
        %v1595 = vunpack.c.l.b16 %v1499
        %v1596 = vunpack.c.l.b16 %v1500
        %v1597 = vunpack.c.l.b16 %v1501
        %v1598 = vunpack.c.l.b16 %v1502
        %v1599 = vunpack.c.l.b16 %v1503
        %v1600 = vunpack.c.l.b16 %v1504
        %v1601 = vunpack.c.l.b16 %v1505
        %v1602 = vunpack.c.l.b16 %v1506
        %v1603 = vunpack.c.l.b16 %v1507
        %v1604 = vunpack.c.l.b16 %v1508
        %v1605 = vunpack.c.l.b16 %v1509
        %v1606 = vunpack.c.l.b16 %v1510
        %v1607 = vunpack.c.l.b16 %v1511
        %v1608 = vunpack.c.l.b16 %v1512
        %v1609 = vunpack.c.l.b16 %v1513
        %v1610 = vunpack.c.l.b16 %v1514
        %v1611 = vunpack.c.l.b16 %v1515
        %v1612 = vunpack.c.l.b16 %v1516
        %v1613 = vunpack.c.l.b16 %v1517
        %v1614 = vunpack.c.l.b16 %v1518
        %v1615 = vunpack.c.l.b16 %v1519
        %v1616 = vunpack.c.l.b16 %v1520
        %v1617 = vunpack.c.l.b16 %v1521
        %v1618 = vunpack.c.l.b16 %v1522
        %v1619 = vpack.c.b16 %v1572, %v1571
        %v1620 = vpack.c.b16 %v1574, %v1573
        %v1621 = vpack.c.b16 %v1576, %v1575
        %v1622 = vpack.c.b16 %v1578, %v1577
        %v1623 = vpack.c.b16 %v1580, %v1579
        %v1624 = vpack.c.b16 %v1582, %v1581
        %v1625 = vpack.c.b16 %v1584, %v1583
        %v1626 = vpack.c.b16 %v1586, %v1585
        %v1627 = vpack.c.b16 %v1588, %v1587
        %v1628 = vpack.c.b16 %v1590, %v1589
        %v1629 = vpack.c.b16 %v1592, %v1591
        %v1630 = vpack.c.b16 %v1594, %v1593
        %v1631 = vpack.c.b16 %v1596, %v1595
        %v1632 = vpack.c.b16 %v1598, %v1597
        %v1633 = vpack.c.b16 %v1600, %v1599
        %v1634 = vpack.c.b16 %v1602, %v1601
        %v1635 = vpack.c.b16 %v1604, %v1603
        %v1636 = vpack.c.b16 %v1606, %v1605
        %v1637 = vpack.c.b16 %v1608, %v1607
        %v1638 = vpack.c.b16 %v1610, %v1609
        %v1639 = vpack.c.b16 %v1612, %v1611
        %v1640 = vpack.c.b16 %v1614, %v1613
        %v1641 = vpack.c.b16 %v1616, %v1615
        %v1642 = vpack.c.b16 %v1618, %v1617
        %1667 = vmatprep.subr.bf16.mxu0 0
        %1668 = vmatpush1.bf16.msra.mxu0 %v1619
        %1669 = vmatprep.subr.bf16.mxu0 0
        %1670 = vmatpush1.bf16.msra.mxu0 %v1620
        %1671 = vmatprep.subr.bf16.mxu0 0
        %1672 = vmatpush1.bf16.msra.mxu0 %v1621
        %1673 = vmatprep.subr.bf16.mxu0 0
        %1674 = vmatpush1.bf16.msra.mxu0 %v1622
        %1675 = vmatprep.subr.bf16.mxu0 0
        %1676 = vmatpush1.bf16.msra.mxu0 %v1623
        %1677 = vmatprep.subr.bf16.mxu0 0
        %1678 = vmatpush1.bf16.msra.mxu0 %v1624
        %1679 = vmatprep.subr.bf16.mxu0 0
        %1680 = vmatpush1.bf16.msra.mxu0 %v1625
        %1681 = vmatprep.subr.bf16.mxu0 0
        %1682 = vmatpush1.bf16.msra.mxu0 %v1626
        %1683 = vmatprep.subr.bf16.mxu0 0
        %1684 = vmatpush1.bf16.msra.mxu0 %v1627
        %1685 = vmatprep.subr.bf16.mxu0 0
        %1686 = vmatpush1.bf16.msra.mxu0 %v1628
        %1687 = vmatprep.subr.bf16.mxu0 0
        %1688 = vmatpush1.bf16.msra.mxu0 %v1629
        %1689 = vmatprep.subr.bf16.mxu0 0
        %1690 = vmatpush1.bf16.msra.mxu0 %v1630
        %1691 = vmatprep.subr.bf16.mxu0 0
        %1692 = vmatpush1.bf16.msra.mxu0 %v1631
        %1693 = vmatprep.subr.bf16.mxu0 0
        %1694 = vmatpush1.bf16.msra.mxu0 %v1632
        %1695 = vmatprep.subr.bf16.mxu0 0
        %1696 = vmatpush1.bf16.msra.mxu0 %v1633
        %1697 = vmatprep.subr.bf16.mxu0 0
        %1698 = vmatpush1.bf16.msra.mxu0 %v1634
        %1699 = vmatprep.mubr.bf16.mxu0 %v1379
        %1700 = vmatmul.mubr.bf16.gmra.mrb[0].mxu0 %v1378
        %v1701 = vpop.f32.mrb[0].mxu0
        %v1702 = vadd.f32 0.0, %v1701
        %v1703 = vpop.f32.mrb[0].mxu0
        %v1704 = vpop.f32.mrb[0].mxu0
        %v1705 = vadd.f32 0.0, %v1704
        %v1706 = vpop.f32.mrb[0].mxu0
        %1707 = vmatprep.mubr.bf16.mxu0 %v1382
        %1708 = vmatmul.mubr.bf16.gmra.mrb[0].mxu0 %v1381
        %v1709 = vpop.f32.mrb[0].mxu0
        %v1710 = vadd.f32 0.0, %v1709
        %v1711 = vpop.f32.mrb[0].mxu0
        %v1712 = vpop.f32.mrb[0].mxu0
        %v1713 = vadd.f32 0.0, %v1712
        %v1714 = vpop.f32.mrb[0].mxu0
        %1715 = vmatprep.mubr.bf16.mxu0 %v1385
        %1716 = vmatmul.mubr.bf16.gmra.mrb[0].mxu0 %v1384
        %v1717 = vpop.f32.mrb[0].mxu0
        %v1718 = vadd.f32 0.0, %v1717
        %v1719 = vpop.f32.mrb[0].mxu0
        %v1720 = vpop.f32.mrb[0].mxu0
        %v1721 = vadd.f32 0.0, %v1720
        %v1722 = vpop.f32.mrb[0].mxu0
        %1723 = vmatprep.mubr.bf16.mxu0 %v1388
        %1724 = vmatmul.mubr.bf16.gmra.mrb[0].mxu0 %v1387
        %v1725 = vpop.f32.mrb[0].mxu0
        %v1726 = vadd.f32 0.0, %v1725
        %v1727 = vpop.f32.mrb[0].mxu0
        %v1728 = vpop.f32.mrb[0].mxu0
        %v1729 = vadd.f32 0.0, %v1728
        %v1730 = vpop.f32.mrb[0].mxu0
        %1731 = vmatprep.mubr.bf16.mxu0 %v1391
        %1732 = vmatmul.mubr.bf16.gmra.mrb[0].mxu0 %v1390
        %v1733 = vpop.f32.mrb[0].mxu0
        %v1734 = vadd.f32 0.0, %v1733
        %v1735 = vpop.f32.mrb[0].mxu0
        %v1736 = vpop.f32.mrb[0].mxu0
        %v1737 = vadd.f32 0.0, %v1736
        %v1738 = vpop.f32.mrb[0].mxu0
        %1739 = vmatprep.mubr.bf16.mxu0 %v1394
        %1740 = vmatmul.mubr.bf16.gmra.mrb[0].mxu0 %v1393
        %v1741 = vpop.f32.mrb[0].mxu0
        %v1742 = vadd.f32 0.0, %v1741
        %v1743 = vpop.f32.mrb[0].mxu0
        %v1744 = vpop.f32.mrb[0].mxu0
        %v1745 = vadd.f32 0.0, %v1744
        %v1746 = vpop.f32.mrb[0].mxu0
        %1747 = vmatprep.mubr.bf16.mxu0 %v1397
        %1748 = vmatmul.mubr.bf16.gmra.mrb[0].mxu0 %v1396
        %v1749 = vpop.f32.mrb[0].mxu0
        %v1750 = vadd.f32 0.0, %v1749
        %v1751 = vpop.f32.mrb[0].mxu0
        %v1752 = vpop.f32.mrb[0].mxu0
        %v1753 = vadd.f32 0.0, %v1752
        %v1754 = vpop.f32.mrb[0].mxu0
        %1755 = vmatprep.mubr.bf16.mxu0 %v1400
        %1756 = vmatmul.mubr.bf16.gmra.mrb[0].mxu0 %v1399
        %v1757 = vpop.f32.mrb[0].mxu0
        %v1758 = vadd.f32 0.0, %v1757
        %v1759 = vpop.f32.mrb[0].mxu0
        %v1760 = vpop.f32.mrb[0].mxu0
        %v1761 = vadd.f32 0.0, %v1760
        %v1762 = vpop.f32.mrb[0].mxu0
        %1763 = vmatprep.mubr.bf16.mxu0 %v1403
        %1764 = vmatmul.mubr.bf16.gmra.mrb[0].mxu0 %v1402
        %v1765 = vpop.f32.mrb[0].mxu0
        %v1766 = vadd.f32 0.0, %v1765
        %v1767 = vpop.f32.mrb[0].mxu0
        %v1768 = vpop.f32.mrb[0].mxu0
        %v1769 = vadd.f32 0.0, %v1768
        %v1770 = vpop.f32.mrb[0].mxu0
        %1771 = vmatprep.mubr.bf16.mxu0 %v1406
        %1772 = vmatmul.mubr.bf16.gmra.mrb[0].mxu0 %v1405
        %v1773 = vpop.f32.mrb[0].mxu0
        %v1774 = vadd.f32 0.0, %v1773
        %v1775 = vpop.f32.mrb[0].mxu0
        %v1776 = vpop.f32.mrb[0].mxu0
        %v1777 = vadd.f32 0.0, %v1776
        %v1778 = vpop.f32.mrb[0].mxu0
        %1779 = vmatprep.mubr.bf16.mxu0 %v1409
        %1780 = vmatmul.mubr.bf16.gmra.mrb[0].mxu0 %v1408
        %v1781 = vpop.f32.mrb[0].mxu0
        %v1782 = vadd.f32 0.0, %v1781
        %v1783 = vpop.f32.mrb[0].mxu0
        %v1784 = vpop.f32.mrb[0].mxu0
        %v1785 = vadd.f32 0.0, %v1784
        %v1786 = vpop.f32.mrb[0].mxu0
        %1787 = vmatprep.mubr.bf16.mxu0 %v1412
        %1788 = vmatmul.mubr.bf16.gmra.mrb[0].mxu0 %v1411
        %v1789 = vpop.f32.mrb[0].mxu0
        %v1790 = vadd.f32 0.0, %v1789
        %v1791 = vpop.f32.mrb[0].mxu0
        %v1792 = vpop.f32.mrb[0].mxu0
        %v1793 = vadd.f32 0.0, %v1792
        %v1794 = vpop.f32.mrb[0].mxu0
        %1795 = vmatprep.mubr.bf16.mxu0 %v1415
        %1796 = vmatmul.mubr.bf16.gmra.mrb[0].mxu0 %v1414
        %v1797 = vpop.f32.mrb[0].mxu0
        %v1798 = vadd.f32 0.0, %v1797
        %v1799 = vpop.f32.mrb[0].mxu0
        %v1800 = vpop.f32.mrb[0].mxu0
        %v1801 = vadd.f32 0.0, %v1800
        %v1802 = vpop.f32.mrb[0].mxu0
        %1803 = vmatprep.mubr.bf16.mxu0 %v1418
        %1804 = vmatmul.mubr.bf16.gmra.mrb[0].mxu0 %v1417
        %v1805 = vpop.f32.mrb[0].mxu0
        %v1806 = vadd.f32 0.0, %v1805
        %v1807 = vpop.f32.mrb[0].mxu0
        %v1808 = vpop.f32.mrb[0].mxu0
        %v1809 = vadd.f32 0.0, %v1808
        %v1810 = vpop.f32.mrb[0].mxu0
        %1811 = vmatprep.mubr.bf16.mxu0 %v1421
        %1812 = vmatmul.mubr.bf16.gmra.mrb[0].mxu0 %v1420
        %v1813 = vpop.f32.mrb[0].mxu0
        %v1814 = vadd.f32 0.0, %v1813
        %v1815 = vpop.f32.mrb[0].mxu0
        %v1816 = vpop.f32.mrb[0].mxu0
        %v1817 = vadd.f32 0.0, %v1816
        %v1818 = vpop.f32.mrb[0].mxu0
        %1819 = vmatprep.mubr.bf16.mxu0 %v1472
        %1820 = vmatmul.mubr.bf16.gmra.mrb[0].mxu0 %v1471
        %v1821 = vpop.f32.mrb[0].mxu0
        %v1822 = vadd.f32 0.0, %v1821
        %v1823 = vpop.f32.mrb[0].mxu0
        %v1824 = vpop.f32.mrb[0].mxu0
        %v1825 = vadd.f32 0.0, %v1824
        %v1826 = vpop.f32.mrb[0].mxu0
        %1827 = vdwg.mxu0
        %1828 = vmatprep.subr.bf16.mxu0 0
        %1829 = vmatpush1.bf16.msra.mxu0 %v1635
        %1830 = vmatprep.subr.bf16.mxu0 0
        %1831 = vmatpush1.bf16.msra.mxu0 %v1636
        %1832 = vmatprep.subr.bf16.mxu0 0
        %1833 = vmatpush1.bf16.msra.mxu0 %v1637
        %1834 = vmatprep.subr.bf16.mxu0 0
        %1835 = vmatpush1.bf16.msra.mxu0 %v1638
        %1836 = vmatprep.subr.bf16.mxu0 0
        %1837 = vmatpush1.bf16.msra.mxu0 %v1639
        %1838 = vmatprep.subr.bf16.mxu0 0
        %1839 = vmatpush1.bf16.msra.mxu0 %v1640
        %1840 = vmatprep.subr.bf16.mxu0 0
        %1841 = vmatpush1.bf16.msra.mxu0 %v1641
        %1842 = vmatprep.subr.bf16.mxu0 0
        %1843 = vmatpush1.bf16.msra.mxu0 %v1642
        %1844 = vmatprep.subr.bf16.mxu0 0
        %1845 = vmatpush1.bf16.msra.mxu0 0
        %1846 = vmatprep.subr.bf16.mxu0 0
        %1847 = vmatpush1.bf16.msra.mxu0 0
        %1848 = vmatprep.subr.bf16.mxu0 0
        %1849 = vmatpush1.bf16.msra.mxu0 0
        %1850 = vmatprep.subr.bf16.mxu0 0
        %1851 = vmatpush1.bf16.msra.mxu0 0
        %1852 = vmatprep.subr.bf16.mxu0 0
        %1853 = vmatpush1.bf16.msra.mxu0 0
        %1854 = vmatprep.subr.bf16.mxu0 0
        %1855 = vmatpush1.bf16.msra.mxu0 0
        %1856 = vmatprep.subr.bf16.mxu0 0
        %1857 = vmatpush1.bf16.msra.mxu0 0
        %1858 = vmatprep.subr.bf16.mxu0 0
        %1859 = vmatpush1.bf16.msra.mxu0 0
        %1860 = vmatprep.mubr.bf16.mxu0 0
        %1861 = vmatmul.mubr.bf16.gmra.mrb[0].mxu0 %v1380
        %v1862 = vpop.f32.mrb[0].mxu0
        %v1863 = vadd.f32 %v1702, %v1862
        %v1864 = vpop.f32.mrb[0].mxu0
        %v1865 = vpop.f32.mrb[0].mxu0
        %v1866 = vadd.f32 %v1705, %v1865
        %v1867 = vpop.f32.mrb[0].mxu0
        %1868 = vmatprep.mubr.bf16.mxu0 0
        %1869 = vmatmul.mubr.bf16.gmra.mrb[0].mxu0 %v1383
        %v1870 = vpop.f32.mrb[0].mxu0
        %v1871 = vadd.f32 %v1710, %v1870
        %v1872 = vpop.f32.mrb[0].mxu0
        %v1873 = vpop.f32.mrb[0].mxu0
        %v1874 = vadd.f32 %v1713, %v1873
        %v1875 = vpop.f32.mrb[0].mxu0
        %1876 = vmatprep.mubr.bf16.mxu0 0
        %1877 = vmatmul.mubr.bf16.gmra.mrb[0].mxu0 %v1386
        %v1878 = vpop.f32.mrb[0].mxu0
        %v1879 = vadd.f32 %v1718, %v1878
        %v1880 = vpop.f32.mrb[0].mxu0
        %v1881 = vpop.f32.mrb[0].mxu0
        %v1882 = vadd.f32 %v1721, %v1881
        %v1883 = vpop.f32.mrb[0].mxu0
        %1884 = vmatprep.mubr.bf16.mxu0 0
        %1885 = vmatmul.mubr.bf16.gmra.mrb[0].mxu0 %v1389
        %v1886 = vpop.f32.mrb[0].mxu0
        %v1887 = vadd.f32 %v1726, %v1886
        %v1888 = vpop.f32.mrb[0].mxu0
        %v1889 = vpop.f32.mrb[0].mxu0
        %v1890 = vadd.f32 %v1729, %v1889
        %v1891 = vpop.f32.mrb[0].mxu0
        %1892 = vmatprep.mubr.bf16.mxu0 0
        %1893 = vmatmul.mubr.bf16.gmra.mrb[0].mxu0 %v1392
        %v1894 = vpop.f32.mrb[0].mxu0
        %v1895 = vadd.f32 %v1734, %v1894
        %v1896 = vpop.f32.mrb[0].mxu0
        %v1897 = vpop.f32.mrb[0].mxu0
        %v1898 = vadd.f32 %v1737, %v1897
        %v1899 = vpop.f32.mrb[0].mxu0
        %1900 = vmatprep.mubr.bf16.mxu0 0
        %1901 = vmatmul.mubr.bf16.gmra.mrb[0].mxu0 %v1395
        %v1902 = vpop.f32.mrb[0].mxu0
        %v1903 = vadd.f32 %v1742, %v1902
        %v1904 = vpop.f32.mrb[0].mxu0
        %v1905 = vpop.f32.mrb[0].mxu0
        %v1906 = vadd.f32 %v1745, %v1905
        %v1907 = vpop.f32.mrb[0].mxu0
        %1908 = vmatprep.mubr.bf16.mxu0 0
        %1909 = vmatmul.mubr.bf16.gmra.mrb[0].mxu0 %v1398
        %v1910 = vpop.f32.mrb[0].mxu0
        %v1911 = vadd.f32 %v1750, %v1910
        %v1912 = vpop.f32.mrb[0].mxu0
        %v1913 = vpop.f32.mrb[0].mxu0
        %v1914 = vadd.f32 %v1753, %v1913
        %v1915 = vpop.f32.mrb[0].mxu0
        %1916 = vmatprep.mubr.bf16.mxu0 0
        %1917 = vmatmul.mubr.bf16.gmra.mrb[0].mxu0 %v1401
        %v1918 = vpop.f32.mrb[0].mxu0
        %v1919 = vadd.f32 %v1758, %v1918
        %v1920 = vpop.f32.mrb[0].mxu0
        %v1921 = vpop.f32.mrb[0].mxu0
        %v1922 = vadd.f32 %v1761, %v1921
        %v1923 = vpop.f32.mrb[0].mxu0
        %1924 = vmatprep.mubr.bf16.mxu0 0
        %1925 = vmatmul.mubr.bf16.gmra.mrb[0].mxu0 %v1404
        %v1926 = vpop.f32.mrb[0].mxu0
        %v1927 = vadd.f32 %v1766, %v1926
        %v1928 = vpop.f32.mrb[0].mxu0
        %v1929 = vpop.f32.mrb[0].mxu0
        %v1930 = vadd.f32 %v1769, %v1929
        %v1931 = vpop.f32.mrb[0].mxu0
        %1932 = vmatprep.mubr.bf16.mxu0 0
        %1933 = vmatmul.mubr.bf16.gmra.mrb[0].mxu0 %v1407
        %v1934 = vpop.f32.mrb[0].mxu0
        %v1935 = vadd.f32 %v1774, %v1934
        %v1936 = vpop.f32.mrb[0].mxu0
        %v1937 = vpop.f32.mrb[0].mxu0
        %v1938 = vadd.f32 %v1777, %v1937
        %v1939 = vpop.f32.mrb[0].mxu0
        %1940 = vmatprep.mubr.bf16.mxu0 0
        %1941 = vmatmul.mubr.bf16.gmra.mrb[0].mxu0 %v1410
        %v1942 = vpop.f32.mrb[0].mxu0
        %v1943 = vadd.f32 %v1782, %v1942
        %v1944 = vpop.f32.mrb[0].mxu0
        %v1945 = vpop.f32.mrb[0].mxu0
        %v1946 = vadd.f32 %v1785, %v1945
        %v1947 = vpop.f32.mrb[0].mxu0
        %1948 = vmatprep.mubr.bf16.mxu0 0
        %1949 = vmatmul.mubr.bf16.gmra.mrb[0].mxu0 %v1413
        %v1950 = vpop.f32.mrb[0].mxu0
        %v1951 = vadd.f32 %v1790, %v1950
        %v1952 = vpop.f32.mrb[0].mxu0
        %v1953 = vpop.f32.mrb[0].mxu0
        %v1954 = vadd.f32 %v1793, %v1953
        %v1955 = vpop.f32.mrb[0].mxu0
        %1956 = vmatprep.mubr.bf16.mxu0 0
        %1957 = vmatmul.mubr.bf16.gmra.mrb[0].mxu0 %v1416
        %v1958 = vpop.f32.mrb[0].mxu0
        %v1959 = vadd.f32 %v1798, %v1958
        %v1960 = vpop.f32.mrb[0].mxu0
        %v1961 = vpop.f32.mrb[0].mxu0
        %v1962 = vadd.f32 %v1801, %v1961
        %v1963 = vpop.f32.mrb[0].mxu0
        %1964 = vmatprep.mubr.bf16.mxu0 0
        %1965 = vmatmul.mubr.bf16.gmra.mrb[0].mxu0 %v1419
        %v1966 = vpop.f32.mrb[0].mxu0
        %v1967 = vadd.f32 %v1806, %v1966
        %v1968 = vpop.f32.mrb[0].mxu0
        %v1969 = vpop.f32.mrb[0].mxu0
        %v1970 = vadd.f32 %v1809, %v1969
        %v1971 = vpop.f32.mrb[0].mxu0
        %1972 = vmatprep.mubr.bf16.mxu0 0
        %1973 = vmatmul.mubr.bf16.gmra.mrb[0].mxu0 %v1422
        %v1974 = vpop.f32.mrb[0].mxu0
        %v1975 = vadd.f32 %v1814, %v1974
        %v1976 = vpop.f32.mrb[0].mxu0
        %v1977 = vpop.f32.mrb[0].mxu0
        %v1978 = vadd.f32 %v1817, %v1977
        %v1979 = vpop.f32.mrb[0].mxu0
        %1980 = vmatprep.mubr.bf16.mxu0 0
        %1981 = vmatmul.mubr.bf16.gmra.mrb[0].mxu0 %v1473
        %v1982 = vpop.f32.mrb[0].mxu0
        %v1983 = vadd.f32 %v1822, %v1982
        %v1984 = vpop.f32.mrb[0].mxu0
        %v1985 = vpop.f32.mrb[0].mxu0
        %v1986 = vadd.f32 %v1825, %v1985
        %v1987 = vpop.f32.mrb[0].mxu0
        %1988 = vdwg.mxu0
        %v2037 = vunpack.c.l.b16 %v1423
        %v2038 = vunpack.c.l.b16 %v1424
        %v2039 = vunpack.c.l.b16 %v1425
        %v2040 = vunpack.c.l.b16 %v1426
        %v2041 = vunpack.c.l.b16 %v1427
        %v2042 = vunpack.c.l.b16 %v1428
        %v2043 = vunpack.c.l.b16 %v1429
        %v2044 = vunpack.c.l.b16 %v1430
        %v2045 = vunpack.c.l.b16 %v1431
        %v2046 = vunpack.c.l.b16 %v1432
        %v2047 = vunpack.c.l.b16 %v1433
        %v2048 = vunpack.c.l.b16 %v1434
        %v2049 = vunpack.c.l.b16 %v1435
        %v2050 = vunpack.c.l.b16 %v1436
        %v2051 = vunpack.c.l.b16 %v1437
        %v2052 = vunpack.c.l.b16 %v1438
        %v2053 = vunpack.c.l.b16 %v1439
        %v2054 = vunpack.c.l.b16 %v1440
        %v2055 = vunpack.c.l.b16 %v1441
        %v2056 = vunpack.c.l.b16 %v1442
        %v2057 = vunpack.c.l.b16 %v1443
        %v2058 = vunpack.c.l.b16 %v1444
        %v2059 = vunpack.c.l.b16 %v1445
        %v2060 = vunpack.c.l.b16 %v1446
        %v2061 = vunpack.c.l.b16 %v1447
        %v2062 = vunpack.c.l.b16 %v1448
        %v2063 = vunpack.c.l.b16 %v1449
        %v2064 = vunpack.c.l.b16 %v1450
        %v2065 = vunpack.c.l.b16 %v1451
        %v2066 = vunpack.c.l.b16 %v1452
        %v2067 = vunpack.c.l.b16 %v1453
        %v2068 = vunpack.c.l.b16 %v1454
        %v2069 = vunpack.c.l.b16 %v1455
        %v2070 = vunpack.c.l.b16 %v1456
        %v2071 = vunpack.c.l.b16 %v1457
        %v2072 = vunpack.c.l.b16 %v1458
        %v2073 = vunpack.c.l.b16 %v1459
        %v2074 = vunpack.c.l.b16 %v1460
        %v2075 = vunpack.c.l.b16 %v1461
        %v2076 = vunpack.c.l.b16 %v1462
        %v2077 = vunpack.c.l.b16 %v1463
        %v2078 = vunpack.c.l.b16 %v1464
        %v2079 = vunpack.c.l.b16 %v1465
        %v2080 = vunpack.c.l.b16 %v1466
        %v2081 = vunpack.c.l.b16 %v1467
        %v2082 = vunpack.c.l.b16 %v1468
        %v2083 = vunpack.c.l.b16 %v1469
        %v2084 = vunpack.c.l.b16 %v1470
        %v2085 = vpack.c.b16 %v2038, %v2037
        %v2086 = vpack.c.b16 %v2040, %v2039
        %v2087 = vpack.c.b16 %v2042, %v2041
        %v2088 = vpack.c.b16 %v2044, %v2043
        %v2089 = vpack.c.b16 %v2046, %v2045
        %v2090 = vpack.c.b16 %v2048, %v2047
        %v2091 = vpack.c.b16 %v2050, %v2049
        %v2092 = vpack.c.b16 %v2052, %v2051
        %v2093 = vpack.c.b16 %v2054, %v2053
        %v2094 = vpack.c.b16 %v2056, %v2055
        %v2095 = vpack.c.b16 %v2058, %v2057
        %v2096 = vpack.c.b16 %v2060, %v2059
        %v2097 = vpack.c.b16 %v2062, %v2061
        %v2098 = vpack.c.b16 %v2064, %v2063
        %v2099 = vpack.c.b16 %v2066, %v2065
        %v2100 = vpack.c.b16 %v2068, %v2067
        %v2101 = vpack.c.b16 %v2070, %v2069
        %v2102 = vpack.c.b16 %v2072, %v2071
        %v2103 = vpack.c.b16 %v2074, %v2073
        %v2104 = vpack.c.b16 %v2076, %v2075
        %v2105 = vpack.c.b16 %v2078, %v2077
        %v2106 = vpack.c.b16 %v2080, %v2079
        %v2107 = vpack.c.b16 %v2082, %v2081
        %v2108 = vpack.c.b16 %v2084, %v2083
        %2133 = vmatprep.subr.bf16.mxu0 0
        %2134 = vmatpush1.bf16.msra.mxu0 %v2085
        %2135 = vmatprep.subr.bf16.mxu0 0
        %2136 = vmatpush1.bf16.msra.mxu0 %v2086
        %2137 = vmatprep.subr.bf16.mxu0 0
        %2138 = vmatpush1.bf16.msra.mxu0 %v2087
        %2139 = vmatprep.subr.bf16.mxu0 0
        %2140 = vmatpush1.bf16.msra.mxu0 %v2088
        %2141 = vmatprep.subr.bf16.mxu0 0
        %2142 = vmatpush1.bf16.msra.mxu0 %v2089
        %2143 = vmatprep.subr.bf16.mxu0 0
        %2144 = vmatpush1.bf16.msra.mxu0 %v2090
        %2145 = vmatprep.subr.bf16.mxu0 0
        %2146 = vmatpush1.bf16.msra.mxu0 %v2091
        %2147 = vmatprep.subr.bf16.mxu0 0
        %2148 = vmatpush1.bf16.msra.mxu0 %v2092
        %2149 = vmatprep.subr.bf16.mxu0 0
        %2150 = vmatpush1.bf16.msra.mxu0 %v2093
        %2151 = vmatprep.subr.bf16.mxu0 0
        %2152 = vmatpush1.bf16.msra.mxu0 %v2094
        %2153 = vmatprep.subr.bf16.mxu0 0
        %2154 = vmatpush1.bf16.msra.mxu0 %v2095
        %2155 = vmatprep.subr.bf16.mxu0 0
        %2156 = vmatpush1.bf16.msra.mxu0 %v2096
        %2157 = vmatprep.subr.bf16.mxu0 0
        %2158 = vmatpush1.bf16.msra.mxu0 %v2097
        %2159 = vmatprep.subr.bf16.mxu0 0
        %2160 = vmatpush1.bf16.msra.mxu0 %v2098
        %2161 = vmatprep.subr.bf16.mxu0 0
        %2162 = vmatpush1.bf16.msra.mxu0 %v2099
        %2163 = vmatprep.subr.bf16.mxu0 0
        %2164 = vmatpush1.bf16.msra.mxu0 %v2100
        %2165 = vmatprep.mubr.bf16.mxu0 %v1376
        %2166 = vmatmul.mubr.bf16.gmra.mrb[0].mxu0 %v1375
        %v2167 = vpop.f32.mrb[0].mxu0
        %v2168 = vadd.f32 %v1863, %v2167
        %v2169 = vpop.f32.mrb[0].mxu0
        %v2170 = vpop.f32.mrb[0].mxu0
        %v2171 = vadd.f32 %v1866, %v2170
        %v2172 = vpop.f32.mrb[0].mxu0
        %2173 = vmatprep.mubr.bf16.mxu0 %v1379
        %2174 = vmatmul.mubr.bf16.gmra.mrb[0].mxu0 %v1378
        %v2175 = vpop.f32.mrb[0].mxu0
        %v2176 = vadd.f32 %v1871, %v2175
        %v2177 = vpop.f32.mrb[0].mxu0
        %v2178 = vpop.f32.mrb[0].mxu0
        %v2179 = vadd.f32 %v1874, %v2178
        %v2180 = vpop.f32.mrb[0].mxu0
        %2181 = vmatprep.mubr.bf16.mxu0 %v1382
        %2182 = vmatmul.mubr.bf16.gmra.mrb[0].mxu0 %v1381
        %v2183 = vpop.f32.mrb[0].mxu0
        %v2184 = vadd.f32 %v1879, %v2183
        %v2185 = vpop.f32.mrb[0].mxu0
        %v2186 = vpop.f32.mrb[0].mxu0
        %v2187 = vadd.f32 %v1882, %v2186
        %v2188 = vpop.f32.mrb[0].mxu0
        %2189 = vmatprep.mubr.bf16.mxu0 %v1385
        %2190 = vmatmul.mubr.bf16.gmra.mrb[0].mxu0 %v1384
        %v2191 = vpop.f32.mrb[0].mxu0
        %v2192 = vadd.f32 %v1887, %v2191
        %v2193 = vpop.f32.mrb[0].mxu0
        %v2194 = vpop.f32.mrb[0].mxu0
        %v2195 = vadd.f32 %v1890, %v2194
        %v2196 = vpop.f32.mrb[0].mxu0
        %2197 = vmatprep.mubr.bf16.mxu0 %v1388
        %2198 = vmatmul.mubr.bf16.gmra.mrb[0].mxu0 %v1387
        %v2199 = vpop.f32.mrb[0].mxu0
        %v2200 = vadd.f32 %v1895, %v2199
        %v2201 = vpop.f32.mrb[0].mxu0
        %v2202 = vpop.f32.mrb[0].mxu0
        %v2203 = vadd.f32 %v1898, %v2202
        %v2204 = vpop.f32.mrb[0].mxu0
        %2205 = vmatprep.mubr.bf16.mxu0 %v1391
        %2206 = vmatmul.mubr.bf16.gmra.mrb[0].mxu0 %v1390
        %v2207 = vpop.f32.mrb[0].mxu0
        %v2208 = vadd.f32 %v1903, %v2207
        %v2209 = vpop.f32.mrb[0].mxu0
        %v2210 = vpop.f32.mrb[0].mxu0
        %v2211 = vadd.f32 %v1906, %v2210
        %v2212 = vpop.f32.mrb[0].mxu0
        %2213 = vmatprep.mubr.bf16.mxu0 %v1394
        %2214 = vmatmul.mubr.bf16.gmra.mrb[0].mxu0 %v1393
        %v2215 = vpop.f32.mrb[0].mxu0
        %v2216 = vadd.f32 %v1911, %v2215
        %v2217 = vpop.f32.mrb[0].mxu0
        %v2218 = vpop.f32.mrb[0].mxu0
        %v2219 = vadd.f32 %v1914, %v2218
        %v2220 = vpop.f32.mrb[0].mxu0
        %2221 = vmatprep.mubr.bf16.mxu0 %v1397
        %2222 = vmatmul.mubr.bf16.gmra.mrb[0].mxu0 %v1396
        %v2223 = vpop.f32.mrb[0].mxu0
        %v2224 = vadd.f32 %v1919, %v2223
        %v2225 = vpop.f32.mrb[0].mxu0
        %v2226 = vpop.f32.mrb[0].mxu0
        %v2227 = vadd.f32 %v1922, %v2226
        %v2228 = vpop.f32.mrb[0].mxu0
        %2229 = vmatprep.mubr.bf16.mxu0 %v1400
        %2230 = vmatmul.mubr.bf16.gmra.mrb[0].mxu0 %v1399
        %v2231 = vpop.f32.mrb[0].mxu0
        %v2232 = vadd.f32 %v1927, %v2231
        %v2233 = vpop.f32.mrb[0].mxu0
        %v2234 = vpop.f32.mrb[0].mxu0
        %v2235 = vadd.f32 %v1930, %v2234
        %v2236 = vpop.f32.mrb[0].mxu0
        %2237 = vmatprep.mubr.bf16.mxu0 %v1403
        %2238 = vmatmul.mubr.bf16.gmra.mrb[0].mxu0 %v1402
        %v2239 = vpop.f32.mrb[0].mxu0
        %v2240 = vadd.f32 %v1935, %v2239
        %v2241 = vpop.f32.mrb[0].mxu0
        %v2242 = vpop.f32.mrb[0].mxu0
        %v2243 = vadd.f32 %v1938, %v2242
        %v2244 = vpop.f32.mrb[0].mxu0
        %2245 = vmatprep.mubr.bf16.mxu0 %v1406
        %2246 = vmatmul.mubr.bf16.gmra.mrb[0].mxu0 %v1405
        %v2247 = vpop.f32.mrb[0].mxu0
        %v2248 = vadd.f32 %v1943, %v2247
        %v2249 = vpop.f32.mrb[0].mxu0
        %v2250 = vpop.f32.mrb[0].mxu0
        %v2251 = vadd.f32 %v1946, %v2250
        %v2252 = vpop.f32.mrb[0].mxu0
        %2253 = vmatprep.mubr.bf16.mxu0 %v1409
        %2254 = vmatmul.mubr.bf16.gmra.mrb[0].mxu0 %v1408
        %v2255 = vpop.f32.mrb[0].mxu0
        %v2256 = vadd.f32 %v1951, %v2255
        %v2257 = vpop.f32.mrb[0].mxu0
        %v2258 = vpop.f32.mrb[0].mxu0
        %v2259 = vadd.f32 %v1954, %v2258
        %v2260 = vpop.f32.mrb[0].mxu0
        %2261 = vmatprep.mubr.bf16.mxu0 %v1412
        %2262 = vmatmul.mubr.bf16.gmra.mrb[0].mxu0 %v1411
        %v2263 = vpop.f32.mrb[0].mxu0
        %v2264 = vadd.f32 %v1959, %v2263
        %v2265 = vpop.f32.mrb[0].mxu0
        %v2266 = vpop.f32.mrb[0].mxu0
        %v2267 = vadd.f32 %v1962, %v2266
        %v2268 = vpop.f32.mrb[0].mxu0
        %2269 = vmatprep.mubr.bf16.mxu0 %v1415
        %2270 = vmatmul.mubr.bf16.gmra.mrb[0].mxu0 %v1414
        %v2271 = vpop.f32.mrb[0].mxu0
        %v2272 = vadd.f32 %v1967, %v2271
        %v2273 = vpop.f32.mrb[0].mxu0
        %v2274 = vpop.f32.mrb[0].mxu0
        %v2275 = vadd.f32 %v1970, %v2274
        %v2276 = vpop.f32.mrb[0].mxu0
        %2277 = vmatprep.mubr.bf16.mxu0 %v1418
        %2278 = vmatmul.mubr.bf16.gmra.mrb[0].mxu0 %v1417
        %v2279 = vpop.f32.mrb[0].mxu0
        %v2280 = vadd.f32 %v1975, %v2279
        %v2281 = vpop.f32.mrb[0].mxu0
        %v2282 = vpop.f32.mrb[0].mxu0
        %v2283 = vadd.f32 %v1978, %v2282
        %v2284 = vpop.f32.mrb[0].mxu0
        %2285 = vmatprep.mubr.bf16.mxu0 %v1421
        %2286 = vmatmul.mubr.bf16.gmra.mrb[0].mxu0 %v1420
        %v2287 = vpop.f32.mrb[0].mxu0
        %v2288 = vadd.f32 %v1983, %v2287
        %v2289 = vpop.f32.mrb[0].mxu0
        %v2290 = vpop.f32.mrb[0].mxu0
        %v2291 = vadd.f32 %v1986, %v2290
        %v2292 = vpop.f32.mrb[0].mxu0
        %2293 = vdwg.mxu0
        %2294 = vmatprep.subr.bf16.mxu0 0
        %2295 = vmatpush1.bf16.msra.mxu0 %v2101
        %2296 = vmatprep.subr.bf16.mxu0 0
        %2297 = vmatpush1.bf16.msra.mxu0 %v2102
        %2298 = vmatprep.subr.bf16.mxu0 0
        %2299 = vmatpush1.bf16.msra.mxu0 %v2103
        %2300 = vmatprep.subr.bf16.mxu0 0
        %2301 = vmatpush1.bf16.msra.mxu0 %v2104
        %2302 = vmatprep.subr.bf16.mxu0 0
        %2303 = vmatpush1.bf16.msra.mxu0 %v2105
        %2304 = vmatprep.subr.bf16.mxu0 0
        %2305 = vmatpush1.bf16.msra.mxu0 %v2106
        %2306 = vmatprep.subr.bf16.mxu0 0
        %2307 = vmatpush1.bf16.msra.mxu0 %v2107
        %2308 = vmatprep.subr.bf16.mxu0 0
        %2309 = vmatpush1.bf16.msra.mxu0 %v2108
        %2310 = vmatprep.subr.bf16.mxu0 0
        %2311 = vmatpush1.bf16.msra.mxu0 0
        %2312 = vmatprep.subr.bf16.mxu0 0
        %2313 = vmatpush1.bf16.msra.mxu0 0
        %2314 = vmatprep.subr.bf16.mxu0 0
        %2315 = vmatpush1.bf16.msra.mxu0 0
        %2316 = vmatprep.subr.bf16.mxu0 0
        %2317 = vmatpush1.bf16.msra.mxu0 0
        %2318 = vmatprep.subr.bf16.mxu0 0
        %2319 = vmatpush1.bf16.msra.mxu0 0
        %2320 = vmatprep.subr.bf16.mxu0 0
        %2321 = vmatpush1.bf16.msra.mxu0 0
        %2322 = vmatprep.subr.bf16.mxu0 0
        %2323 = vmatpush1.bf16.msra.mxu0 0
        %2324 = vmatprep.subr.bf16.mxu0 0
        %2325 = vmatpush1.bf16.msra.mxu0 0
        %2326 = vmatprep.mubr.bf16.mxu0 0
        %2327 = vmatmul.mubr.bf16.gmra.mrb[0].mxu0 %v1377
        %v2328 = vpop.f32.mrb[0].mxu0
        %v2329 = vadd.f32 %v2168, %v2328
        %v2330 = vpop.f32.mrb[0].mxu0
        %v2331 = vpop.f32.mrb[0].mxu0
        %v2332 = vadd.f32 %v2171, %v2331
        %v2333 = vpop.f32.mrb[0].mxu0
        %2334 = vmatprep.mubr.bf16.mxu0 0
        %2335 = vmatmul.mubr.bf16.gmra.mrb[0].mxu0 %v1380
        %v2336 = vpop.f32.mrb[0].mxu0
        %v2337 = vadd.f32 %v2176, %v2336
        %v2338 = vpop.f32.mrb[0].mxu0
        %v2339 = vpop.f32.mrb[0].mxu0
        %v2340 = vadd.f32 %v2179, %v2339
        %v2341 = vpop.f32.mrb[0].mxu0
        %2342 = vmatprep.mubr.bf16.mxu0 0
        %2343 = vmatmul.mubr.bf16.gmra.mrb[0].mxu0 %v1383
        %v2344 = vpop.f32.mrb[0].mxu0
        %v2345 = vadd.f32 %v2184, %v2344
        %v2346 = vpop.f32.mrb[0].mxu0
        %v2347 = vpop.f32.mrb[0].mxu0
        %v2348 = vadd.f32 %v2187, %v2347
        %v2349 = vpop.f32.mrb[0].mxu0
        %2350 = vmatprep.mubr.bf16.mxu0 0
        %2351 = vmatmul.mubr.bf16.gmra.mrb[0].mxu0 %v1386
        %v2352 = vpop.f32.mrb[0].mxu0
        %v2353 = vadd.f32 %v2192, %v2352
        %v2354 = vpop.f32.mrb[0].mxu0
        %v2355 = vpop.f32.mrb[0].mxu0
        %v2356 = vadd.f32 %v2195, %v2355
        %v2357 = vpop.f32.mrb[0].mxu0
        %2358 = vmatprep.mubr.bf16.mxu0 0
        %2359 = vmatmul.mubr.bf16.gmra.mrb[0].mxu0 %v1389
        %v2360 = vpop.f32.mrb[0].mxu0
        %v2361 = vadd.f32 %v2200, %v2360
        %v2362 = vpop.f32.mrb[0].mxu0
        %v2363 = vpop.f32.mrb[0].mxu0
        %v2364 = vadd.f32 %v2203, %v2363
        %v2365 = vpop.f32.mrb[0].mxu0
        %2366 = vmatprep.mubr.bf16.mxu0 0
        %2367 = vmatmul.mubr.bf16.gmra.mrb[0].mxu0 %v1392
        %v2368 = vpop.f32.mrb[0].mxu0
        %v2369 = vadd.f32 %v2208, %v2368
        %v2370 = vpop.f32.mrb[0].mxu0
        %v2371 = vpop.f32.mrb[0].mxu0
        %v2372 = vadd.f32 %v2211, %v2371
        %v2373 = vpop.f32.mrb[0].mxu0
        %2374 = vmatprep.mubr.bf16.mxu0 0
        %2375 = vmatmul.mubr.bf16.gmra.mrb[0].mxu0 %v1395
        %v2376 = vpop.f32.mrb[0].mxu0
        %v2377 = vadd.f32 %v2216, %v2376
        %v2378 = vpop.f32.mrb[0].mxu0
        %v2379 = vpop.f32.mrb[0].mxu0
        %v2380 = vadd.f32 %v2219, %v2379
        %v2381 = vpop.f32.mrb[0].mxu0
        %2382 = vmatprep.mubr.bf16.mxu0 0
        %2383 = vmatmul.mubr.bf16.gmra.mrb[0].mxu0 %v1398
        %v2384 = vpop.f32.mrb[0].mxu0
        %v2385 = vadd.f32 %v2224, %v2384
        %v2386 = vpop.f32.mrb[0].mxu0
        %v2387 = vpop.f32.mrb[0].mxu0
        %v2388 = vadd.f32 %v2227, %v2387
        %v2389 = vpop.f32.mrb[0].mxu0
        %2390 = vmatprep.mubr.bf16.mxu0 0
        %2391 = vmatmul.mubr.bf16.gmra.mrb[0].mxu0 %v1401
        %v2392 = vpop.f32.mrb[0].mxu0
        %v2393 = vadd.f32 %v2232, %v2392
        %v2394 = vpop.f32.mrb[0].mxu0
        %v2395 = vpop.f32.mrb[0].mxu0
        %v2396 = vadd.f32 %v2235, %v2395
        %v2397 = vpop.f32.mrb[0].mxu0
        %2398 = vmatprep.mubr.bf16.mxu0 0
        %2399 = vmatmul.mubr.bf16.gmra.mrb[0].mxu0 %v1404
        %v2400 = vpop.f32.mrb[0].mxu0
        %v2401 = vadd.f32 %v2240, %v2400
        %v2402 = vpop.f32.mrb[0].mxu0
        %v2403 = vpop.f32.mrb[0].mxu0
        %v2404 = vadd.f32 %v2243, %v2403
        %v2405 = vpop.f32.mrb[0].mxu0
        %2406 = vmatprep.mubr.bf16.mxu0 0
        %2407 = vmatmul.mubr.bf16.gmra.mrb[0].mxu0 %v1407
        %v2408 = vpop.f32.mrb[0].mxu0
        %v2409 = vadd.f32 %v2248, %v2408
        %v2410 = vpop.f32.mrb[0].mxu0
        %v2411 = vpop.f32.mrb[0].mxu0
        %v2412 = vadd.f32 %v2251, %v2411
        %v2413 = vpop.f32.mrb[0].mxu0
        %2414 = vmatprep.mubr.bf16.mxu0 0
        %2415 = vmatmul.mubr.bf16.gmra.mrb[0].mxu0 %v1410
        %v2416 = vpop.f32.mrb[0].mxu0
        %v2417 = vadd.f32 %v2256, %v2416
        %v2418 = vpop.f32.mrb[0].mxu0
        %v2419 = vpop.f32.mrb[0].mxu0
        %v2420 = vadd.f32 %v2259, %v2419
        %v2421 = vpop.f32.mrb[0].mxu0
        %2422 = vmatprep.mubr.bf16.mxu0 0
        %2423 = vmatmul.mubr.bf16.gmra.mrb[0].mxu0 %v1413
        %v2424 = vpop.f32.mrb[0].mxu0
        %v2425 = vadd.f32 %v2264, %v2424
        %v2426 = vpop.f32.mrb[0].mxu0
        %v2427 = vpop.f32.mrb[0].mxu0
        %v2428 = vadd.f32 %v2267, %v2427
        %v2429 = vpop.f32.mrb[0].mxu0
        %2430 = vmatprep.mubr.bf16.mxu0 0
        %2431 = vmatmul.mubr.bf16.gmra.mrb[0].mxu0 %v1416
        %v2432 = vpop.f32.mrb[0].mxu0
        %v2433 = vadd.f32 %v2272, %v2432
        %v2434 = vpop.f32.mrb[0].mxu0
        %v2435 = vpop.f32.mrb[0].mxu0
        %v2436 = vadd.f32 %v2275, %v2435
        %v2437 = vpop.f32.mrb[0].mxu0
        %2438 = vmatprep.mubr.bf16.mxu0 0
        %2439 = vmatmul.mubr.bf16.gmra.mrb[0].mxu0 %v1419
        %v2440 = vpop.f32.mrb[0].mxu0
        %v2441 = vadd.f32 %v2280, %v2440
        %v2442 = vpop.f32.mrb[0].mxu0
        %v2443 = vpop.f32.mrb[0].mxu0
        %v2444 = vadd.f32 %v2283, %v2443
        %v2445 = vpop.f32.mrb[0].mxu0
        %2446 = vmatprep.mubr.bf16.mxu0 0
        %2447 = vmatmul.mubr.bf16.gmra.mrb[0].mxu0 %v1422
        %v2448 = vpop.f32.mrb[0].mxu0
        %v2449 = vadd.f32 %v2288, %v2448
        %v2450 = vpop.f32.mrb[0].mxu0
        %v2451 = vpop.f32.mrb[0].mxu0
        %v2452 = vadd.f32 %v2291, %v2451
        %v2453 = vpop.f32.mrb[0].mxu0
        %2454 = vdwg.mxu0
        %v2455 = vld [vmem:[#allocation3 + $0x30] sm:$0xff]
        %v2456 = vld [vmem:[#allocation3 + $0x38] sm:$0xff]
        %v2457 = vld [vmem:[#allocation3 + $0x40] sm:$0xff]
        %v2458 = vld [vmem:[#allocation3 + $0x48] sm:$0xff]
        %v2459 = vld [vmem:[#allocation3 + $0x50] sm:$0xff]
        %v2460 = vld [vmem:[#allocation3 + $0x58] sm:$0xff]
        %v2461 = vld [vmem:[#allocation3 + $0x60] sm:$0xff]
        %v2462 = vld [vmem:[#allocation3 + $0x68] sm:$0xff]
        %v2463 = vld [vmem:[#allocation3 + $0x70] sm:$0xff]
        %v2464 = vld [vmem:[#allocation3 + $0x78] sm:$0xff]
        %v2465 = vld [vmem:[#allocation3 + $0x80] sm:$0xff]
        %v2466 = vld [vmem:[#allocation3 + $0x88] sm:$0xff]
        %v2467 = vld [vmem:[#allocation3 + $0x90] sm:$0xff]
        %v2468 = vld [vmem:[#allocation3 + $0x98] sm:$0xff]
        %v2469 = vld [vmem:[#allocation3 + $0xa0] sm:$0xff]
        %v2470 = vld [vmem:[#allocation3 + $0xa8] sm:$0xff]
        %v2471 = vld [vmem:[#allocation3 + $0xb0] sm:$0xff]
        %v2472 = vld [vmem:[#allocation3 + $0xb8] sm:$0xff]
        %v2473 = vld [vmem:[#allocation3 + $0xc0] sm:$0xff]
        %v2474 = vld [vmem:[#allocation3 + $0xc8] sm:$0xff]
        %v2475 = vld [vmem:[#allocation3 + $0xd0] sm:$0xff]
        %v2476 = vld [vmem:[#allocation3 + $0xd8] sm:$0xff]
        %v2477 = vld [vmem:[#allocation3 + $0xe0] sm:$0xff]
        %v2478 = vld [vmem:[#allocation3 + $0xe8] sm:$0xff]
        %v2479 = vld [vmem:[#allocation3 + $0xf0] sm:$0xff]
        %v2480 = vld [vmem:[#allocation3 + $0xf8] sm:$0xff]
        %v2481 = vld [vmem:[#allocation3 + $0x100] sm:$0xff]
        %v2482 = vld [vmem:[#allocation3 + $0x108] sm:$0xff]
        %v2483 = vld [vmem:[#allocation3 + $0x110] sm:$0xff]
        %v2484 = vld [vmem:[#allocation3 + $0x118] sm:$0xff]
        %v2485 = vld [vmem:[#allocation3 + $0x120] sm:$0xff]
        %v2486 = vld [vmem:[#allocation3 + $0x128] sm:$0xff]
        %v2487 = vld [vmem:[#allocation3 + $0x130] sm:$0xff]
        %v2488 = vld [vmem:[#allocation3 + $0x138] sm:$0xff]
        %v2489 = vld [vmem:[#allocation3 + $0x140] sm:$0xff]
        %v2490 = vld [vmem:[#allocation3 + $0x148] sm:$0xff]
        %v2491 = vld [vmem:[#allocation3 + $0x150] sm:$0xff]
        %v2492 = vld [vmem:[#allocation3 + $0x158] sm:$0xff]
        %v2493 = vld [vmem:[#allocation3 + $0x160] sm:$0xff]
        %v2494 = vld [vmem:[#allocation3 + $0x168] sm:$0xff]
        %v2495 = vld [vmem:[#allocation3 + $0x170] sm:$0xff]
        %v2496 = vld [vmem:[#allocation3 + $0x178] sm:$0xff]
        %v2497 = vld [vmem:[#allocation3 + $0x180] sm:$0xff]
        %v2498 = vld [vmem:[#allocation3 + $0x188] sm:$0xff]
        %v2499 = vld [vmem:[#allocation3 + $0x190] sm:$0xff]
        %v2500 = vld [vmem:[#allocation3 + $0x198] sm:$0xff]
        %v2501 = vld [vmem:[#allocation3 + $0x1a0] sm:$0xff]
        %v2502 = vld [vmem:[#allocation3 + $0x1a8] sm:$0xff]
        %s2503 = scalar_lea.vmem %s4, 384
        %v2504 = vld [vmem:[%s2503] sm:$0xf]
        %v2505 = vld [vmem:[%s2503 + $0x4] sm:$0xf]
        %v2506 = vld [vmem:[%s2503 + $0x8] sm:$0xf]
        %v2507 = vld [vmem:[%s2503 + $0xc] sm:$0xf]
        %v2508 = vld [vmem:[%s2503 + $0x10] sm:$0xf]
        %v2509 = vld [vmem:[%s2503 + $0x14] sm:$0xf]
        %v2510 = vld [vmem:[%s2503 + $0x18] sm:$0xf]
        %v2511 = vld [vmem:[%s2503 + $0x1c] sm:$0xf]
        %v2512 = vld [vmem:[%s2503 + $0x20] sm:$0xf]
        %v2513 = vld [vmem:[%s2503 + $0x24] sm:$0xf]
        %v2514 = vld [vmem:[%s2503 + $0x28] sm:$0xf]
        %v2515 = vld [vmem:[%s2503 + $0x2c] sm:$0xf]
        %v2516 = vld [vmem:[%s2503 + $0x30] sm:$0xf]
        %v2517 = vld [vmem:[%s2503 + $0x34] sm:$0xf]
        %v2518 = vld [vmem:[%s2503 + $0x38] sm:$0xf]
        %v2519 = vld [vmem:[%s2503 + $0x3c] sm:$0xf]
        %v2520 = vld [vmem:[%s2503 + $0x40] sm:$0xf]
        %v2521 = vld [vmem:[%s2503 + $0x44] sm:$0xf]
        %v2522 = vld [vmem:[%s2503 + $0x48] sm:$0xf]
        %v2523 = vld [vmem:[%s2503 + $0x4c] sm:$0xf]
        %v2524 = vld [vmem:[%s2503 + $0x50] sm:$0xf]
        %v2525 = vld [vmem:[%s2503 + $0x54] sm:$0xf]
        %v2526 = vld [vmem:[%s2503 + $0x58] sm:$0xf]
        %v2527 = vld [vmem:[%s2503 + $0x5c] sm:$0xf]
        %v2528 = vld [vmem:[%s2503 + $0x60] sm:$0xf]
        %v2529 = vld [vmem:[%s2503 + $0x64] sm:$0xf]
        %v2530 = vld [vmem:[%s2503 + $0x68] sm:$0xf]
        %v2531 = vld [vmem:[%s2503 + $0x6c] sm:$0xf]
        %v2532 = vld [vmem:[%s2503 + $0x70] sm:$0xf]
        %v2533 = vld [vmem:[%s2503 + $0x74] sm:$0xf]
        %v2534 = vld [vmem:[%s2503 + $0x78] sm:$0xf]
        %v2535 = vld [vmem:[%s2503 + $0x7c] sm:$0xf]
        %v2536 = vld [vmem:[%s2503 + $0x80] sm:$0xf]
        %v2537 = vld [vmem:[%s2503 + $0x84] sm:$0xf]
        %v2538 = vld [vmem:[%s2503 + $0x88] sm:$0xf]
        %v2539 = vld [vmem:[%s2503 + $0x8c] sm:$0xf]
        %v2540 = vld [vmem:[%s2503 + $0x90] sm:$0xf]
        %v2541 = vld [vmem:[%s2503 + $0x94] sm:$0xf]
        %v2542 = vld [vmem:[%s2503 + $0x98] sm:$0xf]
        %v2543 = vld [vmem:[%s2503 + $0x9c] sm:$0xf]
        %v2544 = vld [vmem:[%s2503 + $0xa0] sm:$0xf]
        %v2545 = vld [vmem:[%s2503 + $0xa4] sm:$0xf]
        %v2546 = vld [vmem:[%s2503 + $0xa8] sm:$0xf]
        %v2547 = vld [vmem:[%s2503 + $0xac] sm:$0xf]
        %v2548 = vld [vmem:[%s2503 + $0xb0] sm:$0xf]
        %v2549 = vld [vmem:[%s2503 + $0xb4] sm:$0xf]
        %v2550 = vld [vmem:[%s2503 + $0xb8] sm:$0xf]
        %v2551 = vld [vmem:[%s2503 + $0xbc] sm:$0xf]
        %v2600 = vunpack.c.l.b16 %v2504
        %v2601 = vunpack.c.l.b16 %v2505
        %v2602 = vunpack.c.l.b16 %v2506
        %v2603 = vunpack.c.l.b16 %v2507
        %v2604 = vunpack.c.l.b16 %v2508
        %v2605 = vunpack.c.l.b16 %v2509
        %v2606 = vunpack.c.l.b16 %v2510
        %v2607 = vunpack.c.l.b16 %v2511
        %v2608 = vunpack.c.l.b16 %v2512
        %v2609 = vunpack.c.l.b16 %v2513
        %v2610 = vunpack.c.l.b16 %v2514
        %v2611 = vunpack.c.l.b16 %v2515
        %v2612 = vunpack.c.l.b16 %v2516
        %v2613 = vunpack.c.l.b16 %v2517
        %v2614 = vunpack.c.l.b16 %v2518
        %v2615 = vunpack.c.l.b16 %v2519
        %v2616 = vunpack.c.l.b16 %v2520
        %v2617 = vunpack.c.l.b16 %v2521
        %v2618 = vunpack.c.l.b16 %v2522
        %v2619 = vunpack.c.l.b16 %v2523
        %v2620 = vunpack.c.l.b16 %v2524
        %v2621 = vunpack.c.l.b16 %v2525
        %v2622 = vunpack.c.l.b16 %v2526
        %v2623 = vunpack.c.l.b16 %v2527
        %v2624 = vunpack.c.l.b16 %v2528
        %v2625 = vunpack.c.l.b16 %v2529
        %v2626 = vunpack.c.l.b16 %v2530
        %v2627 = vunpack.c.l.b16 %v2531
        %v2628 = vunpack.c.l.b16 %v2532
        %v2629 = vunpack.c.l.b16 %v2533
        %v2630 = vunpack.c.l.b16 %v2534
        %v2631 = vunpack.c.l.b16 %v2535
        %v2632 = vunpack.c.l.b16 %v2536
        %v2633 = vunpack.c.l.b16 %v2537
        %v2634 = vunpack.c.l.b16 %v2538
        %v2635 = vunpack.c.l.b16 %v2539
        %v2636 = vunpack.c.l.b16 %v2540
        %v2637 = vunpack.c.l.b16 %v2541
        %v2638 = vunpack.c.l.b16 %v2542
        %v2639 = vunpack.c.l.b16 %v2543
        %v2640 = vunpack.c.l.b16 %v2544
        %v2641 = vunpack.c.l.b16 %v2545
        %v2642 = vunpack.c.l.b16 %v2546
        %v2643 = vunpack.c.l.b16 %v2547
        %v2644 = vunpack.c.l.b16 %v2548
        %v2645 = vunpack.c.l.b16 %v2549
        %v2646 = vunpack.c.l.b16 %v2550
        %v2647 = vunpack.c.l.b16 %v2551
        %v2648 = vpack.c.b16 %v2601, %v2600
        %v2649 = vpack.c.b16 %v2603, %v2602
        %v2650 = vpack.c.b16 %v2605, %v2604
        %v2651 = vpack.c.b16 %v2607, %v2606
        %v2652 = vpack.c.b16 %v2609, %v2608
        %v2653 = vpack.c.b16 %v2611, %v2610
        %v2654 = vpack.c.b16 %v2613, %v2612
        %v2655 = vpack.c.b16 %v2615, %v2614
        %v2656 = vpack.c.b16 %v2617, %v2616
        %v2657 = vpack.c.b16 %v2619, %v2618
        %v2658 = vpack.c.b16 %v2621, %v2620
        %v2659 = vpack.c.b16 %v2623, %v2622
        %v2660 = vpack.c.b16 %v2625, %v2624
        %v2661 = vpack.c.b16 %v2627, %v2626
        %v2662 = vpack.c.b16 %v2629, %v2628
        %v2663 = vpack.c.b16 %v2631, %v2630
        %v2664 = vpack.c.b16 %v2633, %v2632
        %v2665 = vpack.c.b16 %v2635, %v2634
        %v2666 = vpack.c.b16 %v2637, %v2636
        %v2667 = vpack.c.b16 %v2639, %v2638
        %v2668 = vpack.c.b16 %v2641, %v2640
        %v2669 = vpack.c.b16 %v2643, %v2642
        %v2670 = vpack.c.b16 %v2645, %v2644
        %v2671 = vpack.c.b16 %v2647, %v2646
        %2696 = vmatprep.subr.bf16.mxu0 0
        %2697 = vmatpush1.bf16.msra.mxu0 %v2648
        %2698 = vmatprep.subr.bf16.mxu0 0
        %2699 = vmatpush1.bf16.msra.mxu0 %v2649
        %2700 = vmatprep.subr.bf16.mxu0 0
        %2701 = vmatpush1.bf16.msra.mxu0 %v2650
        %2702 = vmatprep.subr.bf16.mxu0 0
        %2703 = vmatpush1.bf16.msra.mxu0 %v2651
        %2704 = vmatprep.subr.bf16.mxu0 0
        %2705 = vmatpush1.bf16.msra.mxu0 %v2652
        %2706 = vmatprep.subr.bf16.mxu0 0
        %2707 = vmatpush1.bf16.msra.mxu0 %v2653
        %2708 = vmatprep.subr.bf16.mxu0 0
        %2709 = vmatpush1.bf16.msra.mxu0 %v2654
        %2710 = vmatprep.subr.bf16.mxu0 0
        %2711 = vmatpush1.bf16.msra.mxu0 %v2655
        %2712 = vmatprep.subr.bf16.mxu0 0
        %2713 = vmatpush1.bf16.msra.mxu0 %v2656
        %2714 = vmatprep.subr.bf16.mxu0 0
        %2715 = vmatpush1.bf16.msra.mxu0 %v2657
        %2716 = vmatprep.subr.bf16.mxu0 0
        %2717 = vmatpush1.bf16.msra.mxu0 %v2658
        %2718 = vmatprep.subr.bf16.mxu0 0
        %2719 = vmatpush1.bf16.msra.mxu0 %v2659
        %2720 = vmatprep.subr.bf16.mxu0 0
        %2721 = vmatpush1.bf16.msra.mxu0 %v2660
        %2722 = vmatprep.subr.bf16.mxu0 0
        %2723 = vmatpush1.bf16.msra.mxu0 %v2661
        %2724 = vmatprep.subr.bf16.mxu0 0
        %2725 = vmatpush1.bf16.msra.mxu0 %v2662
        %2726 = vmatprep.subr.bf16.mxu0 0
        %2727 = vmatpush1.bf16.msra.mxu0 %v2663
        %2728 = vmatprep.mubr.bf16.mxu0 %v2456
        %2729 = vmatmul.mubr.bf16.gmra.mrb[0].mxu0 %v2455
        %v2730 = vpop.f32.mrb[0].mxu0
        %v2731 = vadd.f32 0.0, %v2730
        %v2732 = vpop.f32.mrb[0].mxu0
        %v2733 = vpop.f32.mrb[0].mxu0
        %v2734 = vadd.f32 0.0, %v2733
        %v2735 = vpop.f32.mrb[0].mxu0
        %2736 = vmatprep.mubr.bf16.mxu0 %v2459
        %2737 = vmatmul.mubr.bf16.gmra.mrb[0].mxu0 %v2458
        %v2738 = vpop.f32.mrb[0].mxu0
        %v2739 = vadd.f32 0.0, %v2738
        %v2740 = vpop.f32.mrb[0].mxu0
        %v2741 = vpop.f32.mrb[0].mxu0
        %v2742 = vadd.f32 0.0, %v2741
        %v2743 = vpop.f32.mrb[0].mxu0
        %2744 = vmatprep.mubr.bf16.mxu0 %v2462
        %2745 = vmatmul.mubr.bf16.gmra.mrb[0].mxu0 %v2461
        %v2746 = vpop.f32.mrb[0].mxu0
        %v2747 = vadd.f32 0.0, %v2746
        %v2748 = vpop.f32.mrb[0].mxu0
        %v2749 = vpop.f32.mrb[0].mxu0
        %v2750 = vadd.f32 0.0, %v2749
        %v2751 = vpop.f32.mrb[0].mxu0
        %2752 = vmatprep.mubr.bf16.mxu0 %v2465
        %2753 = vmatmul.mubr.bf16.gmra.mrb[0].mxu0 %v2464
        %v2754 = vpop.f32.mrb[0].mxu0
        %v2755 = vadd.f32 0.0, %v2754
        %v2756 = vpop.f32.mrb[0].mxu0
        %v2757 = vpop.f32.mrb[0].mxu0
        %v2758 = vadd.f32 0.0, %v2757
        %v2759 = vpop.f32.mrb[0].mxu0
        %2760 = vmatprep.mubr.bf16.mxu0 %v2468
        %2761 = vmatmul.mubr.bf16.gmra.mrb[0].mxu0 %v2467
        %v2762 = vpop.f32.mrb[0].mxu0
        %v2763 = vadd.f32 0.0, %v2762
        %v2764 = vpop.f32.mrb[0].mxu0
        %v2765 = vpop.f32.mrb[0].mxu0
        %v2766 = vadd.f32 0.0, %v2765
        %v2767 = vpop.f32.mrb[0].mxu0
        %2768 = vmatprep.mubr.bf16.mxu0 %v2471
        %2769 = vmatmul.mubr.bf16.gmra.mrb[0].mxu0 %v2470
        %v2770 = vpop.f32.mrb[0].mxu0
        %v2771 = vadd.f32 0.0, %v2770
        %v2772 = vpop.f32.mrb[0].mxu0
        %v2773 = vpop.f32.mrb[0].mxu0
        %v2774 = vadd.f32 0.0, %v2773
        %v2775 = vpop.f32.mrb[0].mxu0
        %2776 = vmatprep.mubr.bf16.mxu0 %v2474
        %2777 = vmatmul.mubr.bf16.gmra.mrb[0].mxu0 %v2473
        %v2778 = vpop.f32.mrb[0].mxu0
        %v2779 = vadd.f32 0.0, %v2778
        %v2780 = vpop.f32.mrb[0].mxu0
        %v2781 = vpop.f32.mrb[0].mxu0
        %v2782 = vadd.f32 0.0, %v2781
        %v2783 = vpop.f32.mrb[0].mxu0
        %2784 = vmatprep.mubr.bf16.mxu0 %v2477
        %2785 = vmatmul.mubr.bf16.gmra.mrb[0].mxu0 %v2476
        %v2786 = vpop.f32.mrb[0].mxu0
        %v2787 = vadd.f32 0.0, %v2786
        %v2788 = vpop.f32.mrb[0].mxu0
        %v2789 = vpop.f32.mrb[0].mxu0
        %v2790 = vadd.f32 0.0, %v2789
        %v2791 = vpop.f32.mrb[0].mxu0
        %2792 = vmatprep.mubr.bf16.mxu0 %v2480
        %2793 = vmatmul.mubr.bf16.gmra.mrb[0].mxu0 %v2479
        %v2794 = vpop.f32.mrb[0].mxu0
        %v2795 = vadd.f32 0.0, %v2794
        %v2796 = vpop.f32.mrb[0].mxu0
        %v2797 = vpop.f32.mrb[0].mxu0
        %v2798 = vadd.f32 0.0, %v2797
        %v2799 = vpop.f32.mrb[0].mxu0
        %2800 = vmatprep.mubr.bf16.mxu0 %v2483
        %2801 = vmatmul.mubr.bf16.gmra.mrb[0].mxu0 %v2482
        %v2802 = vpop.f32.mrb[0].mxu0
        %v2803 = vadd.f32 0.0, %v2802
        %v2804 = vpop.f32.mrb[0].mxu0
        %v2805 = vpop.f32.mrb[0].mxu0
        %v2806 = vadd.f32 0.0, %v2805
        %v2807 = vpop.f32.mrb[0].mxu0
        %2808 = vmatprep.mubr.bf16.mxu0 %v2486
        %2809 = vmatmul.mubr.bf16.gmra.mrb[0].mxu0 %v2485
        %v2810 = vpop.f32.mrb[0].mxu0
        %v2811 = vadd.f32 0.0, %v2810
        %v2812 = vpop.f32.mrb[0].mxu0
        %v2813 = vpop.f32.mrb[0].mxu0
        %v2814 = vadd.f32 0.0, %v2813
        %v2815 = vpop.f32.mrb[0].mxu0
        %2816 = vmatprep.mubr.bf16.mxu0 %v2489
        %2817 = vmatmul.mubr.bf16.gmra.mrb[0].mxu0 %v2488
        %v2818 = vpop.f32.mrb[0].mxu0
        %v2819 = vadd.f32 0.0, %v2818
        %v2820 = vpop.f32.mrb[0].mxu0
        %v2821 = vpop.f32.mrb[0].mxu0
        %v2822 = vadd.f32 0.0, %v2821
        %v2823 = vpop.f32.mrb[0].mxu0
        %2824 = vmatprep.mubr.bf16.mxu0 %v2492
        %2825 = vmatmul.mubr.bf16.gmra.mrb[0].mxu0 %v2491
        %v2826 = vpop.f32.mrb[0].mxu0
        %v2827 = vadd.f32 0.0, %v2826
        %v2828 = vpop.f32.mrb[0].mxu0
        %v2829 = vpop.f32.mrb[0].mxu0
        %v2830 = vadd.f32 0.0, %v2829
        %v2831 = vpop.f32.mrb[0].mxu0
        %2832 = vmatprep.mubr.bf16.mxu0 %v2495
        %2833 = vmatmul.mubr.bf16.gmra.mrb[0].mxu0 %v2494
        %v2834 = vpop.f32.mrb[0].mxu0
        %v2835 = vadd.f32 0.0, %v2834
        %v2836 = vpop.f32.mrb[0].mxu0
        %v2837 = vpop.f32.mrb[0].mxu0
        %v2838 = vadd.f32 0.0, %v2837
        %v2839 = vpop.f32.mrb[0].mxu0
        %2840 = vmatprep.mubr.bf16.mxu0 %v2498
        %2841 = vmatmul.mubr.bf16.gmra.mrb[0].mxu0 %v2497
        %v2842 = vpop.f32.mrb[0].mxu0
        %v2843 = vadd.f32 0.0, %v2842
        %v2844 = vpop.f32.mrb[0].mxu0
        %v2845 = vpop.f32.mrb[0].mxu0
        %v2846 = vadd.f32 0.0, %v2845
        %v2847 = vpop.f32.mrb[0].mxu0
        %2848 = vmatprep.mubr.bf16.mxu0 %v2501
        %2849 = vmatmul.mubr.bf16.gmra.mrb[0].mxu0 %v2500
        %v2850 = vpop.f32.mrb[0].mxu0
        %v2851 = vadd.f32 0.0, %v2850
        %v2852 = vpop.f32.mrb[0].mxu0
        %v2853 = vpop.f32.mrb[0].mxu0
        %v2854 = vadd.f32 0.0, %v2853
        %v2855 = vpop.f32.mrb[0].mxu0
        %2856 = vdwg.mxu0
        %2857 = vmatprep.subr.bf16.mxu0 0
        %2858 = vmatpush1.bf16.msra.mxu0 %v2664
        %2859 = vmatprep.subr.bf16.mxu0 0
        %2860 = vmatpush1.bf16.msra.mxu0 %v2665
        %2861 = vmatprep.subr.bf16.mxu0 0
        %2862 = vmatpush1.bf16.msra.mxu0 %v2666
        %2863 = vmatprep.subr.bf16.mxu0 0
        %2864 = vmatpush1.bf16.msra.mxu0 %v2667
        %2865 = vmatprep.subr.bf16.mxu0 0
        %2866 = vmatpush1.bf16.msra.mxu0 %v2668
        %2867 = vmatprep.subr.bf16.mxu0 0
        %2868 = vmatpush1.bf16.msra.mxu0 %v2669
        %2869 = vmatprep.subr.bf16.mxu0 0
        %2870 = vmatpush1.bf16.msra.mxu0 %v2670
        %2871 = vmatprep.subr.bf16.mxu0 0
        %2872 = vmatpush1.bf16.msra.mxu0 %v2671
        %2873 = vmatprep.subr.bf16.mxu0 0
        %2874 = vmatpush1.bf16.msra.mxu0 0
        %2875 = vmatprep.subr.bf16.mxu0 0
        %2876 = vmatpush1.bf16.msra.mxu0 0
        %2877 = vmatprep.subr.bf16.mxu0 0
        %2878 = vmatpush1.bf16.msra.mxu0 0
        %2879 = vmatprep.subr.bf16.mxu0 0
        %2880 = vmatpush1.bf16.msra.mxu0 0
        %2881 = vmatprep.subr.bf16.mxu0 0
        %2882 = vmatpush1.bf16.msra.mxu0 0
        %2883 = vmatprep.subr.bf16.mxu0 0
        %2884 = vmatpush1.bf16.msra.mxu0 0
        %2885 = vmatprep.subr.bf16.mxu0 0
        %2886 = vmatpush1.bf16.msra.mxu0 0
        %2887 = vmatprep.subr.bf16.mxu0 0
        %2888 = vmatpush1.bf16.msra.mxu0 0
        %2889 = vmatprep.mubr.bf16.mxu0 0
        %2890 = vmatmul.mubr.bf16.gmra.mrb[0].mxu0 %v2457
        %v2891 = vpop.f32.mrb[0].mxu0
        %v2892 = vadd.f32 %v2731, %v2891
        %v2893 = vpop.f32.mrb[0].mxu0
        %v2894 = vpop.f32.mrb[0].mxu0
        %v2895 = vadd.f32 %v2734, %v2894
        %v2896 = vpop.f32.mrb[0].mxu0
        %2897 = vmatprep.mubr.bf16.mxu0 0
        %2898 = vmatmul.mubr.bf16.gmra.mrb[0].mxu0 %v2460
        %v2899 = vpop.f32.mrb[0].mxu0
        %v2900 = vadd.f32 %v2739, %v2899
        %v2901 = vpop.f32.mrb[0].mxu0
        %v2902 = vpop.f32.mrb[0].mxu0
        %v2903 = vadd.f32 %v2742, %v2902
        %v2904 = vpop.f32.mrb[0].mxu0
        %2905 = vmatprep.mubr.bf16.mxu0 0
        %2906 = vmatmul.mubr.bf16.gmra.mrb[0].mxu0 %v2463
        %v2907 = vpop.f32.mrb[0].mxu0
        %v2908 = vadd.f32 %v2747, %v2907
        %v2909 = vpop.f32.mrb[0].mxu0
        %v2910 = vpop.f32.mrb[0].mxu0
        %v2911 = vadd.f32 %v2750, %v2910
        %v2912 = vpop.f32.mrb[0].mxu0
        %2913 = vmatprep.mubr.bf16.mxu0 0
        %2914 = vmatmul.mubr.bf16.gmra.mrb[0].mxu0 %v2466
        %v2915 = vpop.f32.mrb[0].mxu0
        %v2916 = vadd.f32 %v2755, %v2915
        %v2917 = vpop.f32.mrb[0].mxu0
        %v2918 = vpop.f32.mrb[0].mxu0
        %v2919 = vadd.f32 %v2758, %v2918
        %v2920 = vpop.f32.mrb[0].mxu0
        %2921 = vmatprep.mubr.bf16.mxu0 0
        %2922 = vmatmul.mubr.bf16.gmra.mrb[0].mxu0 %v2469
        %v2923 = vpop.f32.mrb[0].mxu0
        %v2924 = vadd.f32 %v2763, %v2923
        %v2925 = vpop.f32.mrb[0].mxu0
        %v2926 = vpop.f32.mrb[0].mxu0
        %v2927 = vadd.f32 %v2766, %v2926
        %v2928 = vpop.f32.mrb[0].mxu0
        %2929 = vmatprep.mubr.bf16.mxu0 0
        %2930 = vmatmul.mubr.bf16.gmra.mrb[0].mxu0 %v2472
        %v2931 = vpop.f32.mrb[0].mxu0
        %v2932 = vadd.f32 %v2771, %v2931
        %v2933 = vpop.f32.mrb[0].mxu0
        %v2934 = vpop.f32.mrb[0].mxu0
        %v2935 = vadd.f32 %v2774, %v2934
        %v2936 = vpop.f32.mrb[0].mxu0
        %2937 = vmatprep.mubr.bf16.mxu0 0
        %2938 = vmatmul.mubr.bf16.gmra.mrb[0].mxu0 %v2475
        %v2939 = vpop.f32.mrb[0].mxu0
        %v2940 = vadd.f32 %v2779, %v2939
        %v2941 = vpop.f32.mrb[0].mxu0
        %v2942 = vpop.f32.mrb[0].mxu0
        %v2943 = vadd.f32 %v2782, %v2942
        %v2944 = vpop.f32.mrb[0].mxu0
        %2945 = vmatprep.mubr.bf16.mxu0 0
        %2946 = vmatmul.mubr.bf16.gmra.mrb[0].mxu0 %v2478
        %v2947 = vpop.f32.mrb[0].mxu0
        %v2948 = vadd.f32 %v2787, %v2947
        %v2949 = vpop.f32.mrb[0].mxu0
        %v2950 = vpop.f32.mrb[0].mxu0
        %v2951 = vadd.f32 %v2790, %v2950
        %v2952 = vpop.f32.mrb[0].mxu0
        %2953 = vmatprep.mubr.bf16.mxu0 0
        %2954 = vmatmul.mubr.bf16.gmra.mrb[0].mxu0 %v2481
        %v2955 = vpop.f32.mrb[0].mxu0
        %v2956 = vadd.f32 %v2795, %v2955
        %v2957 = vpop.f32.mrb[0].mxu0
        %v2958 = vpop.f32.mrb[0].mxu0
        %v2959 = vadd.f32 %v2798, %v2958
        %v2960 = vpop.f32.mrb[0].mxu0
        %2961 = vmatprep.mubr.bf16.mxu0 0
        %2962 = vmatmul.mubr.bf16.gmra.mrb[0].mxu0 %v2484
        %v2963 = vpop.f32.mrb[0].mxu0
        %v2964 = vadd.f32 %v2803, %v2963
        %v2965 = vpop.f32.mrb[0].mxu0
        %v2966 = vpop.f32.mrb[0].mxu0
        %v2967 = vadd.f32 %v2806, %v2966
        %v2968 = vpop.f32.mrb[0].mxu0
        %2969 = vmatprep.mubr.bf16.mxu0 0
        %2970 = vmatmul.mubr.bf16.gmra.mrb[0].mxu0 %v2487
        %v2971 = vpop.f32.mrb[0].mxu0
        %v2972 = vadd.f32 %v2811, %v2971
        %v2973 = vpop.f32.mrb[0].mxu0
        %v2974 = vpop.f32.mrb[0].mxu0
        %v2975 = vadd.f32 %v2814, %v2974
        %v2976 = vpop.f32.mrb[0].mxu0
        %2977 = vmatprep.mubr.bf16.mxu0 0
        %2978 = vmatmul.mubr.bf16.gmra.mrb[0].mxu0 %v2490
        %v2979 = vpop.f32.mrb[0].mxu0
        %v2980 = vadd.f32 %v2819, %v2979
        %v2981 = vpop.f32.mrb[0].mxu0
        %v2982 = vpop.f32.mrb[0].mxu0
        %v2983 = vadd.f32 %v2822, %v2982
        %v2984 = vpop.f32.mrb[0].mxu0
        %2985 = vmatprep.mubr.bf16.mxu0 0
        %2986 = vmatmul.mubr.bf16.gmra.mrb[0].mxu0 %v2493
        %v2987 = vpop.f32.mrb[0].mxu0
        %v2988 = vadd.f32 %v2827, %v2987
        %v2989 = vpop.f32.mrb[0].mxu0
        %v2990 = vpop.f32.mrb[0].mxu0
        %v2991 = vadd.f32 %v2830, %v2990
        %v2992 = vpop.f32.mrb[0].mxu0
        %2993 = vmatprep.mubr.bf16.mxu0 0
        %2994 = vmatmul.mubr.bf16.gmra.mrb[0].mxu0 %v2496
        %v2995 = vpop.f32.mrb[0].mxu0
        %v2996 = vadd.f32 %v2835, %v2995
        %v2997 = vpop.f32.mrb[0].mxu0
        %v2998 = vpop.f32.mrb[0].mxu0
        %v2999 = vadd.f32 %v2838, %v2998
        %v3000 = vpop.f32.mrb[0].mxu0
        %3001 = vmatprep.mubr.bf16.mxu0 0
        %3002 = vmatmul.mubr.bf16.gmra.mrb[0].mxu0 %v2499
        %v3003 = vpop.f32.mrb[0].mxu0
        %v3004 = vadd.f32 %v2843, %v3003
        %v3005 = vpop.f32.mrb[0].mxu0
        %v3006 = vpop.f32.mrb[0].mxu0
        %v3007 = vadd.f32 %v2846, %v3006
        %v3008 = vpop.f32.mrb[0].mxu0
        %3009 = vmatprep.mubr.bf16.mxu0 0
        %3010 = vmatmul.mubr.bf16.gmra.mrb[0].mxu0 %v2502
        %v3011 = vpop.f32.mrb[0].mxu0
        %v3012 = vadd.f32 %v2851, %v3011
        %v3013 = vpop.f32.mrb[0].mxu0
        %v3014 = vpop.f32.mrb[0].mxu0
        %v3015 = vadd.f32 %v2854, %v3014
        %v3016 = vpop.f32.mrb[0].mxu0
        %3017 = vdwg.mxu0
        %v3018 = vadd.f32 %v2329, %v2892
        %v3019 = vadd.f32 %v2332, %v2895
        %v3020 = vadd.f32 %v2337, %v2900
        %v3021 = vadd.f32 %v2340, %v2903
        %v3022 = vadd.f32 %v2345, %v2908
        %v3023 = vadd.f32 %v2348, %v2911
        %v3024 = vadd.f32 %v2353, %v2916
        %v3025 = vadd.f32 %v2356, %v2919
        %v3026 = vadd.f32 %v2361, %v2924
        %v3027 = vadd.f32 %v2364, %v2927
        %v3028 = vadd.f32 %v2369, %v2932
        %v3029 = vadd.f32 %v2372, %v2935
        %v3030 = vadd.f32 %v2377, %v2940
        %v3031 = vadd.f32 %v2380, %v2943
        %v3032 = vadd.f32 %v2385, %v2948
        %v3033 = vadd.f32 %v2388, %v2951
        %v3034 = vadd.f32 %v2393, %v2956
        %v3035 = vadd.f32 %v2396, %v2959
        %v3036 = vadd.f32 %v2401, %v2964
        %v3037 = vadd.f32 %v2404, %v2967
        %v3038 = vadd.f32 %v2409, %v2972
        %v3039 = vadd.f32 %v2412, %v2975
        %v3040 = vadd.f32 %v2417, %v2980
        %v3041 = vadd.f32 %v2420, %v2983
        %v3042 = vadd.f32 %v2425, %v2988
        %v3043 = vadd.f32 %v2428, %v2991
        %v3044 = vadd.f32 %v2433, %v2996
        %v3045 = vadd.f32 %v2436, %v2999
        %v3046 = vadd.f32 %v2441, %v3004
        %v3047 = vadd.f32 %v2444, %v3007
        %v3048 = vadd.f32 %v2449, %v3012
        %v3049 = vadd.f32 %v2452, %v3015
        %v3050 = vld [vmem:[%s7] sm:$0xff]
        %v3051 = vld [vmem:[%s7 + $0x8] sm:$0xff]
        %v3052 = vld [vmem:[%s7 + $0x10] sm:$0xff]
        %v3053 = vld [vmem:[%s7 + $0x18] sm:$0xff]
        %v3054 = vld [vmem:[%s7 + $0x20] sm:$0xff]
        %v3055 = vld [vmem:[%s7 + $0x28] sm:$0xff]
        %v3056 = vld [vmem:[%s7 + $0x30] sm:$0xff]
        %v3057 = vld [vmem:[%s7 + $0x38] sm:$0xff]
        %v3058 = vld [vmem:[%s7 + $0x40] sm:$0xff]
        %v3059 = vld [vmem:[%s7 + $0x48] sm:$0xff]
        %v3060 = vld [vmem:[%s7 + $0x50] sm:$0xff]
        %v3061 = vld [vmem:[%s7 + $0x58] sm:$0xff]
        %v3062 = vld [vmem:[%s7 + $0x60] sm:$0xff]
        %v3063 = vld [vmem:[%s7 + $0x68] sm:$0xff]
        %v3064 = vld [vmem:[%s7 + $0x70] sm:$0xff]
        %v3065 = vld [vmem:[%s7 + $0x78] sm:$0xff]
        %3066 = vmatprep.subr.mxu0 0.0
        %3067 = vmatpush1.msra.mxu0 %v3018
        %3068 = vmatprep.subr.mxu0 0.0
        %3069 = vmatpush1.msra.mxu0 %v3019
        %3070 = vmatprep.subr.mxu0 0.0
        %3071 = vmatpush1.msra.mxu0 %v3020
        %3072 = vmatprep.subr.mxu0 0.0
        %3073 = vmatpush1.msra.mxu0 %v3021
        %3074 = vmatprep.subr.mxu0 0.0
        %3075 = vmatpush1.msra.mxu0 %v3022
        %3076 = vmatprep.subr.mxu0 0.0
        %3077 = vmatpush1.msra.mxu0 %v3023
        %3078 = vmatprep.subr.mxu0 0.0
        %3079 = vmatpush1.msra.mxu0 %v3024
        %3080 = vmatprep.subr.mxu0 0.0
        %3081 = vmatpush1.msra.mxu0 %v3025
        %3082 = vmatprep.subr.mxu0 0.0
        %3083 = vmatpush1.msra.mxu0 %v3026
        %3084 = vmatprep.subr.mxu0 0.0
        %3085 = vmatpush1.msra.mxu0 %v3027
        %3086 = vmatprep.subr.mxu0 0.0
        %3087 = vmatpush1.msra.mxu0 %v3028
        %3088 = vmatprep.subr.mxu0 0.0
        %3089 = vmatpush1.msra.mxu0 %v3029
        %3090 = vmatprep.subr.mxu0 0.0
        %3091 = vmatpush1.msra.mxu0 %v3030
        %3092 = vmatprep.subr.mxu0 0.0
        %3093 = vmatpush1.msra.mxu0 %v3031
        %3094 = vmatprep.subr.mxu0 0.0
        %3095 = vmatpush1.msra.mxu0 %v3032
        %3096 = vmatprep.subr.mxu0 0.0
        %3097 = vmatpush1.msra.mxu0 %v3033
        %3098 = vmatprep.subr.mxu0 0.0
        %3099 = vmatpush1.msra.mxu0 %v3034
        %3100 = vmatprep.subr.mxu0 0.0
        %3101 = vmatpush1.msra.mxu0 %v3035
        %3102 = vmatprep.subr.mxu0 0.0
        %3103 = vmatpush1.msra.mxu0 %v3036
        %3104 = vmatprep.subr.mxu0 0.0
        %3105 = vmatpush1.msra.mxu0 %v3037
        %3106 = vmatprep.subr.mxu0 0.0
        %3107 = vmatpush1.msra.mxu0 %v3038
        %3108 = vmatprep.subr.mxu0 0.0
        %3109 = vmatpush1.msra.mxu0 %v3039
        %3110 = vmatprep.subr.mxu0 0.0
        %3111 = vmatpush1.msra.mxu0 %v3040
        %3112 = vmatprep.subr.mxu0 0.0
        %3113 = vmatpush1.msra.mxu0 %v3041
        %3114 = vmatprep.subr.mxu0 0.0
        %3115 = vmatpush1.msra.mxu0 %v3042
        %3116 = vmatprep.subr.mxu0 0.0
        %3117 = vmatpush1.msra.mxu0 %v3043
        %3118 = vmatprep.subr.mxu0 0.0
        %3119 = vmatpush1.msra.mxu0 %v3044
        %3120 = vmatprep.subr.mxu0 0.0
        %3121 = vmatpush1.msra.mxu0 %v3045
        %3122 = vmatprep.subr.mxu0 0.0
        %3123 = vmatpush1.msra.mxu0 %v3046
        %3124 = vmatprep.subr.mxu0 0.0
        %3125 = vmatpush1.msra.mxu0 %v3047
        %3126 = vmatprep.subr.mxu0 0.0
        %3127 = vmatpush1.msra.mxu0 %v3048
        %3128 = vmatprep.subr.mxu0 0.0
        %3129 = vmatpush1.msra.mxu0 %v3049
        %3130 = vmatprep.mubr.f32.mxu0 1.0
        %3131 = vmatmul.mubr.f32.gmra.mrb[0].mxu0 1.0
        %v3132 = vpop.f32.mrb[0].mxu0
        %v3133 = vadd.f32 0.0, %v3132
        %v3134 = vpop.f32.mrb[0].mxu0
        %3135 = vdwg.mxu0
        %3136 = vmatprep.subr.mxu0 0.0
        %3137 = vmatpush1.msra.mxu0 %v3050
        %3138 = vmatprep.subr.mxu0 0.0
        %3139 = vmatpush1.msra.mxu0 %v3051
        %3140 = vmatprep.subr.mxu0 0.0
        %3141 = vmatpush1.msra.mxu0 %v3052
        %3142 = vmatprep.subr.mxu0 0.0
        %3143 = vmatpush1.msra.mxu0 %v3053
        %3144 = vmatprep.subr.mxu0 0.0
        %3145 = vmatpush1.msra.mxu0 %v3054
        %3146 = vmatprep.subr.mxu0 0.0
        %3147 = vmatpush1.msra.mxu0 %v3055
        %3148 = vmatprep.subr.mxu0 0.0
        %3149 = vmatpush1.msra.mxu0 %v3056
        %3150 = vmatprep.subr.mxu0 0.0
        %3151 = vmatpush1.msra.mxu0 %v3057
        %3152 = vmatprep.subr.mxu0 0.0
        %3153 = vmatpush1.msra.mxu0 %v3058
        %3154 = vmatprep.subr.mxu0 0.0
        %3155 = vmatpush1.msra.mxu0 %v3059
        %3156 = vmatprep.subr.mxu0 0.0
        %3157 = vmatpush1.msra.mxu0 %v3060
        %3158 = vmatprep.subr.mxu0 0.0
        %3159 = vmatpush1.msra.mxu0 %v3061
        %3160 = vmatprep.subr.mxu0 0.0
        %3161 = vmatpush1.msra.mxu0 %v3062
        %3162 = vmatprep.subr.mxu0 0.0
        %3163 = vmatpush1.msra.mxu0 %v3063
        %3164 = vmatprep.subr.mxu0 0.0
        %3165 = vmatpush1.msra.mxu0 %v3064
        %3166 = vmatprep.subr.mxu0 0.0
        %3167 = vmatpush1.msra.mxu0 %v3065
        %3168 = vmatprep.subr.mxu0 0.0
        %3169 = vmatpush1.msra.mxu0 0.0
        %3170 = vmatprep.subr.mxu0 0.0
        %3171 = vmatpush1.msra.mxu0 0.0
        %3172 = vmatprep.subr.mxu0 0.0
        %3173 = vmatpush1.msra.mxu0 0.0
        %3174 = vmatprep.subr.mxu0 0.0
        %3175 = vmatpush1.msra.mxu0 0.0
        %3176 = vmatprep.subr.mxu0 0.0
        %3177 = vmatpush1.msra.mxu0 0.0
        %3178 = vmatprep.subr.mxu0 0.0
        %3179 = vmatpush1.msra.mxu0 0.0
        %3180 = vmatprep.subr.mxu0 0.0
        %3181 = vmatpush1.msra.mxu0 0.0
        %3182 = vmatprep.subr.mxu0 0.0
        %3183 = vmatpush1.msra.mxu0 0.0
        %3184 = vmatprep.subr.mxu0 0.0
        %3185 = vmatpush1.msra.mxu0 0.0
        %3186 = vmatprep.subr.mxu0 0.0
        %3187 = vmatpush1.msra.mxu0 0.0
        %3188 = vmatprep.subr.mxu0 0.0
        %3189 = vmatpush1.msra.mxu0 0.0
        %3190 = vmatprep.subr.mxu0 0.0
        %3191 = vmatpush1.msra.mxu0 0.0
        %3192 = vmatprep.subr.mxu0 0.0
        %3193 = vmatpush1.msra.mxu0 0.0
        %3194 = vmatprep.subr.mxu0 0.0
        %3195 = vmatpush1.msra.mxu0 0.0
        %3196 = vmatprep.subr.mxu0 0.0
        %3197 = vmatpush1.msra.mxu0 0.0
        %3198 = vmatprep.subr.mxu0 0.0
        %3199 = vmatpush1.msra.mxu0 0.0
        %3200 = vmatprep.mubr.f32.mxu0 0.0
        %3201 = vmatmul.mubr.f32.gmra.mrb[0].mxu0 %v3133
        %v3202 = vpop.f32.mrb[0].mxu0
        %v3203 = vadd.f32 0.0, %v3202
        %v3204 = vpop.f32.mrb[0].mxu0
        %3205 = vdwg.mxu0
        %v3206 = vmul.f32 %v3203, 0.001953125
        %v3207 = vlaneseq
        %v3208 = vshrl.u32 %v3207, 7
        %v3209 = vsub.s32 0, %v3208
        %v3210 = vrot.slane %v3206, %v3209
        %v3211 = vsub.f32 %v3018, %v3210
        %v3212 = vsub.f32 %v3019, %v3210
        %v3213 = vsub.f32 %v3020, %v3210
        %v3214 = vsub.f32 %v3021, %v3210
        %v3215 = vsub.f32 %v3022, %v3210
        %v3216 = vsub.f32 %v3023, %v3210
        %v3217 = vsub.f32 %v3024, %v3210
        %v3218 = vsub.f32 %v3025, %v3210
        %v3219 = vsub.f32 %v3026, %v3210
        %v3220 = vsub.f32 %v3027, %v3210
        %v3221 = vsub.f32 %v3028, %v3210
        %v3222 = vsub.f32 %v3029, %v3210
        %v3223 = vsub.f32 %v3030, %v3210
        %v3224 = vsub.f32 %v3031, %v3210
        %v3225 = vsub.f32 %v3032, %v3210
        %v3226 = vsub.f32 %v3033, %v3210
        %v3227 = vsub.f32 %v3034, %v3210
        %v3228 = vsub.f32 %v3035, %v3210
        %v3229 = vsub.f32 %v3036, %v3210
        %v3230 = vsub.f32 %v3037, %v3210
        %v3231 = vsub.f32 %v3038, %v3210
        %v3232 = vsub.f32 %v3039, %v3210
        %v3233 = vsub.f32 %v3040, %v3210
        %v3234 = vsub.f32 %v3041, %v3210
        %v3235 = vsub.f32 %v3042, %v3210
        %v3236 = vsub.f32 %v3043, %v3210
        %v3237 = vsub.f32 %v3044, %v3210
        %v3238 = vsub.f32 %v3045, %v3210
        %v3239 = vsub.f32 %v3046, %v3210
        %v3240 = vsub.f32 %v3047, %v3210
        %v3241 = vsub.f32 %v3048, %v3210
        %v3242 = vsub.f32 %v3049, %v3210
        %v3243 = vmul.f32 %v3211, %v3211
        %v3244 = vmul.f32 %v3212, %v3212
        %v3245 = vmul.f32 %v3213, %v3213
        %v3246 = vmul.f32 %v3214, %v3214
        %v3247 = vmul.f32 %v3215, %v3215
        %v3248 = vmul.f32 %v3216, %v3216
        %v3249 = vmul.f32 %v3217, %v3217
        %v3250 = vmul.f32 %v3218, %v3218
        %v3251 = vmul.f32 %v3219, %v3219
        %v3252 = vmul.f32 %v3220, %v3220
        %v3253 = vmul.f32 %v3221, %v3221
        %v3254 = vmul.f32 %v3222, %v3222
        %v3255 = vmul.f32 %v3223, %v3223
        %v3256 = vmul.f32 %v3224, %v3224
        %v3257 = vmul.f32 %v3225, %v3225
        %v3258 = vmul.f32 %v3226, %v3226
        %v3259 = vmul.f32 %v3227, %v3227
        %v3260 = vmul.f32 %v3228, %v3228
        %v3261 = vmul.f32 %v3229, %v3229
        %v3262 = vmul.f32 %v3230, %v3230
        %v3263 = vmul.f32 %v3231, %v3231
        %v3264 = vmul.f32 %v3232, %v3232
        %v3265 = vmul.f32 %v3233, %v3233
        %v3266 = vmul.f32 %v3234, %v3234
        %v3267 = vmul.f32 %v3235, %v3235
        %v3268 = vmul.f32 %v3236, %v3236
        %v3269 = vmul.f32 %v3237, %v3237
        %v3270 = vmul.f32 %v3238, %v3238
        %v3271 = vmul.f32 %v3239, %v3239
        %v3272 = vmul.f32 %v3240, %v3240
        %v3273 = vmul.f32 %v3241, %v3241
        %v3274 = vmul.f32 %v3242, %v3242
        %3275 = vmatprep.subr.mxu0 0.0
        %3276 = vmatpush1.msra.mxu0 %v3243
        %3277 = vmatprep.subr.mxu0 0.0
        %3278 = vmatpush1.msra.mxu0 %v3244
        %3279 = vmatprep.subr.mxu0 0.0
        %3280 = vmatpush1.msra.mxu0 %v3245
        %3281 = vmatprep.subr.mxu0 0.0
        %3282 = vmatpush1.msra.mxu0 %v3246
        %3283 = vmatprep.subr.mxu0 0.0
        %3284 = vmatpush1.msra.mxu0 %v3247
        %3285 = vmatprep.subr.mxu0 0.0
        %3286 = vmatpush1.msra.mxu0 %v3248
        %3287 = vmatprep.subr.mxu0 0.0
        %3288 = vmatpush1.msra.mxu0 %v3249
        %3289 = vmatprep.subr.mxu0 0.0
        %3290 = vmatpush1.msra.mxu0 %v3250
        %3291 = vmatprep.subr.mxu0 0.0
        %3292 = vmatpush1.msra.mxu0 %v3251
        %3293 = vmatprep.subr.mxu0 0.0
        %3294 = vmatpush1.msra.mxu0 %v3252
        %3295 = vmatprep.subr.mxu0 0.0
        %3296 = vmatpush1.msra.mxu0 %v3253
        %3297 = vmatprep.subr.mxu0 0.0
        %3298 = vmatpush1.msra.mxu0 %v3254
        %3299 = vmatprep.subr.mxu0 0.0
        %3300 = vmatpush1.msra.mxu0 %v3255
        %3301 = vmatprep.subr.mxu0 0.0
        %3302 = vmatpush1.msra.mxu0 %v3256
        %3303 = vmatprep.subr.mxu0 0.0
        %3304 = vmatpush1.msra.mxu0 %v3257
        %3305 = vmatprep.subr.mxu0 0.0
        %3306 = vmatpush1.msra.mxu0 %v3258
        %3307 = vmatprep.subr.mxu0 0.0
        %3308 = vmatpush1.msra.mxu0 %v3259
        %3309 = vmatprep.subr.mxu0 0.0
        %3310 = vmatpush1.msra.mxu0 %v3260
        %3311 = vmatprep.subr.mxu0 0.0
        %3312 = vmatpush1.msra.mxu0 %v3261
        %3313 = vmatprep.subr.mxu0 0.0
        %3314 = vmatpush1.msra.mxu0 %v3262
        %3315 = vmatprep.subr.mxu0 0.0
        %3316 = vmatpush1.msra.mxu0 %v3263
        %3317 = vmatprep.subr.mxu0 0.0
        %3318 = vmatpush1.msra.mxu0 %v3264
        %3319 = vmatprep.subr.mxu0 0.0
        %3320 = vmatpush1.msra.mxu0 %v3265
        %3321 = vmatprep.subr.mxu0 0.0
        %3322 = vmatpush1.msra.mxu0 %v3266
        %3323 = vmatprep.subr.mxu0 0.0
        %3324 = vmatpush1.msra.mxu0 %v3267
        %3325 = vmatprep.subr.mxu0 0.0
        %3326 = vmatpush1.msra.mxu0 %v3268
        %3327 = vmatprep.subr.mxu0 0.0
        %3328 = vmatpush1.msra.mxu0 %v3269
        %3329 = vmatprep.subr.mxu0 0.0
        %3330 = vmatpush1.msra.mxu0 %v3270
        %3331 = vmatprep.subr.mxu0 0.0
        %3332 = vmatpush1.msra.mxu0 %v3271
        %3333 = vmatprep.subr.mxu0 0.0
        %3334 = vmatpush1.msra.mxu0 %v3272
        %3335 = vmatprep.subr.mxu0 0.0
        %3336 = vmatpush1.msra.mxu0 %v3273
        %3337 = vmatprep.subr.mxu0 0.0
        %3338 = vmatpush1.msra.mxu0 %v3274
        %3339 = vmatprep.mubr.f32.mxu0 1.0
        %3340 = vmatmul.mubr.f32.gmra.mrb[0].mxu0 1.0
        %v3341 = vpop.f32.mrb[0].mxu0
        %v3342 = vadd.f32 0.0, %v3341
        %v3343 = vpop.f32.mrb[0].mxu0
        %3344 = vdwg.mxu0
        %3345 = vmatprep.subr.mxu0 0.0
        %3346 = vmatpush1.msra.mxu0 %v3050
        %3347 = vmatprep.subr.mxu0 0.0
        %3348 = vmatpush1.msra.mxu0 %v3051
        %3349 = vmatprep.subr.mxu0 0.0
        %3350 = vmatpush1.msra.mxu0 %v3052
        %3351 = vmatprep.subr.mxu0 0.0
        %3352 = vmatpush1.msra.mxu0 %v3053
        %3353 = vmatprep.subr.mxu0 0.0
        %3354 = vmatpush1.msra.mxu0 %v3054
        %3355 = vmatprep.subr.mxu0 0.0
        %3356 = vmatpush1.msra.mxu0 %v3055
        %3357 = vmatprep.subr.mxu0 0.0
        %3358 = vmatpush1.msra.mxu0 %v3056
        %3359 = vmatprep.subr.mxu0 0.0
        %3360 = vmatpush1.msra.mxu0 %v3057
        %3361 = vmatprep.subr.mxu0 0.0
        %3362 = vmatpush1.msra.mxu0 %v3058
        %3363 = vmatprep.subr.mxu0 0.0
        %3364 = vmatpush1.msra.mxu0 %v3059
        %3365 = vmatprep.subr.mxu0 0.0
        %3366 = vmatpush1.msra.mxu0 %v3060
        %3367 = vmatprep.subr.mxu0 0.0
        %3368 = vmatpush1.msra.mxu0 %v3061
        %3369 = vmatprep.subr.mxu0 0.0
        %3370 = vmatpush1.msra.mxu0 %v3062
        %3371 = vmatprep.subr.mxu0 0.0
        %3372 = vmatpush1.msra.mxu0 %v3063
        %3373 = vmatprep.subr.mxu0 0.0
        %3374 = vmatpush1.msra.mxu0 %v3064
        %3375 = vmatprep.subr.mxu0 0.0
        %3376 = vmatpush1.msra.mxu0 %v3065
        %3377 = vmatprep.subr.mxu0 0.0
        %3378 = vmatpush1.msra.mxu0 0.0
        %3379 = vmatprep.subr.mxu0 0.0
        %3380 = vmatpush1.msra.mxu0 0.0
        %3381 = vmatprep.subr.mxu0 0.0
        %3382 = vmatpush1.msra.mxu0 0.0
        %3383 = vmatprep.subr.mxu0 0.0
        %3384 = vmatpush1.msra.mxu0 0.0
        %3385 = vmatprep.subr.mxu0 0.0
        %3386 = vmatpush1.msra.mxu0 0.0
        %3387 = vmatprep.subr.mxu0 0.0
        %3388 = vmatpush1.msra.mxu0 0.0
        %3389 = vmatprep.subr.mxu0 0.0
        %3390 = vmatpush1.msra.mxu0 0.0
        %3391 = vmatprep.subr.mxu0 0.0
        %3392 = vmatpush1.msra.mxu0 0.0
        %3393 = vmatprep.subr.mxu0 0.0
        %3394 = vmatpush1.msra.mxu0 0.0
        %3395 = vmatprep.subr.mxu0 0.0
        %3396 = vmatpush1.msra.mxu0 0.0
        %3397 = vmatprep.subr.mxu0 0.0
        %3398 = vmatpush1.msra.mxu0 0.0
        %3399 = vmatprep.subr.mxu0 0.0
        %3400 = vmatpush1.msra.mxu0 0.0
        %3401 = vmatprep.subr.mxu0 0.0
        %3402 = vmatpush1.msra.mxu0 0.0
        %3403 = vmatprep.subr.mxu0 0.0
        %3404 = vmatpush1.msra.mxu0 0.0
        %3405 = vmatprep.subr.mxu0 0.0
        %3406 = vmatpush1.msra.mxu0 0.0
        %3407 = vmatprep.subr.mxu0 0.0
        %3408 = vmatpush1.msra.mxu0 0.0
        %3409 = vmatprep.mubr.f32.mxu0 0.0
        %3410 = vmatmul.mubr.f32.gmra.mrb[0].mxu0 %v3342
        %v3411 = vpop.f32.mrb[0].mxu0
        %v3412 = vadd.f32 0.0, %v3411
        %v3413 = vpop.f32.mrb[0].mxu0
        %3414 = vdwg.mxu0
        %v3415 = vmul.f32 %v3412, 0.001953125
        %v3416 = vadd.f32 %v3415, 1e-05
        %v3417 = vrsqrt.pop %v3416
        %v3418 = vld [vmem:[%s5] sm:$0x1]
        %v3419 = vmul.f32 %v3417, %v3418
        %v3420 = vlaneseq
        %v3421 = vshrl.u32 %v3420, 7
        %v3422 = vsub.s32 0, %v3421
        %v3423 = vrot.slane %v3419, %v3422
        %v3424 = vmul.f32 %v3211, %v3423
        %v3425 = vmul.f32 %v3212, %v3423
        %v3426 = vmul.f32 %v3213, %v3423
        %v3427 = vmul.f32 %v3214, %v3423
        %v3428 = vmul.f32 %v3215, %v3423
        %v3429 = vmul.f32 %v3216, %v3423
        %v3430 = vmul.f32 %v3217, %v3423
        %v3431 = vmul.f32 %v3218, %v3423
        %v3432 = vmul.f32 %v3219, %v3423
        %v3433 = vmul.f32 %v3220, %v3423
        %v3434 = vmul.f32 %v3221, %v3423
        %v3435 = vmul.f32 %v3222, %v3423
        %v3436 = vmul.f32 %v3223, %v3423
        %v3437 = vmul.f32 %v3224, %v3423
        %v3438 = vmul.f32 %v3225, %v3423
        %v3439 = vmul.f32 %v3226, %v3423
        %v3440 = vmul.f32 %v3227, %v3423
        %v3441 = vmul.f32 %v3228, %v3423
        %v3442 = vmul.f32 %v3229, %v3423
        %v3443 = vmul.f32 %v3230, %v3423
        %v3444 = vmul.f32 %v3231, %v3423
        %v3445 = vmul.f32 %v3232, %v3423
        %v3446 = vmul.f32 %v3233, %v3423
        %v3447 = vmul.f32 %v3234, %v3423
        %v3448 = vmul.f32 %v3235, %v3423
        %v3449 = vmul.f32 %v3236, %v3423
        %v3450 = vmul.f32 %v3237, %v3423
        %v3451 = vmul.f32 %v3238, %v3423
        %v3452 = vmul.f32 %v3239, %v3423
        %v3453 = vmul.f32 %v3240, %v3423
        %v3454 = vmul.f32 %v3241, %v3423
        %v3455 = vmul.f32 %v3242, %v3423
        %v3456 = vld [vmem:[%s6] sm:$0x1]
        %v3458 = vlaneseq
        %v3459 = vshrl.u32 %v3458, 7
        %v3460 = vsub.s32 0, %v3459
        %v3461 = vrot.slane %v3456, %v3460
        %v3463 = vadd.f32 %v3424, %v3461
        %v3464 = vadd.f32 %v3425, %v3461
        %v3465 = vadd.f32 %v3426, %v3461
        %v3466 = vadd.f32 %v3427, %v3461
        %v3467 = vadd.f32 %v3428, %v3461
        %v3468 = vadd.f32 %v3429, %v3461
        %v3469 = vadd.f32 %v3430, %v3461
        %v3470 = vadd.f32 %v3431, %v3461
        %v3471 = vadd.f32 %v3432, %v3461
        %v3472 = vadd.f32 %v3433, %v3461
        %v3473 = vadd.f32 %v3434, %v3461
        %v3474 = vadd.f32 %v3435, %v3461
        %v3475 = vadd.f32 %v3436, %v3461
        %v3476 = vadd.f32 %v3437, %v3461
        %v3477 = vadd.f32 %v3438, %v3461
        %v3478 = vadd.f32 %v3439, %v3461
        %v3479 = vadd.f32 %v3440, %v3461
        %v3480 = vadd.f32 %v3441, %v3461
        %v3481 = vadd.f32 %v3442, %v3461
        %v3482 = vadd.f32 %v3443, %v3461
        %v3483 = vadd.f32 %v3444, %v3461
        %v3484 = vadd.f32 %v3445, %v3461
        %v3485 = vadd.f32 %v3446, %v3461
        %v3486 = vadd.f32 %v3447, %v3461
        %v3487 = vadd.f32 %v3448, %v3461
        %v3488 = vadd.f32 %v3449, %v3461
        %v3489 = vadd.f32 %v3450, %v3461
        %v3490 = vadd.f32 %v3451, %v3461
        %v3491 = vadd.f32 %v3452, %v3461
        %v3492 = vadd.f32 %v3453, %v3461
        %v3493 = vadd.f32 %v3454, %v3461
        %v3494 = vadd.f32 %v3455, %v3461
        %v3495 = vmax.f32 %v3463, 0.0
        %v3496 = vmax.f32 %v3464, 0.0
        %v3497 = vmax.f32 %v3465, 0.0
        %v3498 = vmax.f32 %v3466, 0.0
        %v3499 = vmax.f32 %v3467, 0.0
        %v3500 = vmax.f32 %v3468, 0.0
        %v3501 = vmax.f32 %v3469, 0.0
        %v3502 = vmax.f32 %v3470, 0.0
        %v3503 = vmax.f32 %v3471, 0.0
        %v3504 = vmax.f32 %v3472, 0.0
        %v3505 = vmax.f32 %v3473, 0.0
        %v3506 = vmax.f32 %v3474, 0.0
        %v3507 = vmax.f32 %v3475, 0.0
        %v3508 = vmax.f32 %v3476, 0.0
        %v3509 = vmax.f32 %v3477, 0.0
        %v3510 = vmax.f32 %v3478, 0.0
        %v3511 = vmax.f32 %v3479, 0.0
        %v3512 = vmax.f32 %v3480, 0.0
        %v3513 = vmax.f32 %v3481, 0.0
        %v3514 = vmax.f32 %v3482, 0.0
        %v3515 = vmax.f32 %v3483, 0.0
        %v3516 = vmax.f32 %v3484, 0.0
        %v3517 = vmax.f32 %v3485, 0.0
        %v3518 = vmax.f32 %v3486, 0.0
        %v3519 = vmax.f32 %v3487, 0.0
        %v3520 = vmax.f32 %v3488, 0.0
        %v3521 = vmax.f32 %v3489, 0.0
        %v3522 = vmax.f32 %v3490, 0.0
        %v3523 = vmax.f32 %v3491, 0.0
        %v3524 = vmax.f32 %v3492, 0.0
        %v3525 = vmax.f32 %v3493, 0.0
        %v3526 = vmax.f32 %v3494, 0.0
        %v3527 = vpack.c.bf16 %v3496, %v3495
        %v3528 = vpack.c.bf16 %v3498, %v3497
        %v3529 = vpack.c.bf16 %v3500, %v3499
        %v3530 = vpack.c.bf16 %v3502, %v3501
        %v3531 = vpack.c.bf16 %v3504, %v3503
        %v3532 = vpack.c.bf16 %v3506, %v3505
        %v3533 = vpack.c.bf16 %v3508, %v3507
        %v3534 = vpack.c.bf16 %v3510, %v3509
        %v3535 = vpack.c.bf16 %v3512, %v3511
        %v3536 = vpack.c.bf16 %v3514, %v3513
        %v3537 = vpack.c.bf16 %v3516, %v3515
        %v3538 = vpack.c.bf16 %v3518, %v3517
        %v3539 = vpack.c.bf16 %v3520, %v3519
        %v3540 = vpack.c.bf16 %v3522, %v3521
        %v3541 = vpack.c.bf16 %v3524, %v3523
        %v3542 = vpack.c.bf16 %v3526, %v3525
        %3543 = vst [vmem:[#allocation3 + $0x20] sm:$0xff] %v3527
        %3544 = vst [vmem:[#allocation3 + $0x38] sm:$0xff] %v3528
        %3545 = vst [vmem:[#allocation3 + $0x50] sm:$0xff] %v3529
        %3546 = vst [vmem:[#allocation3 + $0x68] sm:$0xff] %v3530
        %3547 = vst [vmem:[#allocation3 + $0x80] sm:$0xff] %v3531
        %3548 = vst [vmem:[#allocation3 + $0x98] sm:$0xff] %v3532
        %3549 = vst [vmem:[#allocation3 + $0xb0] sm:$0xff] %v3533
        %3550 = vst [vmem:[#allocation3 + $0xc8] sm:$0xff] %v3534
        %3551 = vst [vmem:[#allocation3 + $0xe0] sm:$0xff] %v3535
        %3552 = vst [vmem:[#allocation3 + $0xf8] sm:$0xff] %v3536
        %3553 = vst [vmem:[#allocation3 + $0x110] sm:$0xff] %v3537
        %3554 = vst [vmem:[#allocation3 + $0x128] sm:$0xff] %v3538
        %3555 = vst [vmem:[#allocation3 + $0x140] sm:$0xff] %v3539
        %3556 = vst [vmem:[#allocation3 + $0x158] sm:$0xff] %v3540
        %3557 = vst [vmem:[#allocation3 + $0x170] sm:$0xff] %v3541
        %3558 = vst [vmem:[#allocation3 + $0x188] sm:$0xff] %v3542
        %3559 = vst [vmem:[#allocation2 + $0x8] sm:$0xff] %v3495
        %3560 = vst [vmem:[#allocation2 + $0x10] sm:$0xff] %v3496
        %3561 = vst [vmem:[#allocation2 + $0x18] sm:$0xff] %v3497
        %3562 = vst [vmem:[#allocation2 + $0x20] sm:$0xff] %v3498
        %3563 = vst [vmem:[#allocation2 + $0x28] sm:$0xff] %v3499
        %3564 = vst [vmem:[#allocation2 + $0x30] sm:$0xff] %v3500
        %3565 = vst [vmem:[#allocation2 + $0x38] sm:$0xff] %v3501
        %3566 = vst [vmem:[#allocation2 + $0x40] sm:$0xff] %v3502
        %3567 = vst [vmem:[#allocation2 + $0x48] sm:$0xff] %v3503
        %3568 = vst [vmem:[#allocation2 + $0x50] sm:$0xff] %v3504
        %3569 = vst [vmem:[#allocation2 + $0x58] sm:$0xff] %v3505
        %3570 = vst [vmem:[#allocation2 + $0x60] sm:$0xff] %v3506
        %3571 = vst [vmem:[#allocation2 + $0x68] sm:$0xff] %v3507
        %3572 = vst [vmem:[#allocation2 + $0x70] sm:$0xff] %v3508
        %3573 = vst [vmem:[#allocation2 + $0x78] sm:$0xff] %v3509
        %3574 = vst [vmem:[#allocation2 + $0x80] sm:$0xff] %v3510
        %3575 = vst [vmem:[#allocation2 + $0x88] sm:$0xff] %v3511
        %3576 = vst [vmem:[#allocation2 + $0x90] sm:$0xff] %v3512
        %3577 = vst [vmem:[#allocation2 + $0x98] sm:$0xff] %v3513
        %3578 = vst [vmem:[#allocation2 + $0xa0] sm:$0xff] %v3514
        %3579 = vst [vmem:[#allocation2 + $0xa8] sm:$0xff] %v3515
        %3580 = vst [vmem:[#allocation2 + $0xb0] sm:$0xff] %v3516
        %3581 = vst [vmem:[#allocation2 + $0xb8] sm:$0xff] %v3517
        %3582 = vst [vmem:[#allocation2 + $0xc0] sm:$0xff] %v3518
        %3583 = vst [vmem:[#allocation2 + $0xc8] sm:$0xff] %v3519
        %3584 = vst [vmem:[#allocation2 + $0xd0] sm:$0xff] %v3520
        %3585 = vst [vmem:[#allocation2 + $0xd8] sm:$0xff] %v3521
        %3586 = vst [vmem:[#allocation2 + $0xe0] sm:$0xff] %v3522
        %3587 = vst [vmem:[#allocation2 + $0xe8] sm:$0xff] %v3523
        %3588 = vst [vmem:[#allocation2 + $0xf0] sm:$0xff] %v3524
        %3589 = vst [vmem:[#allocation2 + $0xf8] sm:$0xff] %v3525
        %3590 = vst [vmem:[#allocation2 + $0x100] sm:$0xff] %v3526
        %v3591 = vld [vmem:[#allocation2 + $0x7] sm:$0xff]
        %v3592 = vld [vmem:[#allocation2 + $0xf] sm:$0xff]
        %v3593 = vld [vmem:[#allocation2 + $0x17] sm:$0xff]
        %v3594 = vld [vmem:[#allocation2 + $0x1f] sm:$0xff]
        %v3595 = vld [vmem:[#allocation2 + $0x27] sm:$0xff]
        %v3596 = vld [vmem:[#allocation2 + $0x2f] sm:$0xff]
        %v3597 = vld [vmem:[#allocation2 + $0x37] sm:$0xff]
        %v3598 = vld [vmem:[#allocation2 + $0x3f] sm:$0xff]
        %v3599 = vld [vmem:[#allocation2 + $0x47] sm:$0xff]
        %v3600 = vld [vmem:[#allocation2 + $0x4f] sm:$0xff]
        %v3601 = vld [vmem:[#allocation2 + $0x57] sm:$0xff]
        %v3602 = vld [vmem:[#allocation2 + $0x5f] sm:$0xff]
        %v3603 = vld [vmem:[#allocation2 + $0x67] sm:$0xff]
        %v3604 = vld [vmem:[#allocation2 + $0x6f] sm:$0xff]
        %v3605 = vld [vmem:[#allocation2 + $0x77] sm:$0xff]
        %v3606 = vld [vmem:[#allocation2 + $0x7f] sm:$0xff]
        %v3607 = vld [vmem:[#allocation2 + $0x87] sm:$0xff]
        %v3608 = vld [vmem:[#allocation2 + $0x8f] sm:$0xff]
        %v3609 = vld [vmem:[#allocation2 + $0x97] sm:$0xff]
        %v3610 = vld [vmem:[#allocation2 + $0x9f] sm:$0xff]
        %v3611 = vld [vmem:[#allocation2 + $0xa7] sm:$0xff]
        %v3612 = vld [vmem:[#allocation2 + $0xaf] sm:$0xff]
        %v3613 = vld [vmem:[#allocation2 + $0xb7] sm:$0xff]
        %v3614 = vld [vmem:[#allocation2 + $0xbf] sm:$0xff]
        %v3615 = vld [vmem:[#allocation2 + $0xc7] sm:$0xff]
        %v3616 = vld [vmem:[#allocation2 + $0xcf] sm:$0xff]
        %v3617 = vld [vmem:[#allocation2 + $0xd7] sm:$0xff]
        %v3618 = vld [vmem:[#allocation2 + $0xdf] sm:$0xff]
        %v3619 = vld [vmem:[#allocation2 + $0xe7] sm:$0xff]
        %v3620 = vld [vmem:[#allocation2 + $0xef] sm:$0xff]
        %v3621 = vld [vmem:[#allocation2 + $0xf7] sm:$0xff]
        %v3622 = vld [vmem:[#allocation2 + $0xff] sm:$0xff]
        %v3623 = vld [vmem:[#allocation2 + $0x9] sm:$0xff]
        %v3624 = vld [vmem:[#allocation2 + $0x11] sm:$0xff]
        %v3625 = vld [vmem:[#allocation2 + $0x19] sm:$0xff]
        %v3626 = vld [vmem:[#allocation2 + $0x21] sm:$0xff]
        %v3627 = vld [vmem:[#allocation2 + $0x29] sm:$0xff]
        %v3628 = vld [vmem:[#allocation2 + $0x31] sm:$0xff]
        %v3629 = vld [vmem:[#allocation2 + $0x39] sm:$0xff]
        %v3630 = vld [vmem:[#allocation2 + $0x41] sm:$0xff]
        %v3631 = vld [vmem:[#allocation2 + $0x49] sm:$0xff]
        %v3632 = vld [vmem:[#allocation2 + $0x51] sm:$0xff]
        %v3633 = vld [vmem:[#allocation2 + $0x59] sm:$0xff]
        %v3634 = vld [vmem:[#allocation2 + $0x61] sm:$0xff]
        %v3635 = vld [vmem:[#allocation2 + $0x69] sm:$0xff]
        %v3636 = vld [vmem:[#allocation2 + $0x71] sm:$0xff]
        %v3637 = vld [vmem:[#allocation2 + $0x79] sm:$0xff]
        %v3638 = vld [vmem:[#allocation2 + $0x81] sm:$0xff]
        %v3639 = vld [vmem:[#allocation2 + $0x89] sm:$0xff]
        %v3640 = vld [vmem:[#allocation2 + $0x91] sm:$0xff]
        %v3641 = vld [vmem:[#allocation2 + $0x99] sm:$0xff]
        %v3642 = vld [vmem:[#allocation2 + $0xa1] sm:$0xff]
        %v3643 = vld [vmem:[#allocation2 + $0xa9] sm:$0xff]
        %v3644 = vld [vmem:[#allocation2 + $0xb1] sm:$0xff]
        %v3645 = vld [vmem:[#allocation2 + $0xb9] sm:$0xff]
        %v3646 = vld [vmem:[#allocation2 + $0xc1] sm:$0xff]
        %v3647 = vld [vmem:[#allocation2 + $0xc9] sm:$0xff]
        %v3648 = vld [vmem:[#allocation2 + $0xd1] sm:$0xff]
        %v3649 = vld [vmem:[#allocation2 + $0xd9] sm:$0xff]
        %v3650 = vld [vmem:[#allocation2 + $0xe1] sm:$0xff]
        %v3651 = vld [vmem:[#allocation2 + $0xe9] sm:$0xff]
        %v3652 = vld [vmem:[#allocation2 + $0xf1] sm:$0xff]
        %v3653 = vld [vmem:[#allocation2 + $0xf9] sm:$0xff]
        %v3654 = vld [vmem:[#allocation2 + $0x101] sm:$0xff]
        %v3655 = vsel %vm1151, %v3591, 0.0
        %v3656 = vsel %vm1152, %v3592, 0.0
        %v3657 = vsel %vm1153, %v3593, 0.0
        %v3658 = vsel %vm1154, %v3594, 0.0
        %v3659 = vsel %vm1155, %v3595, 0.0
        %v3660 = vsel %vm1156, %v3596, 0.0
        %v3661 = vsel %vm1157, %v3597, 0.0
        %v3662 = vsel %vm1158, %v3598, 0.0
        %v3663 = vsel %vm1159, %v3599, 0.0
        %v3664 = vsel %vm1160, %v3600, 0.0
        %v3665 = vsel %vm1161, %v3601, 0.0
        %v3666 = vsel %vm1162, %v3602, 0.0
        %v3667 = vsel %vm1163, %v3603, 0.0
        %v3668 = vsel %vm1164, %v3604, 0.0
        %v3669 = vsel %vm1165, %v3605, 0.0
        %v3670 = vsel %vm1166, %v3606, 0.0
        %v3671 = vsel %vm1167, %v3607, 0.0
        %v3672 = vsel %vm1168, %v3608, 0.0
        %v3673 = vsel %vm1169, %v3609, 0.0
        %v3674 = vsel %vm1170, %v3610, 0.0
        %v3675 = vsel %vm1171, %v3611, 0.0
        %v3676 = vsel %vm1172, %v3612, 0.0
        %v3677 = vsel %vm1173, %v3613, 0.0
        %v3678 = vsel %vm1174, %v3614, 0.0
        %v3679 = vsel %vm1175, %v3615, 0.0
        %v3680 = vsel %vm1176, %v3616, 0.0
        %v3681 = vsel %vm1177, %v3617, 0.0
        %v3682 = vsel %vm1178, %v3618, 0.0
        %v3683 = vsel %vm1179, %v3619, 0.0
        %v3684 = vsel %vm1180, %v3620, 0.0
        %v3685 = vsel %vm1181, %v3621, 0.0
        %v3686 = vsel %vm1182, %v3622, 0.0
        %v3687 = vpack.c.bf16 %v3656, %v3655
        %v3688 = vpack.c.bf16 %v3658, %v3657
        %v3689 = vpack.c.bf16 %v3660, %v3659
        %v3690 = vpack.c.bf16 %v3662, %v3661
        %v3691 = vpack.c.bf16 %v3664, %v3663
        %v3692 = vpack.c.bf16 %v3666, %v3665
        %v3693 = vpack.c.bf16 %v3668, %v3667
        %v3694 = vpack.c.bf16 %v3670, %v3669
        %v3695 = vpack.c.bf16 %v3672, %v3671
        %v3696 = vpack.c.bf16 %v3674, %v3673
        %v3697 = vpack.c.bf16 %v3676, %v3675
        %v3698 = vpack.c.bf16 %v3678, %v3677
        %v3699 = vpack.c.bf16 %v3680, %v3679
        %v3700 = vpack.c.bf16 %v3682, %v3681
        %v3701 = vpack.c.bf16 %v3684, %v3683
        %v3702 = vpack.c.bf16 %v3686, %v3685
        %3703 = vst [vmem:[#allocation3 + $0x18] sm:$0xff] %v3687
        %3704 = vst [vmem:[#allocation3 + $0x30] sm:$0xff] %v3688
        %3705 = vst [vmem:[#allocation3 + $0x48] sm:$0xff] %v3689
        %3706 = vst [vmem:[#allocation3 + $0x60] sm:$0xff] %v3690
        %3707 = vst [vmem:[#allocation3 + $0x78] sm:$0xff] %v3691
        %3708 = vst [vmem:[#allocation3 + $0x90] sm:$0xff] %v3692
        %3709 = vst [vmem:[#allocation3 + $0xa8] sm:$0xff] %v3693
        %3710 = vst [vmem:[#allocation3 + $0xc0] sm:$0xff] %v3694
        %3711 = vst [vmem:[#allocation3 + $0xd8] sm:$0xff] %v3695
        %3712 = vst [vmem:[#allocation3 + $0xf0] sm:$0xff] %v3696
        %3713 = vst [vmem:[#allocation3 + $0x108] sm:$0xff] %v3697
        %3714 = vst [vmem:[#allocation3 + $0x120] sm:$0xff] %v3698
        %3715 = vst [vmem:[#allocation3 + $0x138] sm:$0xff] %v3699
        %3716 = vst [vmem:[#allocation3 + $0x150] sm:$0xff] %v3700
        %3717 = vst [vmem:[#allocation3 + $0x168] sm:$0xff] %v3701
        %3718 = vst [vmem:[#allocation3 + $0x180] sm:$0xff] %v3702
        %v3719 = vsel %vm1279, %v3623, 0.0
        %v3720 = vsel %vm1280, %v3624, 0.0
        %v3721 = vsel %vm1281, %v3625, 0.0
        %v3722 = vsel %vm1282, %v3626, 0.0
        %v3723 = vsel %vm1283, %v3627, 0.0
        %v3724 = vsel %vm1284, %v3628, 0.0
        %v3725 = vsel %vm1285, %v3629, 0.0
        %v3726 = vsel %vm1286, %v3630, 0.0
        %v3727 = vsel %vm1287, %v3631, 0.0
        %v3728 = vsel %vm1288, %v3632, 0.0
        %v3729 = vsel %vm1289, %v3633, 0.0
        %v3730 = vsel %vm1290, %v3634, 0.0
        %v3731 = vsel %vm1291, %v3635, 0.0
        %v3732 = vsel %vm1292, %v3636, 0.0
        %v3733 = vsel %vm1293, %v3637, 0.0
        %v3734 = vsel %vm1294, %v3638, 0.0
        %v3735 = vsel %vm1295, %v3639, 0.0
        %v3736 = vsel %vm1296, %v3640, 0.0
        %v3737 = vsel %vm1297, %v3641, 0.0
        %v3738 = vsel %vm1298, %v3642, 0.0
        %v3739 = vsel %vm1299, %v3643, 0.0
        %v3740 = vsel %vm1300, %v3644, 0.0
        %v3741 = vsel %vm1301, %v3645, 0.0
        %v3742 = vsel %vm1302, %v3646, 0.0
        %v3743 = vsel %vm1303, %v3647, 0.0
        %v3744 = vsel %vm1304, %v3648, 0.0
        %v3745 = vsel %vm1305, %v3649, 0.0
        %v3746 = vsel %vm1306, %v3650, 0.0
        %v3747 = vsel %vm1307, %v3651, 0.0
        %v3748 = vsel %vm1308, %v3652, 0.0
        %v3749 = vsel %vm1309, %v3653, 0.0
        %v3750 = vsel %vm1310, %v3654, 0.0
        %v3751 = vpack.c.bf16 %v3720, %v3719
        %v3752 = vpack.c.bf16 %v3722, %v3721
        %v3753 = vpack.c.bf16 %v3724, %v3723
        %v3754 = vpack.c.bf16 %v3726, %v3725
        %v3755 = vpack.c.bf16 %v3728, %v3727
        %v3756 = vpack.c.bf16 %v3730, %v3729
        %v3757 = vpack.c.bf16 %v3732, %v3731
        %v3758 = vpack.c.bf16 %v3734, %v3733
        %v3759 = vpack.c.bf16 %v3736, %v3735
        %v3760 = vpack.c.bf16 %v3738, %v3737
        %v3761 = vpack.c.bf16 %v3740, %v3739
        %v3762 = vpack.c.bf16 %v3742, %v3741
        %v3763 = vpack.c.bf16 %v3744, %v3743
        %v3764 = vpack.c.bf16 %v3746, %v3745
        %v3765 = vpack.c.bf16 %v3748, %v3747
        %v3766 = vpack.c.bf16 %v3750, %v3749
        %3767 = vst [vmem:[#allocation3 + $0x28] sm:$0xff] %v3751
        %3768 = vst [vmem:[#allocation3 + $0x40] sm:$0xff] %v3752
        %3769 = vst [vmem:[#allocation3 + $0x58] sm:$0xff] %v3753
        %3770 = vst [vmem:[#allocation3 + $0x70] sm:$0xff] %v3754
        %3771 = vst [vmem:[#allocation3 + $0x88] sm:$0xff] %v3755
        %3772 = vst [vmem:[#allocation3 + $0xa0] sm:$0xff] %v3756
        %3773 = vst [vmem:[#allocation3 + $0xb8] sm:$0xff] %v3757
        %3774 = vst [vmem:[#allocation3 + $0xd0] sm:$0xff] %v3758
        %3775 = vst [vmem:[#allocation3 + $0xe8] sm:$0xff] %v3759
        %3776 = vst [vmem:[#allocation3 + $0x100] sm:$0xff] %v3760
        %3777 = vst [vmem:[#allocation3 + $0x118] sm:$0xff] %v3761
        %3778 = vst [vmem:[#allocation3 + $0x130] sm:$0xff] %v3762
        %3779 = vst [vmem:[#allocation3 + $0x148] sm:$0xff] %v3763
        %3780 = vst [vmem:[#allocation3 + $0x160] sm:$0xff] %v3764
        %3781 = vst [vmem:[#allocation3 + $0x178] sm:$0xff] %v3765
        %3782 = vst [vmem:[#allocation3 + $0x190] sm:$0xff] %v3766
        %v3783 = vld [vmem:[#allocation3] sm:$0xff]
        %v3784 = vld [vmem:[#allocation3 + $0x8] sm:$0xff]
        %v3785 = vld [vmem:[#allocation3 + $0x10] sm:$0xff]
        %v3786 = vld [vmem:[#allocation3 + $0x18] sm:$0xff]
        %v3787 = vld [vmem:[#allocation3 + $0x20] sm:$0xff]
        %v3788 = vld [vmem:[#allocation3 + $0x28] sm:$0xff]
        %v3789 = vld [vmem:[#allocation3 + $0x30] sm:$0xff]
        %v3790 = vld [vmem:[#allocation3 + $0x38] sm:$0xff]
        %v3791 = vld [vmem:[#allocation3 + $0x40] sm:$0xff]
        %v3792 = vld [vmem:[#allocation3 + $0x48] sm:$0xff]
        %v3793 = vld [vmem:[#allocation3 + $0x50] sm:$0xff]
        %v3794 = vld [vmem:[#allocation3 + $0x58] sm:$0xff]
        %v3795 = vld [vmem:[#allocation3 + $0x60] sm:$0xff]
        %v3796 = vld [vmem:[#allocation3 + $0x68] sm:$0xff]
        %v3797 = vld [vmem:[#allocation3 + $0x70] sm:$0xff]
        %v3798 = vld [vmem:[#allocation3 + $0x78] sm:$0xff]
        %v3799 = vld [vmem:[#allocation3 + $0x80] sm:$0xff]
        %v3800 = vld [vmem:[#allocation3 + $0x88] sm:$0xff]
        %v3801 = vld [vmem:[#allocation3 + $0x90] sm:$0xff]
        %v3802 = vld [vmem:[#allocation3 + $0x98] sm:$0xff]
        %v3803 = vld [vmem:[#allocation3 + $0xa0] sm:$0xff]
        %v3804 = vld [vmem:[#allocation3 + $0xa8] sm:$0xff]
        %v3805 = vld [vmem:[#allocation3 + $0xb0] sm:$0xff]
        %v3806 = vld [vmem:[#allocation3 + $0xb8] sm:$0xff]
        %v3807 = vld [vmem:[#allocation3 + $0xc0] sm:$0xff]
        %v3808 = vld [vmem:[#allocation3 + $0xc8] sm:$0xff]
        %v3809 = vld [vmem:[#allocation3 + $0xd0] sm:$0xff]
        %v3810 = vld [vmem:[#allocation3 + $0xd8] sm:$0xff]
        %v3811 = vld [vmem:[#allocation3 + $0xe0] sm:$0xff]
        %v3812 = vld [vmem:[#allocation3 + $0xe8] sm:$0xff]
        %v3813 = vld [vmem:[#allocation3 + $0xf0] sm:$0xff]
        %v3814 = vld [vmem:[#allocation3 + $0xf8] sm:$0xff]
        %v3815 = vld [vmem:[#allocation3 + $0x100] sm:$0xff]
        %v3816 = vld [vmem:[#allocation3 + $0x108] sm:$0xff]
        %v3817 = vld [vmem:[#allocation3 + $0x110] sm:$0xff]
        %v3818 = vld [vmem:[#allocation3 + $0x118] sm:$0xff]
        %v3819 = vld [vmem:[#allocation3 + $0x120] sm:$0xff]
        %v3820 = vld [vmem:[#allocation3 + $0x128] sm:$0xff]
        %v3821 = vld [vmem:[#allocation3 + $0x130] sm:$0xff]
        %v3822 = vld [vmem:[#allocation3 + $0x138] sm:$0xff]
        %v3823 = vld [vmem:[#allocation3 + $0x140] sm:$0xff]
        %v3824 = vld [vmem:[#allocation3 + $0x148] sm:$0xff]
        %v3825 = vld [vmem:[#allocation3 + $0x150] sm:$0xff]
        %v3826 = vld [vmem:[#allocation3 + $0x158] sm:$0xff]
        %v3827 = vld [vmem:[#allocation3 + $0x160] sm:$0xff]
        %v3828 = vld [vmem:[#allocation3 + $0x168] sm:$0xff]
        %v3829 = vld [vmem:[#allocation3 + $0x170] sm:$0xff]
        %v3830 = vld [vmem:[#allocation3 + $0x178] sm:$0xff]
        %v3831 = vld [vmem:[#allocation4] sm:$0xf]
        %v3832 = vld [vmem:[#allocation4 + $0x4] sm:$0xf]
        %v3833 = vld [vmem:[#allocation4 + $0x8] sm:$0xf]
        %v3834 = vld [vmem:[#allocation4 + $0xc] sm:$0xf]
        %v3835 = vld [vmem:[#allocation4 + $0x10] sm:$0xf]
        %v3836 = vld [vmem:[#allocation4 + $0x14] sm:$0xf]
        %v3837 = vld [vmem:[#allocation4 + $0x18] sm:$0xf]
        %v3838 = vld [vmem:[#allocation4 + $0x1c] sm:$0xf]
        %v3839 = vld [vmem:[#allocation4 + $0x20] sm:$0xf]
        %v3840 = vld [vmem:[#allocation4 + $0x24] sm:$0xf]
        %v3841 = vld [vmem:[#allocation4 + $0x28] sm:$0xf]
        %v3842 = vld [vmem:[#allocation4 + $0x2c] sm:$0xf]
        %v3843 = vld [vmem:[#allocation4 + $0x30] sm:$0xf]
        %v3844 = vld [vmem:[#allocation4 + $0x34] sm:$0xf]
        %v3845 = vld [vmem:[#allocation4 + $0x38] sm:$0xf]
        %v3846 = vld [vmem:[#allocation4 + $0x3c] sm:$0xf]
        %v3847 = vld [vmem:[#allocation4 + $0x40] sm:$0xf]
        %v3848 = vld [vmem:[#allocation4 + $0x44] sm:$0xf]
        %v3849 = vld [vmem:[#allocation4 + $0x48] sm:$0xf]
        %v3850 = vld [vmem:[#allocation4 + $0x4c] sm:$0xf]
        %v3851 = vld [vmem:[#allocation4 + $0x50] sm:$0xf]
        %v3852 = vld [vmem:[#allocation4 + $0x54] sm:$0xf]
        %v3853 = vld [vmem:[#allocation4 + $0x58] sm:$0xf]
        %v3854 = vld [vmem:[#allocation4 + $0x5c] sm:$0xf]
        %v3855 = vld [vmem:[#allocation4 + $0x60] sm:$0xf]
        %v3856 = vld [vmem:[#allocation4 + $0x64] sm:$0xf]
        %v3857 = vld [vmem:[#allocation4 + $0x68] sm:$0xf]
        %v3858 = vld [vmem:[#allocation4 + $0x6c] sm:$0xf]
        %v3859 = vld [vmem:[#allocation4 + $0x70] sm:$0xf]
        %v3860 = vld [vmem:[#allocation4 + $0x74] sm:$0xf]
        %v3861 = vld [vmem:[#allocation4 + $0x78] sm:$0xf]
        %v3862 = vld [vmem:[#allocation4 + $0x7c] sm:$0xf]
        %v3863 = vld [vmem:[#allocation4 + $0x80] sm:$0xf]
        %v3864 = vld [vmem:[#allocation4 + $0x84] sm:$0xf]
        %v3865 = vld [vmem:[#allocation4 + $0x88] sm:$0xf]
        %v3866 = vld [vmem:[#allocation4 + $0x8c] sm:$0xf]
        %v3867 = vld [vmem:[#allocation4 + $0x90] sm:$0xf]
        %v3868 = vld [vmem:[#allocation4 + $0x94] sm:$0xf]
        %v3869 = vld [vmem:[#allocation4 + $0x98] sm:$0xf]
        %v3870 = vld [vmem:[#allocation4 + $0x9c] sm:$0xf]
        %v3871 = vld [vmem:[#allocation4 + $0xa0] sm:$0xf]
        %v3872 = vld [vmem:[#allocation4 + $0xa4] sm:$0xf]
        %v3873 = vld [vmem:[#allocation4 + $0xa8] sm:$0xf]
        %v3874 = vld [vmem:[#allocation4 + $0xac] sm:$0xf]
        %v3875 = vld [vmem:[#allocation4 + $0xb0] sm:$0xf]
        %v3876 = vld [vmem:[#allocation4 + $0xb4] sm:$0xf]
        %v3877 = vld [vmem:[#allocation4 + $0xb8] sm:$0xf]
        %v3878 = vld [vmem:[#allocation4 + $0xbc] sm:$0xf]
        %v3879 = vld [vmem:[#allocation3 + $0x180] sm:$0xff]
        %v3880 = vld [vmem:[#allocation3 + $0x188] sm:$0xff]
        %v3881 = vld [vmem:[#allocation3 + $0x190] sm:$0xff]
        %s3882 = scalar_lea.vmem [#allocation4], 192
        %v3883 = vld [vmem:[%s3882] sm:$0xf]
        %v3884 = vld [vmem:[%s3882 + $0x4] sm:$0xf]
        %v3885 = vld [vmem:[%s3882 + $0x8] sm:$0xf]
        %v3886 = vld [vmem:[%s3882 + $0xc] sm:$0xf]
        %v3887 = vld [vmem:[%s3882 + $0x10] sm:$0xf]
        %v3888 = vld [vmem:[%s3882 + $0x14] sm:$0xf]
        %v3889 = vld [vmem:[%s3882 + $0x18] sm:$0xf]
        %v3890 = vld [vmem:[%s3882 + $0x1c] sm:$0xf]
        %v3891 = vld [vmem:[%s3882 + $0x20] sm:$0xf]
        %v3892 = vld [vmem:[%s3882 + $0x24] sm:$0xf]
        %v3893 = vld [vmem:[%s3882 + $0x28] sm:$0xf]
        %v3894 = vld [vmem:[%s3882 + $0x2c] sm:$0xf]
        %v3895 = vld [vmem:[%s3882 + $0x30] sm:$0xf]
        %v3896 = vld [vmem:[%s3882 + $0x34] sm:$0xf]
        %v3897 = vld [vmem:[%s3882 + $0x38] sm:$0xf]
        %v3898 = vld [vmem:[%s3882 + $0x3c] sm:$0xf]
        %v3899 = vld [vmem:[%s3882 + $0x40] sm:$0xf]
        %v3900 = vld [vmem:[%s3882 + $0x44] sm:$0xf]
        %v3901 = vld [vmem:[%s3882 + $0x48] sm:$0xf]
        %v3902 = vld [vmem:[%s3882 + $0x4c] sm:$0xf]
        %v3903 = vld [vmem:[%s3882 + $0x50] sm:$0xf]
        %v3904 = vld [vmem:[%s3882 + $0x54] sm:$0xf]
        %v3905 = vld [vmem:[%s3882 + $0x58] sm:$0xf]
        %v3906 = vld [vmem:[%s3882 + $0x5c] sm:$0xf]
        %v3907 = vld [vmem:[%s3882 + $0x60] sm:$0xf]
        %v3908 = vld [vmem:[%s3882 + $0x64] sm:$0xf]
        %v3909 = vld [vmem:[%s3882 + $0x68] sm:$0xf]
        %v3910 = vld [vmem:[%s3882 + $0x6c] sm:$0xf]
        %v3911 = vld [vmem:[%s3882 + $0x70] sm:$0xf]
        %v3912 = vld [vmem:[%s3882 + $0x74] sm:$0xf]
        %v3913 = vld [vmem:[%s3882 + $0x78] sm:$0xf]
        %v3914 = vld [vmem:[%s3882 + $0x7c] sm:$0xf]
        %v3915 = vld [vmem:[%s3882 + $0x80] sm:$0xf]
        %v3916 = vld [vmem:[%s3882 + $0x84] sm:$0xf]
        %v3917 = vld [vmem:[%s3882 + $0x88] sm:$0xf]
        %v3918 = vld [vmem:[%s3882 + $0x8c] sm:$0xf]
        %v3919 = vld [vmem:[%s3882 + $0x90] sm:$0xf]
        %v3920 = vld [vmem:[%s3882 + $0x94] sm:$0xf]
        %v3921 = vld [vmem:[%s3882 + $0x98] sm:$0xf]
        %v3922 = vld [vmem:[%s3882 + $0x9c] sm:$0xf]
        %v3923 = vld [vmem:[%s3882 + $0xa0] sm:$0xf]
        %v3924 = vld [vmem:[%s3882 + $0xa4] sm:$0xf]
        %v3925 = vld [vmem:[%s3882 + $0xa8] sm:$0xf]
        %v3926 = vld [vmem:[%s3882 + $0xac] sm:$0xf]
        %v3927 = vld [vmem:[%s3882 + $0xb0] sm:$0xf]
        %v3928 = vld [vmem:[%s3882 + $0xb4] sm:$0xf]
        %v3929 = vld [vmem:[%s3882 + $0xb8] sm:$0xf]
        %v3930 = vld [vmem:[%s3882 + $0xbc] sm:$0xf]
        %v3979 = vunpack.c.l.b16 %v3883
        %v3980 = vunpack.c.l.b16 %v3884
        %v3981 = vunpack.c.l.b16 %v3885
        %v3982 = vunpack.c.l.b16 %v3886
        %v3983 = vunpack.c.l.b16 %v3887
        %v3984 = vunpack.c.l.b16 %v3888
        %v3985 = vunpack.c.l.b16 %v3889
        %v3986 = vunpack.c.l.b16 %v3890
        %v3987 = vunpack.c.l.b16 %v3891
        %v3988 = vunpack.c.l.b16 %v3892
        %v3989 = vunpack.c.l.b16 %v3893
        %v3990 = vunpack.c.l.b16 %v3894
        %v3991 = vunpack.c.l.b16 %v3895
        %v3992 = vunpack.c.l.b16 %v3896
        %v3993 = vunpack.c.l.b16 %v3897
        %v3994 = vunpack.c.l.b16 %v3898
        %v3995 = vunpack.c.l.b16 %v3899
        %v3996 = vunpack.c.l.b16 %v3900
        %v3997 = vunpack.c.l.b16 %v3901
        %v3998 = vunpack.c.l.b16 %v3902
        %v3999 = vunpack.c.l.b16 %v3903
        %v4000 = vunpack.c.l.b16 %v3904
        %v4001 = vunpack.c.l.b16 %v3905
        %v4002 = vunpack.c.l.b16 %v3906
        %v4003 = vunpack.c.l.b16 %v3907
        %v4004 = vunpack.c.l.b16 %v3908
        %v4005 = vunpack.c.l.b16 %v3909
        %v4006 = vunpack.c.l.b16 %v3910
        %v4007 = vunpack.c.l.b16 %v3911
        %v4008 = vunpack.c.l.b16 %v3912
        %v4009 = vunpack.c.l.b16 %v3913
        %v4010 = vunpack.c.l.b16 %v3914
        %v4011 = vunpack.c.l.b16 %v3915
        %v4012 = vunpack.c.l.b16 %v3916
        %v4013 = vunpack.c.l.b16 %v3917
        %v4014 = vunpack.c.l.b16 %v3918
        %v4015 = vunpack.c.l.b16 %v3919
        %v4016 = vunpack.c.l.b16 %v3920
        %v4017 = vunpack.c.l.b16 %v3921
        %v4018 = vunpack.c.l.b16 %v3922
        %v4019 = vunpack.c.l.b16 %v3923
        %v4020 = vunpack.c.l.b16 %v3924
        %v4021 = vunpack.c.l.b16 %v3925
        %v4022 = vunpack.c.l.b16 %v3926
        %v4023 = vunpack.c.l.b16 %v3927
        %v4024 = vunpack.c.l.b16 %v3928
        %v4025 = vunpack.c.l.b16 %v3929
        %v4026 = vunpack.c.l.b16 %v3930
        %v4027 = vpack.c.b16 %v3980, %v3979
        %v4028 = vpack.c.b16 %v3982, %v3981
        %v4029 = vpack.c.b16 %v3984, %v3983
        %v4030 = vpack.c.b16 %v3986, %v3985
        %v4031 = vpack.c.b16 %v3988, %v3987
        %v4032 = vpack.c.b16 %v3990, %v3989
        %v4033 = vpack.c.b16 %v3992, %v3991
        %v4034 = vpack.c.b16 %v3994, %v3993
        %v4035 = vpack.c.b16 %v3996, %v3995
        %v4036 = vpack.c.b16 %v3998, %v3997
        %v4037 = vpack.c.b16 %v4000, %v3999
        %v4038 = vpack.c.b16 %v4002, %v4001
        %v4039 = vpack.c.b16 %v4004, %v4003
        %v4040 = vpack.c.b16 %v4006, %v4005
        %v4041 = vpack.c.b16 %v4008, %v4007
        %v4042 = vpack.c.b16 %v4010, %v4009
        %v4043 = vpack.c.b16 %v4012, %v4011
        %v4044 = vpack.c.b16 %v4014, %v4013
        %v4045 = vpack.c.b16 %v4016, %v4015
        %v4046 = vpack.c.b16 %v4018, %v4017
        %v4047 = vpack.c.b16 %v4020, %v4019
        %v4048 = vpack.c.b16 %v4022, %v4021
        %v4049 = vpack.c.b16 %v4024, %v4023
        %v4050 = vpack.c.b16 %v4026, %v4025
        %4075 = vmatprep.subr.bf16.mxu0 0
        %4076 = vmatpush1.bf16.msra.mxu0 %v4027
        %4077 = vmatprep.subr.bf16.mxu0 0
        %4078 = vmatpush1.bf16.msra.mxu0 %v4028
        %4079 = vmatprep.subr.bf16.mxu0 0
        %4080 = vmatpush1.bf16.msra.mxu0 %v4029
        %4081 = vmatprep.subr.bf16.mxu0 0
        %4082 = vmatpush1.bf16.msra.mxu0 %v4030
        %4083 = vmatprep.subr.bf16.mxu0 0
        %4084 = vmatpush1.bf16.msra.mxu0 %v4031
        %4085 = vmatprep.subr.bf16.mxu0 0
        %4086 = vmatpush1.bf16.msra.mxu0 %v4032
        %4087 = vmatprep.subr.bf16.mxu0 0
        %4088 = vmatpush1.bf16.msra.mxu0 %v4033
        %4089 = vmatprep.subr.bf16.mxu0 0
        %4090 = vmatpush1.bf16.msra.mxu0 %v4034
        %4091 = vmatprep.subr.bf16.mxu0 0
        %4092 = vmatpush1.bf16.msra.mxu0 %v4035
        %4093 = vmatprep.subr.bf16.mxu0 0
        %4094 = vmatpush1.bf16.msra.mxu0 %v4036
        %4095 = vmatprep.subr.bf16.mxu0 0
        %4096 = vmatpush1.bf16.msra.mxu0 %v4037
        %4097 = vmatprep.subr.bf16.mxu0 0
        %4098 = vmatpush1.bf16.msra.mxu0 %v4038
        %4099 = vmatprep.subr.bf16.mxu0 0
        %4100 = vmatpush1.bf16.msra.mxu0 %v4039
        %4101 = vmatprep.subr.bf16.mxu0 0
        %4102 = vmatpush1.bf16.msra.mxu0 %v4040
        %4103 = vmatprep.subr.bf16.mxu0 0
        %4104 = vmatpush1.bf16.msra.mxu0 %v4041
        %4105 = vmatprep.subr.bf16.mxu0 0
        %4106 = vmatpush1.bf16.msra.mxu0 %v4042
        %4107 = vmatprep.mubr.bf16.mxu0 %v3787
        %4108 = vmatmul.mubr.bf16.gmra.mrb[0].mxu0 %v3786
        %v4109 = vpop.f32.mrb[0].mxu0
        %v4110 = vadd.f32 0.0, %v4109
        %v4111 = vpop.f32.mrb[0].mxu0
        %v4112 = vpop.f32.mrb[0].mxu0
        %v4113 = vadd.f32 0.0, %v4112
        %v4114 = vpop.f32.mrb[0].mxu0
        %4115 = vmatprep.mubr.bf16.mxu0 %v3790
        %4116 = vmatmul.mubr.bf16.gmra.mrb[0].mxu0 %v3789
        %v4117 = vpop.f32.mrb[0].mxu0
        %v4118 = vadd.f32 0.0, %v4117
        %v4119 = vpop.f32.mrb[0].mxu0
        %v4120 = vpop.f32.mrb[0].mxu0
        %v4121 = vadd.f32 0.0, %v4120
        %v4122 = vpop.f32.mrb[0].mxu0
        %4123 = vmatprep.mubr.bf16.mxu0 %v3793
        %4124 = vmatmul.mubr.bf16.gmra.mrb[0].mxu0 %v3792
        %v4125 = vpop.f32.mrb[0].mxu0
        %v4126 = vadd.f32 0.0, %v4125
        %v4127 = vpop.f32.mrb[0].mxu0
        %v4128 = vpop.f32.mrb[0].mxu0
        %v4129 = vadd.f32 0.0, %v4128
        %v4130 = vpop.f32.mrb[0].mxu0
        %4131 = vmatprep.mubr.bf16.mxu0 %v3796
        %4132 = vmatmul.mubr.bf16.gmra.mrb[0].mxu0 %v3795
        %v4133 = vpop.f32.mrb[0].mxu0
        %v4134 = vadd.f32 0.0, %v4133
        %v4135 = vpop.f32.mrb[0].mxu0
        %v4136 = vpop.f32.mrb[0].mxu0
        %v4137 = vadd.f32 0.0, %v4136
        %v4138 = vpop.f32.mrb[0].mxu0
        %4139 = vmatprep.mubr.bf16.mxu0 %v3799
        %4140 = vmatmul.mubr.bf16.gmra.mrb[0].mxu0 %v3798
        %v4141 = vpop.f32.mrb[0].mxu0
        %v4142 = vadd.f32 0.0, %v4141
        %v4143 = vpop.f32.mrb[0].mxu0
        %v4144 = vpop.f32.mrb[0].mxu0
        %v4145 = vadd.f32 0.0, %v4144
        %v4146 = vpop.f32.mrb[0].mxu0
        %4147 = vmatprep.mubr.bf16.mxu0 %v3802
        %4148 = vmatmul.mubr.bf16.gmra.mrb[0].mxu0 %v3801
        %v4149 = vpop.f32.mrb[0].mxu0
        %v4150 = vadd.f32 0.0, %v4149
        %v4151 = vpop.f32.mrb[0].mxu0
        %v4152 = vpop.f32.mrb[0].mxu0
        %v4153 = vadd.f32 0.0, %v4152
        %v4154 = vpop.f32.mrb[0].mxu0
        %4155 = vmatprep.mubr.bf16.mxu0 %v3805
        %4156 = vmatmul.mubr.bf16.gmra.mrb[0].mxu0 %v3804
        %v4157 = vpop.f32.mrb[0].mxu0
        %v4158 = vadd.f32 0.0, %v4157
        %v4159 = vpop.f32.mrb[0].mxu0
        %v4160 = vpop.f32.mrb[0].mxu0
        %v4161 = vadd.f32 0.0, %v4160
        %v4162 = vpop.f32.mrb[0].mxu0
        %4163 = vmatprep.mubr.bf16.mxu0 %v3808
        %4164 = vmatmul.mubr.bf16.gmra.mrb[0].mxu0 %v3807
        %v4165 = vpop.f32.mrb[0].mxu0
        %v4166 = vadd.f32 0.0, %v4165
        %v4167 = vpop.f32.mrb[0].mxu0
        %v4168 = vpop.f32.mrb[0].mxu0
        %v4169 = vadd.f32 0.0, %v4168
        %v4170 = vpop.f32.mrb[0].mxu0
        %4171 = vmatprep.mubr.bf16.mxu0 %v3811
        %4172 = vmatmul.mubr.bf16.gmra.mrb[0].mxu0 %v3810
        %v4173 = vpop.f32.mrb[0].mxu0
        %v4174 = vadd.f32 0.0, %v4173
        %v4175 = vpop.f32.mrb[0].mxu0
        %v4176 = vpop.f32.mrb[0].mxu0
        %v4177 = vadd.f32 0.0, %v4176
        %v4178 = vpop.f32.mrb[0].mxu0
        %4179 = vmatprep.mubr.bf16.mxu0 %v3814
        %4180 = vmatmul.mubr.bf16.gmra.mrb[0].mxu0 %v3813
        %v4181 = vpop.f32.mrb[0].mxu0
        %v4182 = vadd.f32 0.0, %v4181
        %v4183 = vpop.f32.mrb[0].mxu0
        %v4184 = vpop.f32.mrb[0].mxu0
        %v4185 = vadd.f32 0.0, %v4184
        %v4186 = vpop.f32.mrb[0].mxu0
        %4187 = vmatprep.mubr.bf16.mxu0 %v3817
        %4188 = vmatmul.mubr.bf16.gmra.mrb[0].mxu0 %v3816
        %v4189 = vpop.f32.mrb[0].mxu0
        %v4190 = vadd.f32 0.0, %v4189
        %v4191 = vpop.f32.mrb[0].mxu0
        %v4192 = vpop.f32.mrb[0].mxu0
        %v4193 = vadd.f32 0.0, %v4192
        %v4194 = vpop.f32.mrb[0].mxu0
        %4195 = vmatprep.mubr.bf16.mxu0 %v3820
        %4196 = vmatmul.mubr.bf16.gmra.mrb[0].mxu0 %v3819
        %v4197 = vpop.f32.mrb[0].mxu0
        %v4198 = vadd.f32 0.0, %v4197
        %v4199 = vpop.f32.mrb[0].mxu0
        %v4200 = vpop.f32.mrb[0].mxu0
        %v4201 = vadd.f32 0.0, %v4200
        %v4202 = vpop.f32.mrb[0].mxu0
        %4203 = vmatprep.mubr.bf16.mxu0 %v3823
        %4204 = vmatmul.mubr.bf16.gmra.mrb[0].mxu0 %v3822
        %v4205 = vpop.f32.mrb[0].mxu0
        %v4206 = vadd.f32 0.0, %v4205
        %v4207 = vpop.f32.mrb[0].mxu0
        %v4208 = vpop.f32.mrb[0].mxu0
        %v4209 = vadd.f32 0.0, %v4208
        %v4210 = vpop.f32.mrb[0].mxu0
        %4211 = vmatprep.mubr.bf16.mxu0 %v3826
        %4212 = vmatmul.mubr.bf16.gmra.mrb[0].mxu0 %v3825
        %v4213 = vpop.f32.mrb[0].mxu0
        %v4214 = vadd.f32 0.0, %v4213
        %v4215 = vpop.f32.mrb[0].mxu0
        %v4216 = vpop.f32.mrb[0].mxu0
        %v4217 = vadd.f32 0.0, %v4216
        %v4218 = vpop.f32.mrb[0].mxu0
        %4219 = vmatprep.mubr.bf16.mxu0 %v3829
        %4220 = vmatmul.mubr.bf16.gmra.mrb[0].mxu0 %v3828
        %v4221 = vpop.f32.mrb[0].mxu0
        %v4222 = vadd.f32 0.0, %v4221
        %v4223 = vpop.f32.mrb[0].mxu0
        %v4224 = vpop.f32.mrb[0].mxu0
        %v4225 = vadd.f32 0.0, %v4224
        %v4226 = vpop.f32.mrb[0].mxu0
        %4227 = vmatprep.mubr.bf16.mxu0 %v3880
        %4228 = vmatmul.mubr.bf16.gmra.mrb[0].mxu0 %v3879
        %v4229 = vpop.f32.mrb[0].mxu0
        %v4230 = vadd.f32 0.0, %v4229
        %v4231 = vpop.f32.mrb[0].mxu0
        %v4232 = vpop.f32.mrb[0].mxu0
        %v4233 = vadd.f32 0.0, %v4232
        %v4234 = vpop.f32.mrb[0].mxu0
        %4235 = vdwg.mxu0
        %4236 = vmatprep.subr.bf16.mxu0 0
        %4237 = vmatpush1.bf16.msra.mxu0 %v4043
        %4238 = vmatprep.subr.bf16.mxu0 0
        %4239 = vmatpush1.bf16.msra.mxu0 %v4044
        %4240 = vmatprep.subr.bf16.mxu0 0
        %4241 = vmatpush1.bf16.msra.mxu0 %v4045
        %4242 = vmatprep.subr.bf16.mxu0 0
        %4243 = vmatpush1.bf16.msra.mxu0 %v4046
        %4244 = vmatprep.subr.bf16.mxu0 0
        %4245 = vmatpush1.bf16.msra.mxu0 %v4047
        %4246 = vmatprep.subr.bf16.mxu0 0
        %4247 = vmatpush1.bf16.msra.mxu0 %v4048
        %4248 = vmatprep.subr.bf16.mxu0 0
        %4249 = vmatpush1.bf16.msra.mxu0 %v4049
        %4250 = vmatprep.subr.bf16.mxu0 0
        %4251 = vmatpush1.bf16.msra.mxu0 %v4050
        %4252 = vmatprep.subr.bf16.mxu0 0
        %4253 = vmatpush1.bf16.msra.mxu0 0
        %4254 = vmatprep.subr.bf16.mxu0 0
        %4255 = vmatpush1.bf16.msra.mxu0 0
        %4256 = vmatprep.subr.bf16.mxu0 0
        %4257 = vmatpush1.bf16.msra.mxu0 0
        %4258 = vmatprep.subr.bf16.mxu0 0
        %4259 = vmatpush1.bf16.msra.mxu0 0
        %4260 = vmatprep.subr.bf16.mxu0 0
        %4261 = vmatpush1.bf16.msra.mxu0 0
        %4262 = vmatprep.subr.bf16.mxu0 0
        %4263 = vmatpush1.bf16.msra.mxu0 0
        %4264 = vmatprep.subr.bf16.mxu0 0
        %4265 = vmatpush1.bf16.msra.mxu0 0
        %4266 = vmatprep.subr.bf16.mxu0 0
        %4267 = vmatpush1.bf16.msra.mxu0 0
        %4268 = vmatprep.mubr.bf16.mxu0 0
        %4269 = vmatmul.mubr.bf16.gmra.mrb[0].mxu0 %v3788
        %v4270 = vpop.f32.mrb[0].mxu0
        %v4271 = vadd.f32 %v4110, %v4270
        %v4272 = vpop.f32.mrb[0].mxu0
        %v4273 = vpop.f32.mrb[0].mxu0
        %v4274 = vadd.f32 %v4113, %v4273
        %v4275 = vpop.f32.mrb[0].mxu0
        %4276 = vmatprep.mubr.bf16.mxu0 0
        %4277 = vmatmul.mubr.bf16.gmra.mrb[0].mxu0 %v3791
        %v4278 = vpop.f32.mrb[0].mxu0
        %v4279 = vadd.f32 %v4118, %v4278
        %v4280 = vpop.f32.mrb[0].mxu0
        %v4281 = vpop.f32.mrb[0].mxu0
        %v4282 = vadd.f32 %v4121, %v4281
        %v4283 = vpop.f32.mrb[0].mxu0
        %4284 = vmatprep.mubr.bf16.mxu0 0
        %4285 = vmatmul.mubr.bf16.gmra.mrb[0].mxu0 %v3794
        %v4286 = vpop.f32.mrb[0].mxu0
        %v4287 = vadd.f32 %v4126, %v4286
        %v4288 = vpop.f32.mrb[0].mxu0
        %v4289 = vpop.f32.mrb[0].mxu0
        %v4290 = vadd.f32 %v4129, %v4289
        %v4291 = vpop.f32.mrb[0].mxu0
        %4292 = vmatprep.mubr.bf16.mxu0 0
        %4293 = vmatmul.mubr.bf16.gmra.mrb[0].mxu0 %v3797
        %v4294 = vpop.f32.mrb[0].mxu0
        %v4295 = vadd.f32 %v4134, %v4294
        %v4296 = vpop.f32.mrb[0].mxu0
        %v4297 = vpop.f32.mrb[0].mxu0
        %v4298 = vadd.f32 %v4137, %v4297
        %v4299 = vpop.f32.mrb[0].mxu0
        %4300 = vmatprep.mubr.bf16.mxu0 0
        %4301 = vmatmul.mubr.bf16.gmra.mrb[0].mxu0 %v3800
        %v4302 = vpop.f32.mrb[0].mxu0
        %v4303 = vadd.f32 %v4142, %v4302
        %v4304 = vpop.f32.mrb[0].mxu0
        %v4305 = vpop.f32.mrb[0].mxu0
        %v4306 = vadd.f32 %v4145, %v4305
        %v4307 = vpop.f32.mrb[0].mxu0
        %4308 = vmatprep.mubr.bf16.mxu0 0
        %4309 = vmatmul.mubr.bf16.gmra.mrb[0].mxu0 %v3803
        %v4310 = vpop.f32.mrb[0].mxu0
        %v4311 = vadd.f32 %v4150, %v4310
        %v4312 = vpop.f32.mrb[0].mxu0
        %v4313 = vpop.f32.mrb[0].mxu0
        %v4314 = vadd.f32 %v4153, %v4313
        %v4315 = vpop.f32.mrb[0].mxu0
        %4316 = vmatprep.mubr.bf16.mxu0 0
        %4317 = vmatmul.mubr.bf16.gmra.mrb[0].mxu0 %v3806
        %v4318 = vpop.f32.mrb[0].mxu0
        %v4319 = vadd.f32 %v4158, %v4318
        %v4320 = vpop.f32.mrb[0].mxu0
        %v4321 = vpop.f32.mrb[0].mxu0
        %v4322 = vadd.f32 %v4161, %v4321
        %v4323 = vpop.f32.mrb[0].mxu0
        %4324 = vmatprep.mubr.bf16.mxu0 0
        %4325 = vmatmul.mubr.bf16.gmra.mrb[0].mxu0 %v3809
        %v4326 = vpop.f32.mrb[0].mxu0
        %v4327 = vadd.f32 %v4166, %v4326
        %v4328 = vpop.f32.mrb[0].mxu0
        %v4329 = vpop.f32.mrb[0].mxu0
        %v4330 = vadd.f32 %v4169, %v4329
        %v4331 = vpop.f32.mrb[0].mxu0
        %4332 = vmatprep.mubr.bf16.mxu0 0
        %4333 = vmatmul.mubr.bf16.gmra.mrb[0].mxu0 %v3812
        %v4334 = vpop.f32.mrb[0].mxu0
        %v4335 = vadd.f32 %v4174, %v4334
        %v4336 = vpop.f32.mrb[0].mxu0
        %v4337 = vpop.f32.mrb[0].mxu0
        %v4338 = vadd.f32 %v4177, %v4337
        %v4339 = vpop.f32.mrb[0].mxu0
        %4340 = vmatprep.mubr.bf16.mxu0 0
        %4341 = vmatmul.mubr.bf16.gmra.mrb[0].mxu0 %v3815
        %v4342 = vpop.f32.mrb[0].mxu0
        %v4343 = vadd.f32 %v4182, %v4342
        %v4344 = vpop.f32.mrb[0].mxu0
        %v4345 = vpop.f32.mrb[0].mxu0
        %v4346 = vadd.f32 %v4185, %v4345
        %v4347 = vpop.f32.mrb[0].mxu0
        %4348 = vmatprep.mubr.bf16.mxu0 0
        %4349 = vmatmul.mubr.bf16.gmra.mrb[0].mxu0 %v3818
        %v4350 = vpop.f32.mrb[0].mxu0
        %v4351 = vadd.f32 %v4190, %v4350
        %v4352 = vpop.f32.mrb[0].mxu0
        %v4353 = vpop.f32.mrb[0].mxu0
        %v4354 = vadd.f32 %v4193, %v4353
        %v4355 = vpop.f32.mrb[0].mxu0
        %4356 = vmatprep.mubr.bf16.mxu0 0
        %4357 = vmatmul.mubr.bf16.gmra.mrb[0].mxu0 %v3821
        %v4358 = vpop.f32.mrb[0].mxu0
        %v4359 = vadd.f32 %v4198, %v4358
        %v4360 = vpop.f32.mrb[0].mxu0
        %v4361 = vpop.f32.mrb[0].mxu0
        %v4362 = vadd.f32 %v4201, %v4361
        %v4363 = vpop.f32.mrb[0].mxu0
        %4364 = vmatprep.mubr.bf16.mxu0 0
        %4365 = vmatmul.mubr.bf16.gmra.mrb[0].mxu0 %v3824
        %v4366 = vpop.f32.mrb[0].mxu0
        %v4367 = vadd.f32 %v4206, %v4366
        %v4368 = vpop.f32.mrb[0].mxu0
        %v4369 = vpop.f32.mrb[0].mxu0
        %v4370 = vadd.f32 %v4209, %v4369
        %v4371 = vpop.f32.mrb[0].mxu0
        %4372 = vmatprep.mubr.bf16.mxu0 0
        %4373 = vmatmul.mubr.bf16.gmra.mrb[0].mxu0 %v3827
        %v4374 = vpop.f32.mrb[0].mxu0
        %v4375 = vadd.f32 %v4214, %v4374
        %v4376 = vpop.f32.mrb[0].mxu0
        %v4377 = vpop.f32.mrb[0].mxu0
        %v4378 = vadd.f32 %v4217, %v4377
        %v4379 = vpop.f32.mrb[0].mxu0
        %4380 = vmatprep.mubr.bf16.mxu0 0
        %4381 = vmatmul.mubr.bf16.gmra.mrb[0].mxu0 %v3830
        %v4382 = vpop.f32.mrb[0].mxu0
        %v4383 = vadd.f32 %v4222, %v4382
        %v4384 = vpop.f32.mrb[0].mxu0
        %v4385 = vpop.f32.mrb[0].mxu0
        %v4386 = vadd.f32 %v4225, %v4385
        %v4387 = vpop.f32.mrb[0].mxu0
        %4388 = vmatprep.mubr.bf16.mxu0 0
        %4389 = vmatmul.mubr.bf16.gmra.mrb[0].mxu0 %v3881
        %v4390 = vpop.f32.mrb[0].mxu0
        %v4391 = vadd.f32 %v4230, %v4390
        %v4392 = vpop.f32.mrb[0].mxu0
        %v4393 = vpop.f32.mrb[0].mxu0
        %v4394 = vadd.f32 %v4233, %v4393
        %v4395 = vpop.f32.mrb[0].mxu0
        %4396 = vdwg.mxu0
        %v4445 = vunpack.c.l.b16 %v3831
        %v4446 = vunpack.c.l.b16 %v3832
        %v4447 = vunpack.c.l.b16 %v3833
        %v4448 = vunpack.c.l.b16 %v3834
        %v4449 = vunpack.c.l.b16 %v3835
        %v4450 = vunpack.c.l.b16 %v3836
        %v4451 = vunpack.c.l.b16 %v3837
        %v4452 = vunpack.c.l.b16 %v3838
        %v4453 = vunpack.c.l.b16 %v3839
        %v4454 = vunpack.c.l.b16 %v3840
        %v4455 = vunpack.c.l.b16 %v3841
        %v4456 = vunpack.c.l.b16 %v3842
        %v4457 = vunpack.c.l.b16 %v3843
        %v4458 = vunpack.c.l.b16 %v3844
        %v4459 = vunpack.c.l.b16 %v3845
        %v4460 = vunpack.c.l.b16 %v3846
        %v4461 = vunpack.c.l.b16 %v3847
        %v4462 = vunpack.c.l.b16 %v3848
        %v4463 = vunpack.c.l.b16 %v3849
        %v4464 = vunpack.c.l.b16 %v3850
        %v4465 = vunpack.c.l.b16 %v3851
        %v4466 = vunpack.c.l.b16 %v3852
        %v4467 = vunpack.c.l.b16 %v3853
        %v4468 = vunpack.c.l.b16 %v3854
        %v4469 = vunpack.c.l.b16 %v3855
        %v4470 = vunpack.c.l.b16 %v3856
        %v4471 = vunpack.c.l.b16 %v3857
        %v4472 = vunpack.c.l.b16 %v3858
        %v4473 = vunpack.c.l.b16 %v3859
        %v4474 = vunpack.c.l.b16 %v3860
        %v4475 = vunpack.c.l.b16 %v3861
        %v4476 = vunpack.c.l.b16 %v3862
        %v4477 = vunpack.c.l.b16 %v3863
        %v4478 = vunpack.c.l.b16 %v3864
        %v4479 = vunpack.c.l.b16 %v3865
        %v4480 = vunpack.c.l.b16 %v3866
        %v4481 = vunpack.c.l.b16 %v3867
        %v4482 = vunpack.c.l.b16 %v3868
        %v4483 = vunpack.c.l.b16 %v3869
        %v4484 = vunpack.c.l.b16 %v3870
        %v4485 = vunpack.c.l.b16 %v3871
        %v4486 = vunpack.c.l.b16 %v3872
        %v4487 = vunpack.c.l.b16 %v3873
        %v4488 = vunpack.c.l.b16 %v3874
        %v4489 = vunpack.c.l.b16 %v3875
        %v4490 = vunpack.c.l.b16 %v3876
        %v4491 = vunpack.c.l.b16 %v3877
        %v4492 = vunpack.c.l.b16 %v3878
        %v4493 = vpack.c.b16 %v4446, %v4445
        %v4494 = vpack.c.b16 %v4448, %v4447
        %v4495 = vpack.c.b16 %v4450, %v4449
        %v4496 = vpack.c.b16 %v4452, %v4451
        %v4497 = vpack.c.b16 %v4454, %v4453
        %v4498 = vpack.c.b16 %v4456, %v4455
        %v4499 = vpack.c.b16 %v4458, %v4457
        %v4500 = vpack.c.b16 %v4460, %v4459
        %v4501 = vpack.c.b16 %v4462, %v4461
        %v4502 = vpack.c.b16 %v4464, %v4463
        %v4503 = vpack.c.b16 %v4466, %v4465
        %v4504 = vpack.c.b16 %v4468, %v4467
        %v4505 = vpack.c.b16 %v4470, %v4469
        %v4506 = vpack.c.b16 %v4472, %v4471
        %v4507 = vpack.c.b16 %v4474, %v4473
        %v4508 = vpack.c.b16 %v4476, %v4475
        %v4509 = vpack.c.b16 %v4478, %v4477
        %v4510 = vpack.c.b16 %v4480, %v4479
        %v4511 = vpack.c.b16 %v4482, %v4481
        %v4512 = vpack.c.b16 %v4484, %v4483
        %v4513 = vpack.c.b16 %v4486, %v4485
        %v4514 = vpack.c.b16 %v4488, %v4487
        %v4515 = vpack.c.b16 %v4490, %v4489
        %v4516 = vpack.c.b16 %v4492, %v4491
        %4541 = vmatprep.subr.bf16.mxu0 0
        %4542 = vmatpush1.bf16.msra.mxu0 %v4493
        %4543 = vmatprep.subr.bf16.mxu0 0
        %4544 = vmatpush1.bf16.msra.mxu0 %v4494
        %4545 = vmatprep.subr.bf16.mxu0 0
        %4546 = vmatpush1.bf16.msra.mxu0 %v4495
        %4547 = vmatprep.subr.bf16.mxu0 0
        %4548 = vmatpush1.bf16.msra.mxu0 %v4496
        %4549 = vmatprep.subr.bf16.mxu0 0
        %4550 = vmatpush1.bf16.msra.mxu0 %v4497
        %4551 = vmatprep.subr.bf16.mxu0 0
        %4552 = vmatpush1.bf16.msra.mxu0 %v4498
        %4553 = vmatprep.subr.bf16.mxu0 0
        %4554 = vmatpush1.bf16.msra.mxu0 %v4499
        %4555 = vmatprep.subr.bf16.mxu0 0
        %4556 = vmatpush1.bf16.msra.mxu0 %v4500
        %4557 = vmatprep.subr.bf16.mxu0 0
        %4558 = vmatpush1.bf16.msra.mxu0 %v4501
        %4559 = vmatprep.subr.bf16.mxu0 0
        %4560 = vmatpush1.bf16.msra.mxu0 %v4502
        %4561 = vmatprep.subr.bf16.mxu0 0
        %4562 = vmatpush1.bf16.msra.mxu0 %v4503
        %4563 = vmatprep.subr.bf16.mxu0 0
        %4564 = vmatpush1.bf16.msra.mxu0 %v4504
        %4565 = vmatprep.subr.bf16.mxu0 0
        %4566 = vmatpush1.bf16.msra.mxu0 %v4505
        %4567 = vmatprep.subr.bf16.mxu0 0
        %4568 = vmatpush1.bf16.msra.mxu0 %v4506
        %4569 = vmatprep.subr.bf16.mxu0 0
        %4570 = vmatpush1.bf16.msra.mxu0 %v4507
        %4571 = vmatprep.subr.bf16.mxu0 0
        %4572 = vmatpush1.bf16.msra.mxu0 %v4508
        %4573 = vmatprep.mubr.bf16.mxu0 %v3784
        %4574 = vmatmul.mubr.bf16.gmra.mrb[0].mxu0 %v3783
        %v4575 = vpop.f32.mrb[0].mxu0
        %v4576 = vadd.f32 %v4271, %v4575
        %v4577 = vpop.f32.mrb[0].mxu0
        %v4578 = vpop.f32.mrb[0].mxu0
        %v4579 = vadd.f32 %v4274, %v4578
        %v4580 = vpop.f32.mrb[0].mxu0
        %4581 = vmatprep.mubr.bf16.mxu0 %v3787
        %4582 = vmatmul.mubr.bf16.gmra.mrb[0].mxu0 %v3786
        %v4583 = vpop.f32.mrb[0].mxu0
        %v4584 = vadd.f32 %v4279, %v4583
        %v4585 = vpop.f32.mrb[0].mxu0
        %v4586 = vpop.f32.mrb[0].mxu0
        %v4587 = vadd.f32 %v4282, %v4586
        %v4588 = vpop.f32.mrb[0].mxu0
        %4589 = vmatprep.mubr.bf16.mxu0 %v3790
        %4590 = vmatmul.mubr.bf16.gmra.mrb[0].mxu0 %v3789
        %v4591 = vpop.f32.mrb[0].mxu0
        %v4592 = vadd.f32 %v4287, %v4591
        %v4593 = vpop.f32.mrb[0].mxu0
        %v4594 = vpop.f32.mrb[0].mxu0
        %v4595 = vadd.f32 %v4290, %v4594
        %v4596 = vpop.f32.mrb[0].mxu0
        %4597 = vmatprep.mubr.bf16.mxu0 %v3793
        %4598 = vmatmul.mubr.bf16.gmra.mrb[0].mxu0 %v3792
        %v4599 = vpop.f32.mrb[0].mxu0
        %v4600 = vadd.f32 %v4295, %v4599
        %v4601 = vpop.f32.mrb[0].mxu0
        %v4602 = vpop.f32.mrb[0].mxu0
        %v4603 = vadd.f32 %v4298, %v4602
        %v4604 = vpop.f32.mrb[0].mxu0
        %4605 = vmatprep.mubr.bf16.mxu0 %v3796
        %4606 = vmatmul.mubr.bf16.gmra.mrb[0].mxu0 %v3795
        %v4607 = vpop.f32.mrb[0].mxu0
        %v4608 = vadd.f32 %v4303, %v4607
        %v4609 = vpop.f32.mrb[0].mxu0
        %v4610 = vpop.f32.mrb[0].mxu0
        %v4611 = vadd.f32 %v4306, %v4610
        %v4612 = vpop.f32.mrb[0].mxu0
        %4613 = vmatprep.mubr.bf16.mxu0 %v3799
        %4614 = vmatmul.mubr.bf16.gmra.mrb[0].mxu0 %v3798
        %v4615 = vpop.f32.mrb[0].mxu0
        %v4616 = vadd.f32 %v4311, %v4615
        %v4617 = vpop.f32.mrb[0].mxu0
        %v4618 = vpop.f32.mrb[0].mxu0
        %v4619 = vadd.f32 %v4314, %v4618
        %v4620 = vpop.f32.mrb[0].mxu0
        %4621 = vmatprep.mubr.bf16.mxu0 %v3802
        %4622 = vmatmul.mubr.bf16.gmra.mrb[0].mxu0 %v3801
        %v4623 = vpop.f32.mrb[0].mxu0
        %v4624 = vadd.f32 %v4319, %v4623
        %v4625 = vpop.f32.mrb[0].mxu0
        %v4626 = vpop.f32.mrb[0].mxu0
        %v4627 = vadd.f32 %v4322, %v4626
        %v4628 = vpop.f32.mrb[0].mxu0
        %4629 = vmatprep.mubr.bf16.mxu0 %v3805
        %4630 = vmatmul.mubr.bf16.gmra.mrb[0].mxu0 %v3804
        %v4631 = vpop.f32.mrb[0].mxu0
        %v4632 = vadd.f32 %v4327, %v4631
        %v4633 = vpop.f32.mrb[0].mxu0
        %v4634 = vpop.f32.mrb[0].mxu0
        %v4635 = vadd.f32 %v4330, %v4634
        %v4636 = vpop.f32.mrb[0].mxu0
        %4637 = vmatprep.mubr.bf16.mxu0 %v3808
        %4638 = vmatmul.mubr.bf16.gmra.mrb[0].mxu0 %v3807
        %v4639 = vpop.f32.mrb[0].mxu0
        %v4640 = vadd.f32 %v4335, %v4639
        %v4641 = vpop.f32.mrb[0].mxu0
        %v4642 = vpop.f32.mrb[0].mxu0
        %v4643 = vadd.f32 %v4338, %v4642
        %v4644 = vpop.f32.mrb[0].mxu0
        %4645 = vmatprep.mubr.bf16.mxu0 %v3811
        %4646 = vmatmul.mubr.bf16.gmra.mrb[0].mxu0 %v3810
        %v4647 = vpop.f32.mrb[0].mxu0
        %v4648 = vadd.f32 %v4343, %v4647
        %v4649 = vpop.f32.mrb[0].mxu0
        %v4650 = vpop.f32.mrb[0].mxu0
        %v4651 = vadd.f32 %v4346, %v4650
        %v4652 = vpop.f32.mrb[0].mxu0
        %4653 = vmatprep.mubr.bf16.mxu0 %v3814
        %4654 = vmatmul.mubr.bf16.gmra.mrb[0].mxu0 %v3813
        %v4655 = vpop.f32.mrb[0].mxu0
        %v4656 = vadd.f32 %v4351, %v4655
        %v4657 = vpop.f32.mrb[0].mxu0
        %v4658 = vpop.f32.mrb[0].mxu0
        %v4659 = vadd.f32 %v4354, %v4658
        %v4660 = vpop.f32.mrb[0].mxu0
        %4661 = vmatprep.mubr.bf16.mxu0 %v3817
        %4662 = vmatmul.mubr.bf16.gmra.mrb[0].mxu0 %v3816
        %v4663 = vpop.f32.mrb[0].mxu0
        %v4664 = vadd.f32 %v4359, %v4663
        %v4665 = vpop.f32.mrb[0].mxu0
        %v4666 = vpop.f32.mrb[0].mxu0
        %v4667 = vadd.f32 %v4362, %v4666
        %v4668 = vpop.f32.mrb[0].mxu0
        %4669 = vmatprep.mubr.bf16.mxu0 %v3820
        %4670 = vmatmul.mubr.bf16.gmra.mrb[0].mxu0 %v3819
        %v4671 = vpop.f32.mrb[0].mxu0
        %v4672 = vadd.f32 %v4367, %v4671
        %v4673 = vpop.f32.mrb[0].mxu0
        %v4674 = vpop.f32.mrb[0].mxu0
        %v4675 = vadd.f32 %v4370, %v4674
        %v4676 = vpop.f32.mrb[0].mxu0
        %4677 = vmatprep.mubr.bf16.mxu0 %v3823
        %4678 = vmatmul.mubr.bf16.gmra.mrb[0].mxu0 %v3822
        %v4679 = vpop.f32.mrb[0].mxu0
        %v4680 = vadd.f32 %v4375, %v4679
        %v4681 = vpop.f32.mrb[0].mxu0
        %v4682 = vpop.f32.mrb[0].mxu0
        %v4683 = vadd.f32 %v4378, %v4682
        %v4684 = vpop.f32.mrb[0].mxu0
        %4685 = vmatprep.mubr.bf16.mxu0 %v3826
        %4686 = vmatmul.mubr.bf16.gmra.mrb[0].mxu0 %v3825
        %v4687 = vpop.f32.mrb[0].mxu0
        %v4688 = vadd.f32 %v4383, %v4687
        %v4689 = vpop.f32.mrb[0].mxu0
        %v4690 = vpop.f32.mrb[0].mxu0
        %v4691 = vadd.f32 %v4386, %v4690
        %v4692 = vpop.f32.mrb[0].mxu0
        %4693 = vmatprep.mubr.bf16.mxu0 %v3829
        %4694 = vmatmul.mubr.bf16.gmra.mrb[0].mxu0 %v3828
        %v4695 = vpop.f32.mrb[0].mxu0
        %v4696 = vadd.f32 %v4391, %v4695
        %v4697 = vpop.f32.mrb[0].mxu0
        %v4698 = vpop.f32.mrb[0].mxu0
        %v4699 = vadd.f32 %v4394, %v4698
        %v4700 = vpop.f32.mrb[0].mxu0
        %4701 = vdwg.mxu0
        %4702 = vmatprep.subr.bf16.mxu0 0
        %4703 = vmatpush1.bf16.msra.mxu0 %v4509
        %4704 = vmatprep.subr.bf16.mxu0 0
        %4705 = vmatpush1.bf16.msra.mxu0 %v4510
        %4706 = vmatprep.subr.bf16.mxu0 0
        %4707 = vmatpush1.bf16.msra.mxu0 %v4511
        %4708 = vmatprep.subr.bf16.mxu0 0
        %4709 = vmatpush1.bf16.msra.mxu0 %v4512
        %4710 = vmatprep.subr.bf16.mxu0 0
        %4711 = vmatpush1.bf16.msra.mxu0 %v4513
        %4712 = vmatprep.subr.bf16.mxu0 0
        %4713 = vmatpush1.bf16.msra.mxu0 %v4514
        %4714 = vmatprep.subr.bf16.mxu0 0
        %4715 = vmatpush1.bf16.msra.mxu0 %v4515
        %4716 = vmatprep.subr.bf16.mxu0 0
        %4717 = vmatpush1.bf16.msra.mxu0 %v4516
        %4718 = vmatprep.subr.bf16.mxu0 0
        %4719 = vmatpush1.bf16.msra.mxu0 0
        %4720 = vmatprep.subr.bf16.mxu0 0
        %4721 = vmatpush1.bf16.msra.mxu0 0
        %4722 = vmatprep.subr.bf16.mxu0 0
        %4723 = vmatpush1.bf16.msra.mxu0 0
        %4724 = vmatprep.subr.bf16.mxu0 0
        %4725 = vmatpush1.bf16.msra.mxu0 0
        %4726 = vmatprep.subr.bf16.mxu0 0
        %4727 = vmatpush1.bf16.msra.mxu0 0
        %4728 = vmatprep.subr.bf16.mxu0 0
        %4729 = vmatpush1.bf16.msra.mxu0 0
        %4730 = vmatprep.subr.bf16.mxu0 0
        %4731 = vmatpush1.bf16.msra.mxu0 0
        %4732 = vmatprep.subr.bf16.mxu0 0
        %4733 = vmatpush1.bf16.msra.mxu0 0
        %4734 = vmatprep.mubr.bf16.mxu0 0
        %4735 = vmatmul.mubr.bf16.gmra.mrb[0].mxu0 %v3785
        %v4736 = vpop.f32.mrb[0].mxu0
        %v4737 = vadd.f32 %v4576, %v4736
        %v4738 = vpop.f32.mrb[0].mxu0
        %v4739 = vpop.f32.mrb[0].mxu0
        %v4740 = vadd.f32 %v4579, %v4739
        %v4741 = vpop.f32.mrb[0].mxu0
        %4742 = vmatprep.mubr.bf16.mxu0 0
        %4743 = vmatmul.mubr.bf16.gmra.mrb[0].mxu0 %v3788
        %v4744 = vpop.f32.mrb[0].mxu0
        %v4745 = vadd.f32 %v4584, %v4744
        %v4746 = vpop.f32.mrb[0].mxu0
        %v4747 = vpop.f32.mrb[0].mxu0
        %v4748 = vadd.f32 %v4587, %v4747
        %v4749 = vpop.f32.mrb[0].mxu0
        %4750 = vmatprep.mubr.bf16.mxu0 0
        %4751 = vmatmul.mubr.bf16.gmra.mrb[0].mxu0 %v3791
        %v4752 = vpop.f32.mrb[0].mxu0
        %v4753 = vadd.f32 %v4592, %v4752
        %v4754 = vpop.f32.mrb[0].mxu0
        %v4755 = vpop.f32.mrb[0].mxu0
        %v4756 = vadd.f32 %v4595, %v4755
        %v4757 = vpop.f32.mrb[0].mxu0
        %4758 = vmatprep.mubr.bf16.mxu0 0
        %4759 = vmatmul.mubr.bf16.gmra.mrb[0].mxu0 %v3794
        %v4760 = vpop.f32.mrb[0].mxu0
        %v4761 = vadd.f32 %v4600, %v4760
        %v4762 = vpop.f32.mrb[0].mxu0
        %v4763 = vpop.f32.mrb[0].mxu0
        %v4764 = vadd.f32 %v4603, %v4763
        %v4765 = vpop.f32.mrb[0].mxu0
        %4766 = vmatprep.mubr.bf16.mxu0 0
        %4767 = vmatmul.mubr.bf16.gmra.mrb[0].mxu0 %v3797
        %v4768 = vpop.f32.mrb[0].mxu0
        %v4769 = vadd.f32 %v4608, %v4768
        %v4770 = vpop.f32.mrb[0].mxu0
        %v4771 = vpop.f32.mrb[0].mxu0
        %v4772 = vadd.f32 %v4611, %v4771
        %v4773 = vpop.f32.mrb[0].mxu0
        %4774 = vmatprep.mubr.bf16.mxu0 0
        %4775 = vmatmul.mubr.bf16.gmra.mrb[0].mxu0 %v3800
        %v4776 = vpop.f32.mrb[0].mxu0
        %v4777 = vadd.f32 %v4616, %v4776
        %v4778 = vpop.f32.mrb[0].mxu0
        %v4779 = vpop.f32.mrb[0].mxu0
        %v4780 = vadd.f32 %v4619, %v4779
        %v4781 = vpop.f32.mrb[0].mxu0
        %4782 = vmatprep.mubr.bf16.mxu0 0
        %4783 = vmatmul.mubr.bf16.gmra.mrb[0].mxu0 %v3803
        %v4784 = vpop.f32.mrb[0].mxu0
        %v4785 = vadd.f32 %v4624, %v4784
        %v4786 = vpop.f32.mrb[0].mxu0
        %v4787 = vpop.f32.mrb[0].mxu0
        %v4788 = vadd.f32 %v4627, %v4787
        %v4789 = vpop.f32.mrb[0].mxu0
        %4790 = vmatprep.mubr.bf16.mxu0 0
        %4791 = vmatmul.mubr.bf16.gmra.mrb[0].mxu0 %v3806
        %v4792 = vpop.f32.mrb[0].mxu0
        %v4793 = vadd.f32 %v4632, %v4792
        %v4794 = vpop.f32.mrb[0].mxu0
        %v4795 = vpop.f32.mrb[0].mxu0
        %v4796 = vadd.f32 %v4635, %v4795
        %v4797 = vpop.f32.mrb[0].mxu0
        %4798 = vmatprep.mubr.bf16.mxu0 0
        %4799 = vmatmul.mubr.bf16.gmra.mrb[0].mxu0 %v3809
        %v4800 = vpop.f32.mrb[0].mxu0
        %v4801 = vadd.f32 %v4640, %v4800
        %v4802 = vpop.f32.mrb[0].mxu0
        %v4803 = vpop.f32.mrb[0].mxu0
        %v4804 = vadd.f32 %v4643, %v4803
        %v4805 = vpop.f32.mrb[0].mxu0
        %4806 = vmatprep.mubr.bf16.mxu0 0
        %4807 = vmatmul.mubr.bf16.gmra.mrb[0].mxu0 %v3812
        %v4808 = vpop.f32.mrb[0].mxu0
        %v4809 = vadd.f32 %v4648, %v4808
        %v4810 = vpop.f32.mrb[0].mxu0
        %v4811 = vpop.f32.mrb[0].mxu0
        %v4812 = vadd.f32 %v4651, %v4811
        %v4813 = vpop.f32.mrb[0].mxu0
        %4814 = vmatprep.mubr.bf16.mxu0 0
        %4815 = vmatmul.mubr.bf16.gmra.mrb[0].mxu0 %v3815
        %v4816 = vpop.f32.mrb[0].mxu0
        %v4817 = vadd.f32 %v4656, %v4816
        %v4818 = vpop.f32.mrb[0].mxu0
        %v4819 = vpop.f32.mrb[0].mxu0
        %v4820 = vadd.f32 %v4659, %v4819
        %v4821 = vpop.f32.mrb[0].mxu0
        %4822 = vmatprep.mubr.bf16.mxu0 0
        %4823 = vmatmul.mubr.bf16.gmra.mrb[0].mxu0 %v3818
        %v4824 = vpop.f32.mrb[0].mxu0
        %v4825 = vadd.f32 %v4664, %v4824
        %v4826 = vpop.f32.mrb[0].mxu0
        %v4827 = vpop.f32.mrb[0].mxu0
        %v4828 = vadd.f32 %v4667, %v4827
        %v4829 = vpop.f32.mrb[0].mxu0
        %4830 = vmatprep.mubr.bf16.mxu0 0
        %4831 = vmatmul.mubr.bf16.gmra.mrb[0].mxu0 %v3821
        %v4832 = vpop.f32.mrb[0].mxu0
        %v4833 = vadd.f32 %v4672, %v4832
        %v4834 = vpop.f32.mrb[0].mxu0
        %v4835 = vpop.f32.mrb[0].mxu0
        %v4836 = vadd.f32 %v4675, %v4835
        %v4837 = vpop.f32.mrb[0].mxu0
        %4838 = vmatprep.mubr.bf16.mxu0 0
        %4839 = vmatmul.mubr.bf16.gmra.mrb[0].mxu0 %v3824
        %v4840 = vpop.f32.mrb[0].mxu0
        %v4841 = vadd.f32 %v4680, %v4840
        %v4842 = vpop.f32.mrb[0].mxu0
        %v4843 = vpop.f32.mrb[0].mxu0
        %v4844 = vadd.f32 %v4683, %v4843
        %v4845 = vpop.f32.mrb[0].mxu0
        %4846 = vmatprep.mubr.bf16.mxu0 0
        %4847 = vmatmul.mubr.bf16.gmra.mrb[0].mxu0 %v3827
        %v4848 = vpop.f32.mrb[0].mxu0
        %v4849 = vadd.f32 %v4688, %v4848
        %v4850 = vpop.f32.mrb[0].mxu0
        %v4851 = vpop.f32.mrb[0].mxu0
        %v4852 = vadd.f32 %v4691, %v4851
        %v4853 = vpop.f32.mrb[0].mxu0
        %4854 = vmatprep.mubr.bf16.mxu0 0
        %4855 = vmatmul.mubr.bf16.gmra.mrb[0].mxu0 %v3830
        %v4856 = vpop.f32.mrb[0].mxu0
        %v4857 = vadd.f32 %v4696, %v4856
        %v4858 = vpop.f32.mrb[0].mxu0
        %v4859 = vpop.f32.mrb[0].mxu0
        %v4860 = vadd.f32 %v4699, %v4859
        %v4861 = vpop.f32.mrb[0].mxu0
        %4862 = vdwg.mxu0
        %v4863 = vld [vmem:[#allocation3 + $0x30] sm:$0xff]
        %v4864 = vld [vmem:[#allocation3 + $0x38] sm:$0xff]
        %v4865 = vld [vmem:[#allocation3 + $0x40] sm:$0xff]
        %v4866 = vld [vmem:[#allocation3 + $0x48] sm:$0xff]
        %v4867 = vld [vmem:[#allocation3 + $0x50] sm:$0xff]
        %v4868 = vld [vmem:[#allocation3 + $0x58] sm:$0xff]
        %v4869 = vld [vmem:[#allocation3 + $0x60] sm:$0xff]
        %v4870 = vld [vmem:[#allocation3 + $0x68] sm:$0xff]
        %v4871 = vld [vmem:[#allocation3 + $0x70] sm:$0xff]
        %v4872 = vld [vmem:[#allocation3 + $0x78] sm:$0xff]
        %v4873 = vld [vmem:[#allocation3 + $0x80] sm:$0xff]
        %v4874 = vld [vmem:[#allocation3 + $0x88] sm:$0xff]
        %v4875 = vld [vmem:[#allocation3 + $0x90] sm:$0xff]
        %v4876 = vld [vmem:[#allocation3 + $0x98] sm:$0xff]
        %v4877 = vld [vmem:[#allocation3 + $0xa0] sm:$0xff]
        %v4878 = vld [vmem:[#allocation3 + $0xa8] sm:$0xff]
        %v4879 = vld [vmem:[#allocation3 + $0xb0] sm:$0xff]
        %v4880 = vld [vmem:[#allocation3 + $0xb8] sm:$0xff]
        %v4881 = vld [vmem:[#allocation3 + $0xc0] sm:$0xff]
        %v4882 = vld [vmem:[#allocation3 + $0xc8] sm:$0xff]
        %v4883 = vld [vmem:[#allocation3 + $0xd0] sm:$0xff]
        %v4884 = vld [vmem:[#allocation3 + $0xd8] sm:$0xff]
        %v4885 = vld [vmem:[#allocation3 + $0xe0] sm:$0xff]
        %v4886 = vld [vmem:[#allocation3 + $0xe8] sm:$0xff]
        %v4887 = vld [vmem:[#allocation3 + $0xf0] sm:$0xff]
        %v4888 = vld [vmem:[#allocation3 + $0xf8] sm:$0xff]
        %v4889 = vld [vmem:[#allocation3 + $0x100] sm:$0xff]
        %v4890 = vld [vmem:[#allocation3 + $0x108] sm:$0xff]
        %v4891 = vld [vmem:[#allocation3 + $0x110] sm:$0xff]
        %v4892 = vld [vmem:[#allocation3 + $0x118] sm:$0xff]
        %v4893 = vld [vmem:[#allocation3 + $0x120] sm:$0xff]
        %v4894 = vld [vmem:[#allocation3 + $0x128] sm:$0xff]
        %v4895 = vld [vmem:[#allocation3 + $0x130] sm:$0xff]
        %v4896 = vld [vmem:[#allocation3 + $0x138] sm:$0xff]
        %v4897 = vld [vmem:[#allocation3 + $0x140] sm:$0xff]
        %v4898 = vld [vmem:[#allocation3 + $0x148] sm:$0xff]
        %v4899 = vld [vmem:[#allocation3 + $0x150] sm:$0xff]
        %v4900 = vld [vmem:[#allocation3 + $0x158] sm:$0xff]
        %v4901 = vld [vmem:[#allocation3 + $0x160] sm:$0xff]
        %v4902 = vld [vmem:[#allocation3 + $0x168] sm:$0xff]
        %v4903 = vld [vmem:[#allocation3 + $0x170] sm:$0xff]
        %v4904 = vld [vmem:[#allocation3 + $0x178] sm:$0xff]
        %v4905 = vld [vmem:[#allocation3 + $0x180] sm:$0xff]
        %v4906 = vld [vmem:[#allocation3 + $0x188] sm:$0xff]
        %v4907 = vld [vmem:[#allocation3 + $0x190] sm:$0xff]
        %v4908 = vld [vmem:[#allocation3 + $0x198] sm:$0xff]
        %v4909 = vld [vmem:[#allocation3 + $0x1a0] sm:$0xff]
        %v4910 = vld [vmem:[#allocation3 + $0x1a8] sm:$0xff]
        %s4911 = scalar_lea.vmem [#allocation4], 384
        %v4912 = vld [vmem:[%s4911] sm:$0xf]
        %v4913 = vld [vmem:[%s4911 + $0x4] sm:$0xf]
        %v4914 = vld [vmem:[%s4911 + $0x8] sm:$0xf]
        %v4915 = vld [vmem:[%s4911 + $0xc] sm:$0xf]
        %v4916 = vld [vmem:[%s4911 + $0x10] sm:$0xf]
        %v4917 = vld [vmem:[%s4911 + $0x14] sm:$0xf]
        %v4918 = vld [vmem:[%s4911 + $0x18] sm:$0xf]
        %v4919 = vld [vmem:[%s4911 + $0x1c] sm:$0xf]
        %v4920 = vld [vmem:[%s4911 + $0x20] sm:$0xf]
        %v4921 = vld [vmem:[%s4911 + $0x24] sm:$0xf]
        %v4922 = vld [vmem:[%s4911 + $0x28] sm:$0xf]
        %v4923 = vld [vmem:[%s4911 + $0x2c] sm:$0xf]
        %v4924 = vld [vmem:[%s4911 + $0x30] sm:$0xf]
        %v4925 = vld [vmem:[%s4911 + $0x34] sm:$0xf]
        %v4926 = vld [vmem:[%s4911 + $0x38] sm:$0xf]
        %v4927 = vld [vmem:[%s4911 + $0x3c] sm:$0xf]
        %v4928 = vld [vmem:[%s4911 + $0x40] sm:$0xf]
        %v4929 = vld [vmem:[%s4911 + $0x44] sm:$0xf]
        %v4930 = vld [vmem:[%s4911 + $0x48] sm:$0xf]
        %v4931 = vld [vmem:[%s4911 + $0x4c] sm:$0xf]
        %v4932 = vld [vmem:[%s4911 + $0x50] sm:$0xf]
        %v4933 = vld [vmem:[%s4911 + $0x54] sm:$0xf]
        %v4934 = vld [vmem:[%s4911 + $0x58] sm:$0xf]
        %v4935 = vld [vmem:[%s4911 + $0x5c] sm:$0xf]
        %v4936 = vld [vmem:[%s4911 + $0x60] sm:$0xf]
        %v4937 = vld [vmem:[%s4911 + $0x64] sm:$0xf]
        %v4938 = vld [vmem:[%s4911 + $0x68] sm:$0xf]
        %v4939 = vld [vmem:[%s4911 + $0x6c] sm:$0xf]
        %v4940 = vld [vmem:[%s4911 + $0x70] sm:$0xf]
        %v4941 = vld [vmem:[%s4911 + $0x74] sm:$0xf]
        %v4942 = vld [vmem:[%s4911 + $0x78] sm:$0xf]
        %v4943 = vld [vmem:[%s4911 + $0x7c] sm:$0xf]
        %v4944 = vld [vmem:[%s4911 + $0x80] sm:$0xf]
        %v4945 = vld [vmem:[%s4911 + $0x84] sm:$0xf]
        %v4946 = vld [vmem:[%s4911 + $0x88] sm:$0xf]
        %v4947 = vld [vmem:[%s4911 + $0x8c] sm:$0xf]
        %v4948 = vld [vmem:[%s4911 + $0x90] sm:$0xf]
        %v4949 = vld [vmem:[%s4911 + $0x94] sm:$0xf]
        %v4950 = vld [vmem:[%s4911 + $0x98] sm:$0xf]
        %v4951 = vld [vmem:[%s4911 + $0x9c] sm:$0xf]
        %v4952 = vld [vmem:[%s4911 + $0xa0] sm:$0xf]
        %v4953 = vld [vmem:[%s4911 + $0xa4] sm:$0xf]
        %v4954 = vld [vmem:[%s4911 + $0xa8] sm:$0xf]
        %v4955 = vld [vmem:[%s4911 + $0xac] sm:$0xf]
        %v4956 = vld [vmem:[%s4911 + $0xb0] sm:$0xf]
        %v4957 = vld [vmem:[%s4911 + $0xb4] sm:$0xf]
        %v4958 = vld [vmem:[%s4911 + $0xb8] sm:$0xf]
        %v4959 = vld [vmem:[%s4911 + $0xbc] sm:$0xf]
        %v5008 = vunpack.c.l.b16 %v4912
        %v5009 = vunpack.c.l.b16 %v4913
        %v5010 = vunpack.c.l.b16 %v4914
        %v5011 = vunpack.c.l.b16 %v4915
        %v5012 = vunpack.c.l.b16 %v4916
        %v5013 = vunpack.c.l.b16 %v4917
        %v5014 = vunpack.c.l.b16 %v4918
        %v5015 = vunpack.c.l.b16 %v4919
        %v5016 = vunpack.c.l.b16 %v4920
        %v5017 = vunpack.c.l.b16 %v4921
        %v5018 = vunpack.c.l.b16 %v4922
        %v5019 = vunpack.c.l.b16 %v4923
        %v5020 = vunpack.c.l.b16 %v4924
        %v5021 = vunpack.c.l.b16 %v4925
        %v5022 = vunpack.c.l.b16 %v4926
        %v5023 = vunpack.c.l.b16 %v4927
        %v5024 = vunpack.c.l.b16 %v4928
        %v5025 = vunpack.c.l.b16 %v4929
        %v5026 = vunpack.c.l.b16 %v4930
        %v5027 = vunpack.c.l.b16 %v4931
        %v5028 = vunpack.c.l.b16 %v4932
        %v5029 = vunpack.c.l.b16 %v4933
        %v5030 = vunpack.c.l.b16 %v4934
        %v5031 = vunpack.c.l.b16 %v4935
        %v5032 = vunpack.c.l.b16 %v4936
        %v5033 = vunpack.c.l.b16 %v4937
        %v5034 = vunpack.c.l.b16 %v4938
        %v5035 = vunpack.c.l.b16 %v4939
        %v5036 = vunpack.c.l.b16 %v4940
        %v5037 = vunpack.c.l.b16 %v4941
        %v5038 = vunpack.c.l.b16 %v4942
        %v5039 = vunpack.c.l.b16 %v4943
        %v5040 = vunpack.c.l.b16 %v4944
        %v5041 = vunpack.c.l.b16 %v4945
        %v5042 = vunpack.c.l.b16 %v4946
        %v5043 = vunpack.c.l.b16 %v4947
        %v5044 = vunpack.c.l.b16 %v4948
        %v5045 = vunpack.c.l.b16 %v4949
        %v5046 = vunpack.c.l.b16 %v4950
        %v5047 = vunpack.c.l.b16 %v4951
        %v5048 = vunpack.c.l.b16 %v4952
        %v5049 = vunpack.c.l.b16 %v4953
        %v5050 = vunpack.c.l.b16 %v4954
        %v5051 = vunpack.c.l.b16 %v4955
        %v5052 = vunpack.c.l.b16 %v4956
        %v5053 = vunpack.c.l.b16 %v4957
        %v5054 = vunpack.c.l.b16 %v4958
        %v5055 = vunpack.c.l.b16 %v4959
        %v5056 = vpack.c.b16 %v5009, %v5008
        %v5057 = vpack.c.b16 %v5011, %v5010
        %v5058 = vpack.c.b16 %v5013, %v5012
        %v5059 = vpack.c.b16 %v5015, %v5014
        %v5060 = vpack.c.b16 %v5017, %v5016
        %v5061 = vpack.c.b16 %v5019, %v5018
        %v5062 = vpack.c.b16 %v5021, %v5020
        %v5063 = vpack.c.b16 %v5023, %v5022
        %v5064 = vpack.c.b16 %v5025, %v5024
        %v5065 = vpack.c.b16 %v5027, %v5026
        %v5066 = vpack.c.b16 %v5029, %v5028
        %v5067 = vpack.c.b16 %v5031, %v5030
        %v5068 = vpack.c.b16 %v5033, %v5032
        %v5069 = vpack.c.b16 %v5035, %v5034
        %v5070 = vpack.c.b16 %v5037, %v5036
        %v5071 = vpack.c.b16 %v5039, %v5038
        %v5072 = vpack.c.b16 %v5041, %v5040
        %v5073 = vpack.c.b16 %v5043, %v5042
        %v5074 = vpack.c.b16 %v5045, %v5044
        %v5075 = vpack.c.b16 %v5047, %v5046
        %v5076 = vpack.c.b16 %v5049, %v5048
        %v5077 = vpack.c.b16 %v5051, %v5050
        %v5078 = vpack.c.b16 %v5053, %v5052
        %v5079 = vpack.c.b16 %v5055, %v5054
        %5104 = vmatprep.subr.bf16.mxu0 0
        %5105 = vmatpush1.bf16.msra.mxu0 %v5056
        %5106 = vmatprep.subr.bf16.mxu0 0
        %5107 = vmatpush1.bf16.msra.mxu0 %v5057
        %5108 = vmatprep.subr.bf16.mxu0 0
        %5109 = vmatpush1.bf16.msra.mxu0 %v5058
        %5110 = vmatprep.subr.bf16.mxu0 0
        %5111 = vmatpush1.bf16.msra.mxu0 %v5059
        %5112 = vmatprep.subr.bf16.mxu0 0
        %5113 = vmatpush1.bf16.msra.mxu0 %v5060
        %5114 = vmatprep.subr.bf16.mxu0 0
        %5115 = vmatpush1.bf16.msra.mxu0 %v5061
        %5116 = vmatprep.subr.bf16.mxu0 0
        %5117 = vmatpush1.bf16.msra.mxu0 %v5062
        %5118 = vmatprep.subr.bf16.mxu0 0
        %5119 = vmatpush1.bf16.msra.mxu0 %v5063
        %5120 = vmatprep.subr.bf16.mxu0 0
        %5121 = vmatpush1.bf16.msra.mxu0 %v5064
        %5122 = vmatprep.subr.bf16.mxu0 0
        %5123 = vmatpush1.bf16.msra.mxu0 %v5065
        %5124 = vmatprep.subr.bf16.mxu0 0
        %5125 = vmatpush1.bf16.msra.mxu0 %v5066
        %5126 = vmatprep.subr.bf16.mxu0 0
        %5127 = vmatpush1.bf16.msra.mxu0 %v5067
        %5128 = vmatprep.subr.bf16.mxu0 0
        %5129 = vmatpush1.bf16.msra.mxu0 %v5068
        %5130 = vmatprep.subr.bf16.mxu0 0
        %5131 = vmatpush1.bf16.msra.mxu0 %v5069
        %5132 = vmatprep.subr.bf16.mxu0 0
        %5133 = vmatpush1.bf16.msra.mxu0 %v5070
        %5134 = vmatprep.subr.bf16.mxu0 0
        %5135 = vmatpush1.bf16.msra.mxu0 %v5071
        %5136 = vmatprep.mubr.bf16.mxu0 %v4864
        %5137 = vmatmul.mubr.bf16.gmra.mrb[0].mxu0 %v4863
        %v5138 = vpop.f32.mrb[0].mxu0
        %v5139 = vadd.f32 0.0, %v5138
        %v5140 = vpop.f32.mrb[0].mxu0
        %v5141 = vpop.f32.mrb[0].mxu0
        %v5142 = vadd.f32 0.0, %v5141
        %v5143 = vpop.f32.mrb[0].mxu0
        %5144 = vmatprep.mubr.bf16.mxu0 %v4867
        %5145 = vmatmul.mubr.bf16.gmra.mrb[0].mxu0 %v4866
        %v5146 = vpop.f32.mrb[0].mxu0
        %v5147 = vadd.f32 0.0, %v5146
        %v5148 = vpop.f32.mrb[0].mxu0
        %v5149 = vpop.f32.mrb[0].mxu0
        %v5150 = vadd.f32 0.0, %v5149
        %v5151 = vpop.f32.mrb[0].mxu0
        %5152 = vmatprep.mubr.bf16.mxu0 %v4870
        %5153 = vmatmul.mubr.bf16.gmra.mrb[0].mxu0 %v4869
        %v5154 = vpop.f32.mrb[0].mxu0
        %v5155 = vadd.f32 0.0, %v5154
        %v5156 = vpop.f32.mrb[0].mxu0
        %v5157 = vpop.f32.mrb[0].mxu0
        %v5158 = vadd.f32 0.0, %v5157
        %v5159 = vpop.f32.mrb[0].mxu0
        %5160 = vmatprep.mubr.bf16.mxu0 %v4873
        %5161 = vmatmul.mubr.bf16.gmra.mrb[0].mxu0 %v4872
        %v5162 = vpop.f32.mrb[0].mxu0
        %v5163 = vadd.f32 0.0, %v5162
        %v5164 = vpop.f32.mrb[0].mxu0
        %v5165 = vpop.f32.mrb[0].mxu0
        %v5166 = vadd.f32 0.0, %v5165
        %v5167 = vpop.f32.mrb[0].mxu0
        %5168 = vmatprep.mubr.bf16.mxu0 %v4876
        %5169 = vmatmul.mubr.bf16.gmra.mrb[0].mxu0 %v4875
        %v5170 = vpop.f32.mrb[0].mxu0
        %v5171 = vadd.f32 0.0, %v5170
        %v5172 = vpop.f32.mrb[0].mxu0
        %v5173 = vpop.f32.mrb[0].mxu0
        %v5174 = vadd.f32 0.0, %v5173
        %v5175 = vpop.f32.mrb[0].mxu0
        %5176 = vmatprep.mubr.bf16.mxu0 %v4879
        %5177 = vmatmul.mubr.bf16.gmra.mrb[0].mxu0 %v4878
        %v5178 = vpop.f32.mrb[0].mxu0
        %v5179 = vadd.f32 0.0, %v5178
        %v5180 = vpop.f32.mrb[0].mxu0
        %v5181 = vpop.f32.mrb[0].mxu0
        %v5182 = vadd.f32 0.0, %v5181
        %v5183 = vpop.f32.mrb[0].mxu0
        %5184 = vmatprep.mubr.bf16.mxu0 %v4882
        %5185 = vmatmul.mubr.bf16.gmra.mrb[0].mxu0 %v4881
        %v5186 = vpop.f32.mrb[0].mxu0
        %v5187 = vadd.f32 0.0, %v5186
        %v5188 = vpop.f32.mrb[0].mxu0
        %v5189 = vpop.f32.mrb[0].mxu0
        %v5190 = vadd.f32 0.0, %v5189
        %v5191 = vpop.f32.mrb[0].mxu0
        %5192 = vmatprep.mubr.bf16.mxu0 %v4885
        %5193 = vmatmul.mubr.bf16.gmra.mrb[0].mxu0 %v4884
        %v5194 = vpop.f32.mrb[0].mxu0
        %v5195 = vadd.f32 0.0, %v5194
        %v5196 = vpop.f32.mrb[0].mxu0
        %v5197 = vpop.f32.mrb[0].mxu0
        %v5198 = vadd.f32 0.0, %v5197
        %v5199 = vpop.f32.mrb[0].mxu0
        %5200 = vmatprep.mubr.bf16.mxu0 %v4888
        %5201 = vmatmul.mubr.bf16.gmra.mrb[0].mxu0 %v4887
        %v5202 = vpop.f32.mrb[0].mxu0
        %v5203 = vadd.f32 0.0, %v5202
        %v5204 = vpop.f32.mrb[0].mxu0
        %v5205 = vpop.f32.mrb[0].mxu0
        %v5206 = vadd.f32 0.0, %v5205
        %v5207 = vpop.f32.mrb[0].mxu0
        %5208 = vmatprep.mubr.bf16.mxu0 %v4891
        %5209 = vmatmul.mubr.bf16.gmra.mrb[0].mxu0 %v4890
        %v5210 = vpop.f32.mrb[0].mxu0
        %v5211 = vadd.f32 0.0, %v5210
        %v5212 = vpop.f32.mrb[0].mxu0
        %v5213 = vpop.f32.mrb[0].mxu0
        %v5214 = vadd.f32 0.0, %v5213
        %v5215 = vpop.f32.mrb[0].mxu0
        %5216 = vmatprep.mubr.bf16.mxu0 %v4894
        %5217 = vmatmul.mubr.bf16.gmra.mrb[0].mxu0 %v4893
        %v5218 = vpop.f32.mrb[0].mxu0
        %v5219 = vadd.f32 0.0, %v5218
        %v5220 = vpop.f32.mrb[0].mxu0
        %v5221 = vpop.f32.mrb[0].mxu0
        %v5222 = vadd.f32 0.0, %v5221
        %v5223 = vpop.f32.mrb[0].mxu0
        %5224 = vmatprep.mubr.bf16.mxu0 %v4897
        %5225 = vmatmul.mubr.bf16.gmra.mrb[0].mxu0 %v4896
        %v5226 = vpop.f32.mrb[0].mxu0
        %v5227 = vadd.f32 0.0, %v5226
        %v5228 = vpop.f32.mrb[0].mxu0
        %v5229 = vpop.f32.mrb[0].mxu0
        %v5230 = vadd.f32 0.0, %v5229
        %v5231 = vpop.f32.mrb[0].mxu0
        %5232 = vmatprep.mubr.bf16.mxu0 %v4900
        %5233 = vmatmul.mubr.bf16.gmra.mrb[0].mxu0 %v4899
        %v5234 = vpop.f32.mrb[0].mxu0
        %v5235 = vadd.f32 0.0, %v5234
        %v5236 = vpop.f32.mrb[0].mxu0
        %v5237 = vpop.f32.mrb[0].mxu0
        %v5238 = vadd.f32 0.0, %v5237
        %v5239 = vpop.f32.mrb[0].mxu0
        %5240 = vmatprep.mubr.bf16.mxu0 %v4903
        %5241 = vmatmul.mubr.bf16.gmra.mrb[0].mxu0 %v4902
        %v5242 = vpop.f32.mrb[0].mxu0
        %v5243 = vadd.f32 0.0, %v5242
        %v5244 = vpop.f32.mrb[0].mxu0
        %v5245 = vpop.f32.mrb[0].mxu0
        %v5246 = vadd.f32 0.0, %v5245
        %v5247 = vpop.f32.mrb[0].mxu0
        %5248 = vmatprep.mubr.bf16.mxu0 %v4906
        %5249 = vmatmul.mubr.bf16.gmra.mrb[0].mxu0 %v4905
        %v5250 = vpop.f32.mrb[0].mxu0
        %v5251 = vadd.f32 0.0, %v5250
        %v5252 = vpop.f32.mrb[0].mxu0
        %v5253 = vpop.f32.mrb[0].mxu0
        %v5254 = vadd.f32 0.0, %v5253
        %v5255 = vpop.f32.mrb[0].mxu0
        %5256 = vmatprep.mubr.bf16.mxu0 %v4909
        %5257 = vmatmul.mubr.bf16.gmra.mrb[0].mxu0 %v4908
        %v5258 = vpop.f32.mrb[0].mxu0
        %v5259 = vadd.f32 0.0, %v5258
        %v5260 = vpop.f32.mrb[0].mxu0
        %v5261 = vpop.f32.mrb[0].mxu0
        %v5262 = vadd.f32 0.0, %v5261
        %v5263 = vpop.f32.mrb[0].mxu0
        %5264 = vdwg.mxu0
        %5265 = vmatprep.subr.bf16.mxu0 0
        %5266 = vmatpush1.bf16.msra.mxu0 %v5072
        %5267 = vmatprep.subr.bf16.mxu0 0
        %5268 = vmatpush1.bf16.msra.mxu0 %v5073
        %5269 = vmatprep.subr.bf16.mxu0 0
        %5270 = vmatpush1.bf16.msra.mxu0 %v5074
        %5271 = vmatprep.subr.bf16.mxu0 0
        %5272 = vmatpush1.bf16.msra.mxu0 %v5075
        %5273 = vmatprep.subr.bf16.mxu0 0
        %5274 = vmatpush1.bf16.msra.mxu0 %v5076
        %5275 = vmatprep.subr.bf16.mxu0 0
        %5276 = vmatpush1.bf16.msra.mxu0 %v5077
        %5277 = vmatprep.subr.bf16.mxu0 0
        %5278 = vmatpush1.bf16.msra.mxu0 %v5078
        %5279 = vmatprep.subr.bf16.mxu0 0
        %5280 = vmatpush1.bf16.msra.mxu0 %v5079
        %5281 = vmatprep.subr.bf16.mxu0 0
        %5282 = vmatpush1.bf16.msra.mxu0 0
        %5283 = vmatprep.subr.bf16.mxu0 0
        %5284 = vmatpush1.bf16.msra.mxu0 0
        %5285 = vmatprep.subr.bf16.mxu0 0
        %5286 = vmatpush1.bf16.msra.mxu0 0
        %5287 = vmatprep.subr.bf16.mxu0 0
        %5288 = vmatpush1.bf16.msra.mxu0 0
        %5289 = vmatprep.subr.bf16.mxu0 0
        %5290 = vmatpush1.bf16.msra.mxu0 0
        %5291 = vmatprep.subr.bf16.mxu0 0
        %5292 = vmatpush1.bf16.msra.mxu0 0
        %5293 = vmatprep.subr.bf16.mxu0 0
        %5294 = vmatpush1.bf16.msra.mxu0 0
        %5295 = vmatprep.subr.bf16.mxu0 0
        %5296 = vmatpush1.bf16.msra.mxu0 0
        %5297 = vmatprep.mubr.bf16.mxu0 0
        %5298 = vmatmul.mubr.bf16.gmra.mrb[0].mxu0 %v4865
        %v5299 = vpop.f32.mrb[0].mxu0
        %v5300 = vadd.f32 %v5139, %v5299
        %v5301 = vpop.f32.mrb[0].mxu0
        %v5302 = vpop.f32.mrb[0].mxu0
        %v5303 = vadd.f32 %v5142, %v5302
        %v5304 = vpop.f32.mrb[0].mxu0
        %5305 = vmatprep.mubr.bf16.mxu0 0
        %5306 = vmatmul.mubr.bf16.gmra.mrb[0].mxu0 %v4868
        %v5307 = vpop.f32.mrb[0].mxu0
        %v5308 = vadd.f32 %v5147, %v5307
        %v5309 = vpop.f32.mrb[0].mxu0
        %v5310 = vpop.f32.mrb[0].mxu0
        %v5311 = vadd.f32 %v5150, %v5310
        %v5312 = vpop.f32.mrb[0].mxu0
        %5313 = vmatprep.mubr.bf16.mxu0 0
        %5314 = vmatmul.mubr.bf16.gmra.mrb[0].mxu0 %v4871
        %v5315 = vpop.f32.mrb[0].mxu0
        %v5316 = vadd.f32 %v5155, %v5315
        %v5317 = vpop.f32.mrb[0].mxu0
        %v5318 = vpop.f32.mrb[0].mxu0
        %v5319 = vadd.f32 %v5158, %v5318
        %v5320 = vpop.f32.mrb[0].mxu0
        %5321 = vmatprep.mubr.bf16.mxu0 0
        %5322 = vmatmul.mubr.bf16.gmra.mrb[0].mxu0 %v4874
        %v5323 = vpop.f32.mrb[0].mxu0
        %v5324 = vadd.f32 %v5163, %v5323
        %v5325 = vpop.f32.mrb[0].mxu0
        %v5326 = vpop.f32.mrb[0].mxu0
        %v5327 = vadd.f32 %v5166, %v5326
        %v5328 = vpop.f32.mrb[0].mxu0
        %5329 = vmatprep.mubr.bf16.mxu0 0
        %5330 = vmatmul.mubr.bf16.gmra.mrb[0].mxu0 %v4877
        %v5331 = vpop.f32.mrb[0].mxu0
        %v5332 = vadd.f32 %v5171, %v5331
        %v5333 = vpop.f32.mrb[0].mxu0
        %v5334 = vpop.f32.mrb[0].mxu0
        %v5335 = vadd.f32 %v5174, %v5334
        %v5336 = vpop.f32.mrb[0].mxu0
        %5337 = vmatprep.mubr.bf16.mxu0 0
        %5338 = vmatmul.mubr.bf16.gmra.mrb[0].mxu0 %v4880
        %v5339 = vpop.f32.mrb[0].mxu0
        %v5340 = vadd.f32 %v5179, %v5339
        %v5341 = vpop.f32.mrb[0].mxu0
        %v5342 = vpop.f32.mrb[0].mxu0
        %v5343 = vadd.f32 %v5182, %v5342
        %v5344 = vpop.f32.mrb[0].mxu0
        %5345 = vmatprep.mubr.bf16.mxu0 0
        %5346 = vmatmul.mubr.bf16.gmra.mrb[0].mxu0 %v4883
        %v5347 = vpop.f32.mrb[0].mxu0
        %v5348 = vadd.f32 %v5187, %v5347
        %v5349 = vpop.f32.mrb[0].mxu0
        %v5350 = vpop.f32.mrb[0].mxu0
        %v5351 = vadd.f32 %v5190, %v5350
        %v5352 = vpop.f32.mrb[0].mxu0
        %5353 = vmatprep.mubr.bf16.mxu0 0
        %5354 = vmatmul.mubr.bf16.gmra.mrb[0].mxu0 %v4886
        %v5355 = vpop.f32.mrb[0].mxu0
        %v5356 = vadd.f32 %v5195, %v5355
        %v5357 = vpop.f32.mrb[0].mxu0
        %v5358 = vpop.f32.mrb[0].mxu0
        %v5359 = vadd.f32 %v5198, %v5358
        %v5360 = vpop.f32.mrb[0].mxu0
        %5361 = vmatprep.mubr.bf16.mxu0 0
        %5362 = vmatmul.mubr.bf16.gmra.mrb[0].mxu0 %v4889
        %v5363 = vpop.f32.mrb[0].mxu0
        %v5364 = vadd.f32 %v5203, %v5363
        %v5365 = vpop.f32.mrb[0].mxu0
        %v5366 = vpop.f32.mrb[0].mxu0
        %v5367 = vadd.f32 %v5206, %v5366
        %v5368 = vpop.f32.mrb[0].mxu0
        %5369 = vmatprep.mubr.bf16.mxu0 0
        %5370 = vmatmul.mubr.bf16.gmra.mrb[0].mxu0 %v4892
        %v5371 = vpop.f32.mrb[0].mxu0
        %v5372 = vadd.f32 %v5211, %v5371
        %v5373 = vpop.f32.mrb[0].mxu0
        %v5374 = vpop.f32.mrb[0].mxu0
        %v5375 = vadd.f32 %v5214, %v5374
        %v5376 = vpop.f32.mrb[0].mxu0
        %5377 = vmatprep.mubr.bf16.mxu0 0
        %5378 = vmatmul.mubr.bf16.gmra.mrb[0].mxu0 %v4895
        %v5379 = vpop.f32.mrb[0].mxu0
        %v5380 = vadd.f32 %v5219, %v5379
        %v5381 = vpop.f32.mrb[0].mxu0
        %v5382 = vpop.f32.mrb[0].mxu0
        %v5383 = vadd.f32 %v5222, %v5382
        %v5384 = vpop.f32.mrb[0].mxu0
        %5385 = vmatprep.mubr.bf16.mxu0 0
        %5386 = vmatmul.mubr.bf16.gmra.mrb[0].mxu0 %v4898
        %v5387 = vpop.f32.mrb[0].mxu0
        %v5388 = vadd.f32 %v5227, %v5387
        %v5389 = vpop.f32.mrb[0].mxu0
        %v5390 = vpop.f32.mrb[0].mxu0
        %v5391 = vadd.f32 %v5230, %v5390
        %v5392 = vpop.f32.mrb[0].mxu0
        %5393 = vmatprep.mubr.bf16.mxu0 0
        %5394 = vmatmul.mubr.bf16.gmra.mrb[0].mxu0 %v4901
        %v5395 = vpop.f32.mrb[0].mxu0
        %v5396 = vadd.f32 %v5235, %v5395
        %v5397 = vpop.f32.mrb[0].mxu0
        %v5398 = vpop.f32.mrb[0].mxu0
        %v5399 = vadd.f32 %v5238, %v5398
        %v5400 = vpop.f32.mrb[0].mxu0
        %5401 = vmatprep.mubr.bf16.mxu0 0
        %5402 = vmatmul.mubr.bf16.gmra.mrb[0].mxu0 %v4904
        %v5403 = vpop.f32.mrb[0].mxu0
        %v5404 = vadd.f32 %v5243, %v5403
        %v5405 = vpop.f32.mrb[0].mxu0
        %v5406 = vpop.f32.mrb[0].mxu0
        %v5407 = vadd.f32 %v5246, %v5406
        %v5408 = vpop.f32.mrb[0].mxu0
        %5409 = vmatprep.mubr.bf16.mxu0 0
        %5410 = vmatmul.mubr.bf16.gmra.mrb[0].mxu0 %v4907
        %v5411 = vpop.f32.mrb[0].mxu0
        %v5412 = vadd.f32 %v5251, %v5411
        %v5413 = vpop.f32.mrb[0].mxu0
        %v5414 = vpop.f32.mrb[0].mxu0
        %v5415 = vadd.f32 %v5254, %v5414
        %v5416 = vpop.f32.mrb[0].mxu0
        %5417 = vmatprep.mubr.bf16.mxu0 0
        %5418 = vmatmul.mubr.bf16.gmra.mrb[0].mxu0 %v4910
        %v5419 = vpop.f32.mrb[0].mxu0
        %v5420 = vadd.f32 %v5259, %v5419
        %v5421 = vpop.f32.mrb[0].mxu0
        %v5422 = vpop.f32.mrb[0].mxu0
        %v5423 = vadd.f32 %v5262, %v5422
        %v5424 = vpop.f32.mrb[0].mxu0
        %5425 = vdwg.mxu0
        %v5426 = vadd.f32 %v4737, %v5300
        %v5427 = vadd.f32 %v4740, %v5303
        %v5428 = vadd.f32 %v4745, %v5308
        %v5429 = vadd.f32 %v4748, %v5311
        %v5430 = vadd.f32 %v4753, %v5316
        %v5431 = vadd.f32 %v4756, %v5319
        %v5432 = vadd.f32 %v4761, %v5324
        %v5433 = vadd.f32 %v4764, %v5327
        %v5434 = vadd.f32 %v4769, %v5332
        %v5435 = vadd.f32 %v4772, %v5335
        %v5436 = vadd.f32 %v4777, %v5340
        %v5437 = vadd.f32 %v4780, %v5343
        %v5438 = vadd.f32 %v4785, %v5348
        %v5439 = vadd.f32 %v4788, %v5351
        %v5440 = vadd.f32 %v4793, %v5356
        %v5441 = vadd.f32 %v4796, %v5359
        %v5442 = vadd.f32 %v4801, %v5364
        %v5443 = vadd.f32 %v4804, %v5367
        %v5444 = vadd.f32 %v4809, %v5372
        %v5445 = vadd.f32 %v4812, %v5375
        %v5446 = vadd.f32 %v4817, %v5380
        %v5447 = vadd.f32 %v4820, %v5383
        %v5448 = vadd.f32 %v4825, %v5388
        %v5449 = vadd.f32 %v4828, %v5391
        %v5450 = vadd.f32 %v4833, %v5396
        %v5451 = vadd.f32 %v4836, %v5399
        %v5452 = vadd.f32 %v4841, %v5404
        %v5453 = vadd.f32 %v4844, %v5407
        %v5454 = vadd.f32 %v4849, %v5412
        %v5455 = vadd.f32 %v4852, %v5415
        %v5456 = vadd.f32 %v4857, %v5420
        %v5457 = vadd.f32 %v4860, %v5423
        %v5458 = vadd.f32 %v5426, %v482
        %v5459 = vadd.f32 %v5427, %v483
        %v5460 = vadd.f32 %v5428, %v484
        %v5461 = vadd.f32 %v5429, %v485
        %v5462 = vadd.f32 %v5430, %v486
        %v5463 = vadd.f32 %v5431, %v487
        %v5464 = vadd.f32 %v5432, %v488
        %v5465 = vadd.f32 %v5433, %v489
        %v5466 = vadd.f32 %v5434, %v490
        %v5467 = vadd.f32 %v5435, %v491
        %v5468 = vadd.f32 %v5436, %v492
        %v5469 = vadd.f32 %v5437, %v493
        %v5470 = vadd.f32 %v5438, %v494
        %v5471 = vadd.f32 %v5439, %v495
        %v5472 = vadd.f32 %v5440, %v496
        %v5473 = vadd.f32 %v5441, %v497
        %v5474 = vadd.f32 %v5442, %v498
        %v5475 = vadd.f32 %v5443, %v499
        %v5476 = vadd.f32 %v5444, %v500
        %v5477 = vadd.f32 %v5445, %v501
        %v5478 = vadd.f32 %v5446, %v502
        %v5479 = vadd.f32 %v5447, %v503
        %v5480 = vadd.f32 %v5448, %v504
        %v5481 = vadd.f32 %v5449, %v505
        %v5482 = vadd.f32 %v5450, %v506
        %v5483 = vadd.f32 %v5451, %v507
        %v5484 = vadd.f32 %v5452, %v508
        %v5485 = vadd.f32 %v5453, %v509
        %v5486 = vadd.f32 %v5454, %v510
        %v5487 = vadd.f32 %v5455, %v511
        %v5488 = vadd.f32 %v5456, %v512
        %v5489 = vadd.f32 %v5457, %v513
        %5490 = vst [vmem:[%s340] sm:$0xff] %v5458
        %5491 = vst [vmem:[%s340 + $0x8] sm:$0xff] %v5459
        %5492 = vst [vmem:[%s340 + $0x10] sm:$0xff] %v5460
        %5493 = vst [vmem:[%s340 + $0x18] sm:$0xff] %v5461
        %5494 = vst [vmem:[%s340 + $0x20] sm:$0xff] %v5462
        %5495 = vst [vmem:[%s340 + $0x28] sm:$0xff] %v5463
        %5496 = vst [vmem:[%s340 + $0x30] sm:$0xff] %v5464
        %5497 = vst [vmem:[%s340 + $0x38] sm:$0xff] %v5465
        %5498 = vst [vmem:[%s340 + $0x40] sm:$0xff] %v5466
        %5499 = vst [vmem:[%s340 + $0x48] sm:$0xff] %v5467
        %5500 = vst [vmem:[%s340 + $0x50] sm:$0xff] %v5468
        %5501 = vst [vmem:[%s340 + $0x58] sm:$0xff] %v5469
        %5502 = vst [vmem:[%s340 + $0x60] sm:$0xff] %v5470
        %5503 = vst [vmem:[%s340 + $0x68] sm:$0xff] %v5471
        %5504 = vst [vmem:[%s340 + $0x70] sm:$0xff] %v5472
        %5505 = vst [vmem:[%s340 + $0x78] sm:$0xff] %v5473
        %5506 = vst [vmem:[%s340 + $0x80] sm:$0xff] %v5474
        %5507 = vst [vmem:[%s340 + $0x88] sm:$0xff] %v5475
        %5508 = vst [vmem:[%s340 + $0x90] sm:$0xff] %v5476
        %5509 = vst [vmem:[%s340 + $0x98] sm:$0xff] %v5477
        %5510 = vst [vmem:[%s340 + $0xa0] sm:$0xff] %v5478
        %5511 = vst [vmem:[%s340 + $0xa8] sm:$0xff] %v5479
        %5512 = vst [vmem:[%s340 + $0xb0] sm:$0xff] %v5480
        %5513 = vst [vmem:[%s340 + $0xb8] sm:$0xff] %v5481
        %5514 = vst [vmem:[%s340 + $0xc0] sm:$0xff] %v5482
        %5515 = vst [vmem:[%s340 + $0xc8] sm:$0xff] %v5483
        %5516 = vst [vmem:[%s340 + $0xd0] sm:$0xff] %v5484
        %5517 = vst [vmem:[%s340 + $0xd8] sm:$0xff] %v5485
        %5518 = vst [vmem:[%s340 + $0xe0] sm:$0xff] %v5486
        %5519 = vst [vmem:[%s340 + $0xe8] sm:$0xff] %v5487
        %5520 = vst [vmem:[%s340 + $0xf0] sm:$0xff] %v5488
        %5521 = vst [vmem:[%s340 + $0xf8] sm:$0xff] %v5489
        %s5522 = sand.u32 %s226, 1
        %s5523 = scalar_lea.sflag [#allocation6], %s5522
        %s5524 = sand.u32 %s226, 1
        %s5525 = smul.addr %s5524, 256
        %s5526 = scalar_lea.vmem [#allocation7], %s5525
        // Predicated region
        $region61: #{resblock_apply.1} parent=55 // pred_check
          %p5527 = pneg %p236
        $region62: #{resblock_apply.1} parent=55 // pred_check_branch
          %5529 = sbr.rel (%p5527) target = $region64
        $region63: #{resblock_apply.1} parent=55 // pred_region
          %s5531 = ssub.s32 4096, 4096
          %5532 = vsyncadd %s5523, %s5531
          %s5533 = smul.addr %s24, 32
          %s5534 = smul.addr %s5533, 128
          %s5535 = scalar_lea.hbm %s9, %s5534
          %s5536 = sshll.u32 %s5526, 4
          %s5537 = int_to_ptr.vmem [resolvable:$true] %s5536
          %5542 = dma.vmem_to_hbm [thread:$0]  %s5537, 4096, %s5535, %s5523, 128, 128, 8
        $region64: #{resblock_apply.1} parent=55 // pred_fallthru
          _
      $region56: #{resblock_apply.1} parent=5 // pred_fallthru
        _
      %p5543 = scmp.le.s32.totalorder 2, %s19
      // Predicated region
      $region65: #{resblock_apply.1} parent=5 // pred_check
        %p5544 = pneg %p5543
      $region66: #{resblock_apply.1} parent=5 // pred_check_branch
        %5546 = sbr.rel (%p5544) target = $region68
      $region67: #{resblock_apply.1} parent=5 // pred_region
        %s5547 = ssub.s32 %s19, 2
        // Predicated region
        $region69: #{resblock_apply.1} parent=67 // pred_check
          %p5548 = pneg %p242
        $region70: #{resblock_apply.1} parent=67 // pred_check_branch
          %5550 = sbr.rel (%p5548) target = $region72
        $region71: #{resblock_apply.1} parent=67 // pred_region
          %s5551 = sand.u32 %s227, 1
          %s5552 = scalar_lea.sflag [#allocation6], %s5551
          %s5553 = sand.u32 %s227, 1
          %s5554 = smul.addr %s5553, 256
          %s5555 = scalar_lea.vmem [#allocation7], %s5554
          %5556 = dma.done %s5552, 4096
        $region72: #{resblock_apply.1} parent=67 // pred_fallthru
          _
      $region68: #{resblock_apply.1} parent=5 // pred_fallthru
        _
    $region6: #{resblock_apply.1} parent=1 // loop_footer
      %s23 = sadd.s32 1, %s19
    $region7: #{resblock_apply.1} parent=1 // loop_footer_branch
      %18 = sbr.rel target = $region3
    $region8: #{resblock_apply.1} parent=1 // loop_exit
      _
    %5557 = vsyncpa [#allocation5], 1
    %s5558 = scalar_lea.sflag [#allocation5], 1
    %5559 = vsyncpa %s5558, 1
    %5560 = vsyncpa [#allocation6], 1
    %s5561 = scalar_lea.sflag [#allocation6], 1
    %5562 = vsyncpa %s5561, 1

</llo_original>
